<compile_context>
chip_gen: v6e
topology: v6e:2x2x1
jax: 0.10.0
libtpu: 0.0.40
codegen_flags: <defaults>
</compile_context>

<pallas_src>
import jax
import jax.numpy as jnp
from jax.experimental import pallas as pl
from jax.experimental.pallas import tpu as pltpu


INPUT_DIM = 256
HIDDEN_DIM = 32

# True (in, out) per Linear layer: encoder 256->1000->500->250->32, decoder mirror.
_ENC = [INPUT_DIM, 1000, 500, 250, HIDDEN_DIM]
_DEC = [HIDDEN_DIM, 250, 500, 1000, INPUT_DIM]
TRUE_LAYER_DIMS = list(zip(_ENC[:-1], _ENC[1:])) + list(zip(_DEC[:-1], _DEC[1:]))

# Lane-padded dims (multiples of 128): 256->256, 1000->1024, 500->512, 250->256, 32->128.
_PAD = {256: 256, 1000: 1024, 500: 512, 250: 256, 32: 128}
PAD_LAYER_DIMS = [(_PAD[i], _PAD[o]) for (i, o) in TRUE_LAYER_DIMS]

# ReLU follows every layer except the encoder output (idx 3) and decoder output (idx 7).
RELU_AFTER = {0, 1, 2, 4, 5, 6}

TOTAL_BIAS = sum(o for (_, o) in PAD_LAYER_DIMS)  # 3968, multiple of 128
N_LAYERS = len(PAD_LAYER_DIMS)


def _round_up(n, m):
    return ((n + m - 1) // m) * m


def _bf16_epilogue_supported():
    """bf16 VALU exists on v6e/v7x; v2-v5 lack it -> keep f32 epilogue there."""
    try:
        kind = jax.devices()[0].device_kind.lower()
    except Exception:
        return False
    return not any(v in kind for v in ("v2", "v3", "v4", "v5"))


def _make_kernel(bf16_epilogue: bool):
    def autoencoder_kernel(x_ref, *refs):
        """refs = (w0..w7 [bf16, padded, (in,out)], bias_concat [f32 (1, TOTAL_BIAS)], out_ref)."""
        out_ref = refs[-1]
        b_ref = refs[-2]
        w_refs = refs[:-2]

        # In-kernel cast of the f32 input tile to bf16 for the first MXU dot.
        h = x_ref[...].astype(jnp.bfloat16)          # (TILE_B, 256)
        off = 0
        for i, (_, dout) in enumerate(PAD_LAYER_DIMS):
            acc = jnp.dot(h, w_refs[i][...], preferred_element_type=jnp.float32)
            bias = b_ref[:, off:off + dout]          # f32 (1, dout), lane-aligned slice
            off += dout
            if (i in RELU_AFTER) and bf16_epilogue:
                # bf16 bias-add + ReLU epilogue (v6e/v7x): halves VALU/store traffic.
                h = jnp.maximum(acc.astype(jnp.bfloat16) + bias.astype(jnp.bfloat16), 0)
            else:
                acc = acc + bias                     # f32 epilogue
                if i in RELU_AFTER:
                    acc = jnp.maximum(acc, 0.0)
                if i < N_LAYERS - 1:
                    h = acc.astype(jnp.bfloat16)     # bf16 feed to next MXU dot
                else:
                    out_ref[...] = acc.astype(out_ref.dtype)

    return autoencoder_kernel


def autoencoder_forward(x, weights, bias_concat, *, bf16_epilogue=None):
    """x: (B, 256) f32.  weights: list of 8 padded bf16 (in,out).  bias_concat: (1, 3968) f32."""
    B, D = x.shape
    assert D == INPUT_DIM
    if bf16_epilogue is None:
        bf16_epilogue = _bf16_epilogue_supported()

    # Large tiles amortize the ~0.35us per-grid-step overhead; cdiv(B,2) keeps the grid at
    # >= 2 steps for large B so the "parallel" batch axis shards across both v7x TensorCores.
    tile_b = min(512, _round_up(max(pl.cdiv(B, 2), 8), 16))
    Bp = _round_up(B, tile_b)
    if Bp != B:
        x = jnp.pad(x, ((0, Bp - B), (0, 0)))

    grid = (Bp // tile_b,)

    x_spec = pl.BlockSpec((tile_b, INPUT_DIM), lambda i: (i, 0))
    out_spec = pl.BlockSpec((tile_b, INPUT_DIM), lambda i: (i, 0))
    # Weights / bias: whole array, constant block index -> DMA'd once, resident across batch tiles.
    weight_specs = [pl.BlockSpec(w.shape, lambda i: (0, 0)) for w in weights]
    bias_spec = pl.BlockSpec(bias_concat.shape, lambda i: (0, 0))

    out = pl.pallas_call(
        _make_kernel(bf16_epilogue),
        grid=grid,
        in_specs=[x_spec] + weight_specs + [bias_spec],
        out_specs=out_spec,
        out_shape=jax.ShapeDtypeStruct((Bp, INPUT_DIM), jnp.float32),
        compiler_params=pltpu.CompilerParams(
            dimension_semantics=("parallel",),   # batch tiles independent (v7x megacore)
            vmem_limit_bytes=32 << 20,
        ),
    )(x, *weights, bias_concat)

    return out[:B]


def init_params(key):
    """PyTorch-style init U(-1/sqrt(fan_in), 1/sqrt(fan_in)); weights pre-transposed to (in,out),
    zero-padded to lane multiples, cast to bf16; biases zero-padded and concatenated (f32)."""
    weights = []
    biases = []
    keys = jax.random.split(key, 2 * len(TRUE_LAYER_DIMS))
    for i, ((fin, fout), (fin_p, fout_p)) in enumerate(zip(TRUE_LAYER_DIMS, PAD_LAYER_DIMS)):
        bound = 1.0 / (fin ** 0.5)
        w = jax.random.uniform(keys[2 * i], (fin, fout), jnp.float32, -bound, bound)
        b = jax.random.uniform(keys[2 * i + 1], (fout,), jnp.float32, -bound, bound)
        w_p = jnp.zeros((fin_p, fout_p), jnp.float32).at[:fin, :fout].set(w)
        b_p = jnp.zeros((fout_p,), jnp.float32).at[:fout].set(b)
        weights.append(w_p.astype(jnp.bfloat16))
        biases.append(b_p)
    bias_concat = jnp.concatenate(biases)[None, :]   # (1, 3968)
    return weights, bias_concat


def reference_forward(x, weights, bias_concat, bf16_epilogue):
    """Pure-JAX reference mirroring the kernel's numerics exactly."""
    h = x.astype(jnp.bfloat16)
    off = 0
    out = None
    for i, (_, dout) in enumerate(PAD_LAYER_DIMS):
        acc = jnp.dot(h, weights[i], preferred_element_type=jnp.float32)
        bias = bias_concat[:, off:off + dout]
        off += dout
        if (i in RELU_AFTER) and bf16_epilogue:
            h = jnp.maximum(acc.astype(jnp.bfloat16) + bias.astype(jnp.bfloat16), 0)
        else:
            acc = acc + bias
            if i in RELU_AFTER:
                acc = jnp.maximum(acc, 0.0)
            h = acc.astype(jnp.bfloat16)
            out = acc
    return out  # (B, 256) f32


if __name__ == "__main__":
    key = jax.random.PRNGKey(0)
    k_x, k_p = jax.random.split(key)

    B = 8
    x = jax.random.normal(k_x, (B, INPUT_DIM), jnp.float32)
    weights, bias_concat = init_params(k_p)

    bf16_epi = _bf16_epilogue_supported()
    out = autoencoder_forward(x, weights, bias_concat, bf16_epilogue=bf16_epi)
    out = jax.block_until_ready(out)

    ref = reference_forward(x, weights, bias_concat, bf16_epi)
    assert out.shape == (B, INPUT_DIM)
    assert jnp.allclose(out, ref, atol=1e-2, rtol=1e-2), "Pallas output mismatch vs reference"

    print("KERNEL_OK")
</pallas_src>

<mosaic_0001>
module attributes {stable_mosaic.version = 11 : i64} {
  func.func @autoencoder_kernel(%arg0: i32, %arg1: memref<16x256xf32, #tpu.memory_space<vmem>>, %arg2: memref<256x1024xbf16, #tpu.memory_space<vmem>>, %arg3: memref<1024x512xbf16, #tpu.memory_space<vmem>>, %arg4: memref<512x256xbf16, #tpu.memory_space<vmem>>, %arg5: memref<256x128xbf16, #tpu.memory_space<vmem>>, %arg6: memref<128x256xbf16, #tpu.memory_space<vmem>>, %arg7: memref<256x512xbf16, #tpu.memory_space<vmem>>, %arg8: memref<512x1024xbf16, #tpu.memory_space<vmem>>, %arg9: memref<1024x256xbf16, #tpu.memory_space<vmem>>, %arg10: memref<1x3968xf32, #tpu.memory_space<vmem>>, %arg11: memref<16x256xf32, #tpu.memory_space<vmem>>) attributes {dimension_semantics = [#tpu.dimension_semantics<parallel>], iteration_bounds = array<i64: 1>, scalar_prefetch = 0 : i64, scratch_operands = 0 : i64, tpu.core_type = #tpu.core_type<tc>, window_params = [{transform_indices = @transform_0, window_bounds = array<i64: 16, 256>}, {pipeline_mode = #tpu.pipeline_mode<synchronous>, transform_indices = @transform_1, window_bounds = array<i64: 256, 1024>}, {pipeline_mode = #tpu.pipeline_mode<synchronous>, transform_indices = @transform_2, window_bounds = array<i64: 1024, 512>}, {pipeline_mode = #tpu.pipeline_mode<synchronous>, transform_indices = @transform_3, window_bounds = array<i64: 512, 256>}, {pipeline_mode = #tpu.pipeline_mode<synchronous>, transform_indices = @transform_4, window_bounds = array<i64: 256, 128>}, {pipeline_mode = #tpu.pipeline_mode<synchronous>, transform_indices = @transform_5, window_bounds = array<i64: 128, 256>}, {pipeline_mode = #tpu.pipeline_mode<synchronous>, transform_indices = @transform_6, window_bounds = array<i64: 256, 512>}, {pipeline_mode = #tpu.pipeline_mode<synchronous>, transform_indices = @transform_7, window_bounds = array<i64: 512, 1024>}, {pipeline_mode = #tpu.pipeline_mode<synchronous>, transform_indices = @transform_8, window_bounds = array<i64: 1024, 256>}, {pipeline_mode = #tpu.pipeline_mode<synchronous>, transform_indices = @transform_9, window_bounds = array<i64: 1, 3968>}, {transform_indices = @transform_10, window_bounds = array<i64: 16, 256>}]} {
    %c0 = arith.constant 0 : index
    %c0_0 = arith.constant 0 : index
    %0 = vector.load %arg1[%c0, %c0_0] : memref<16x256xf32, #tpu.memory_space<vmem>>, vector<16x256xf32>
    %1 = arith.truncf %0 : vector<16x256xf32> to vector<16x256xbf16>
    %c0_1 = arith.constant 0 : index
    %c0_2 = arith.constant 0 : index
    %2 = vector.load %arg2[%c0_1, %c0_2] : memref<256x1024xbf16, #tpu.memory_space<vmem>>, vector<256x1024xbf16>
    %cst = arith.constant dense<0.000000e+00> : vector<16x1024xf32>
    %3 = tpu.matmul %1, %2, %cst {dimension_numbers = #tpu.dot_dimension_numbers<[1], [0], [0], [1], [0, 0, 1, 1], [], []>} : vector<16x256xbf16>, vector<256x1024xbf16>, vector<16x1024xf32> -> vector<16x1024xf32>
    %c0_3 = arith.constant 0 : index
    %c0_4 = arith.constant 0 : index
    %4 = vector.load %arg10[%c0_3, %c0_4] : memref<1x3968xf32, #tpu.memory_space<vmem>>, vector<1x1024xf32>
    %5 = arith.truncf %3 : vector<16x1024xf32> to vector<16x1024xbf16>
    %6 = arith.truncf %4 : vector<1x1024xf32> to vector<1x1024xbf16>
    %7 = vector.broadcast %6 : vector<1x1024xbf16> to vector<16x1024xbf16>
    %8 = arith.addf %5, %7 : vector<16x1024xbf16>
    %cst_5 = arith.constant 0.000000e+00 : bf16
    %9 = vector.broadcast %cst_5 : bf16 to vector<16x1024xbf16>
    %10 = arith.maximumf %8, %9 : vector<16x1024xbf16>
    %c0_6 = arith.constant 0 : index
    %c0_7 = arith.constant 0 : index
    %11 = vector.load %arg3[%c0_6, %c0_7] : memref<1024x512xbf16, #tpu.memory_space<vmem>>, vector<1024x512xbf16>
    %cst_8 = arith.constant dense<0.000000e+00> : vector<16x512xf32>
    %12 = tpu.matmul %10, %11, %cst_8 {dimension_numbers = #tpu.dot_dimension_numbers<[1], [0], [0], [1], [0, 0, 1, 1], [], []>} : vector<16x1024xbf16>, vector<1024x512xbf16>, vector<16x512xf32> -> vector<16x512xf32>
    %c0_9 = arith.constant 0 : index
    %c1024 = arith.constant 1024 : index
    %13 = vector.load %arg10[%c0_9, %c1024] : memref<1x3968xf32, #tpu.memory_space<vmem>>, vector<1x512xf32>
    %14 = arith.truncf %12 : vector<16x512xf32> to vector<16x512xbf16>
    %15 = arith.truncf %13 : vector<1x512xf32> to vector<1x512xbf16>
    %16 = vector.broadcast %15 : vector<1x512xbf16> to vector<16x512xbf16>
    %17 = arith.addf %14, %16 : vector<16x512xbf16>
    %cst_10 = arith.constant 0.000000e+00 : bf16
    %18 = vector.broadcast %cst_10 : bf16 to vector<16x512xbf16>
    %19 = arith.maximumf %17, %18 : vector<16x512xbf16>
    %c0_11 = arith.constant 0 : index
    %c0_12 = arith.constant 0 : index
    %20 = vector.load %arg4[%c0_11, %c0_12] : memref<512x256xbf16, #tpu.memory_space<vmem>>, vector<512x256xbf16>
    %cst_13 = arith.constant dense<0.000000e+00> : vector<16x256xf32>
    %21 = tpu.matmul %19, %20, %cst_13 {dimension_numbers = #tpu.dot_dimension_numbers<[1], [0], [0], [1], [0, 0, 1, 1], [], []>} : vector<16x512xbf16>, vector<512x256xbf16>, vector<16x256xf32> -> vector<16x256xf32>
    %c0_14 = arith.constant 0 : index
    %c1536 = arith.constant 1536 : index
    %22 = vector.load %arg10[%c0_14, %c1536] : memref<1x3968xf32, #tpu.memory_space<vmem>>, vector<1x256xf32>
    %23 = arith.truncf %21 : vector<16x256xf32> to vector<16x256xbf16>
    %24 = arith.truncf %22 : vector<1x256xf32> to vector<1x256xbf16>
    %25 = vector.broadcast %24 : vector<1x256xbf16> to vector<16x256xbf16>
    %26 = arith.addf %23, %25 : vector<16x256xbf16>
    %cst_15 = arith.constant 0.000000e+00 : bf16
    %27 = vector.broadcast %cst_15 : bf16 to vector<16x256xbf16>
    %28 = arith.maximumf %26, %27 : vector<16x256xbf16>
    %c0_16 = arith.constant 0 : index
    %c0_17 = arith.constant 0 : index
    %29 = vector.load %arg5[%c0_16, %c0_17] : memref<256x128xbf16, #tpu.memory_space<vmem>>, vector<256x128xbf16>
    %cst_18 = arith.constant dense<0.000000e+00> : vector<16x128xf32>
    %30 = tpu.matmul %28, %29, %cst_18 {dimension_numbers = #tpu.dot_dimension_numbers<[1], [0], [0], [1], [0, 0, 1, 1], [], []>} : vector<16x256xbf16>, vector<256x128xbf16>, vector<16x128xf32> -> vector<16x128xf32>
    %c0_19 = arith.constant 0 : index
    %c1792 = arith.constant 1792 : index
    %31 = vector.load %arg10[%c0_19, %c1792] : memref<1x3968xf32, #tpu.memory_space<vmem>>, vector<1x128xf32>
    %32 = vector.broadcast %31 : vector<1x128xf32> to vector<16x128xf32>
    %33 = arith.addf %30, %32 : vector<16x128xf32>
    %34 = arith.truncf %33 : vector<16x128xf32> to vector<16x128xbf16>
    %c0_20 = arith.constant 0 : index
    %c0_21 = arith.constant 0 : index
    %35 = vector.load %arg6[%c0_20, %c0_21] : memref<128x256xbf16, #tpu.memory_space<vmem>>, vector<128x256xbf16>
    %cst_22 = arith.constant dense<0.000000e+00> : vector<16x256xf32>
    %36 = tpu.matmul %34, %35, %cst_22 {dimension_numbers = #tpu.dot_dimension_numbers<[1], [0], [0], [1], [0, 0, 1, 1], [], []>} : vector<16x128xbf16>, vector<128x256xbf16>, vector<16x256xf32> -> vector<16x256xf32>
    %c0_23 = arith.constant 0 : index
    %c1920 = arith.constant 1920 : index
    %37 = vector.load %arg10[%c0_23, %c1920] : memref<1x3968xf32, #tpu.memory_space<vmem>>, vector<1x256xf32>
    %38 = arith.truncf %36 : vector<16x256xf32> to vector<16x256xbf16>
    %39 = arith.truncf %37 : vector<1x256xf32> to vector<1x256xbf16>
    %40 = vector.broadcast %39 : vector<1x256xbf16> to vector<16x256xbf16>
    %41 = arith.addf %38, %40 : vector<16x256xbf16>
    %cst_24 = arith.constant 0.000000e+00 : bf16
    %42 = vector.broadcast %cst_24 : bf16 to vector<16x256xbf16>
    %43 = arith.maximumf %41, %42 : vector<16x256xbf16>
    %c0_25 = arith.constant 0 : index
    %c0_26 = arith.constant 0 : index
    %44 = vector.load %arg7[%c0_25, %c0_26] : memref<256x512xbf16, #tpu.memory_space<vmem>>, vector<256x512xbf16>
    %cst_27 = arith.constant dense<0.000000e+00> : vector<16x512xf32>
    %45 = tpu.matmul %43, %44, %cst_27 {dimension_numbers = #tpu.dot_dimension_numbers<[1], [0], [0], [1], [0, 0, 1, 1], [], []>} : vector<16x256xbf16>, vector<256x512xbf16>, vector<16x512xf32> -> vector<16x512xf32>
    %c0_28 = arith.constant 0 : index
    %c2176 = arith.constant 2176 : index
    %46 = vector.load %arg10[%c0_28, %c2176] : memref<1x3968xf32, #tpu.memory_space<vmem>>, vector<1x512xf32>
    %47 = arith.truncf %45 : vector<16x512xf32> to vector<16x512xbf16>
    %48 = arith.truncf %46 : vector<1x512xf32> to vector<1x512xbf16>
    %49 = vector.broadcast %48 : vector<1x512xbf16> to vector<16x512xbf16>
    %50 = arith.addf %47, %49 : vector<16x512xbf16>
    %cst_29 = arith.constant 0.000000e+00 : bf16
    %51 = vector.broadcast %cst_29 : bf16 to vector<16x512xbf16>
    %52 = arith.maximumf %50, %51 : vector<16x512xbf16>
    %c0_30 = arith.constant 0 : index
    %c0_31 = arith.constant 0 : index
    %53 = vector.load %arg8[%c0_30, %c0_31] : memref<512x1024xbf16, #tpu.memory_space<vmem>>, vector<512x1024xbf16>
    %cst_32 = arith.constant dense<0.000000e+00> : vector<16x1024xf32>
    %54 = tpu.matmul %52, %53, %cst_32 {dimension_numbers = #tpu.dot_dimension_numbers<[1], [0], [0], [1], [0, 0, 1, 1], [], []>} : vector<16x512xbf16>, vector<512x1024xbf16>, vector<16x1024xf32> -> vector<16x1024xf32>
    %c0_33 = arith.constant 0 : index
    %c2688 = arith.constant 2688 : index
    %55 = vector.load %arg10[%c0_33, %c2688] : memref<1x3968xf32, #tpu.memory_space<vmem>>, vector<1x1024xf32>
    %56 = arith.truncf %54 : vector<16x1024xf32> to vector<16x1024xbf16>
    %57 = arith.truncf %55 : vector<1x1024xf32> to vector<1x1024xbf16>
    %58 = vector.broadcast %57 : vector<1x1024xbf16> to vector<16x1024xbf16>
    %59 = arith.addf %56, %58 : vector<16x1024xbf16>
    %cst_34 = arith.constant 0.000000e+00 : bf16
    %60 = vector.broadcast %cst_34 : bf16 to vector<16x1024xbf16>
    %61 = arith.maximumf %59, %60 : vector<16x1024xbf16>
    %c0_35 = arith.constant 0 : index
    %c0_36 = arith.constant 0 : index
    %62 = vector.load %arg9[%c0_35, %c0_36] : memref<1024x256xbf16, #tpu.memory_space<vmem>>, vector<1024x256xbf16>
    %cst_37 = arith.constant dense<0.000000e+00> : vector<16x256xf32>
    %63 = tpu.matmul %61, %62, %cst_37 {dimension_numbers = #tpu.dot_dimension_numbers<[1], [0], [0], [1], [0, 0, 1, 1], [], []>} : vector<16x1024xbf16>, vector<1024x256xbf16>, vector<16x256xf32> -> vector<16x256xf32>
    %c0_38 = arith.constant 0 : index
    %c3712 = arith.constant 3712 : index
    %64 = vector.load %arg10[%c0_38, %c3712] : memref<1x3968xf32, #tpu.memory_space<vmem>>, vector<1x256xf32>
    %65 = vector.broadcast %64 : vector<1x256xf32> to vector<16x256xf32>
    %66 = arith.addf %63, %65 : vector<16x256xf32>
    %c0_39 = arith.constant 0 : index
    %c0_40 = arith.constant 0 : index
    %67 = vector.load %arg11[%c0_39, %c0_40] : memref<16x256xf32, #tpu.memory_space<vmem>>, vector<16x256xf32>
    tpu.vector_store %arg11[%c0_39, %c0_40], %66 {strides = array<i32>} : memref<16x256xf32, #tpu.memory_space<vmem>>, vector<16x256xf32>,
    return
  }
  func.func @transform_0(%arg0: i32) -> (i32, i32) {
    %c0_i32 = arith.constant 0 : i32
    %c0_i32_0 = arith.constant 0 : i32
    return %arg0, %c0_i32 : i32, i32
  }
  func.func @transform_1(%arg0: i32) -> (i32, i32) {
    %c0_i32 = arith.constant 0 : i32
    %c0_i32_0 = arith.constant 0 : i32
    %c0_i32_1 = arith.constant 0 : i32
    return %c0_i32, %c0_i32_0 : i32, i32
  }
  func.func @transform_2(%arg0: i32) -> (i32, i32) {
    %c0_i32 = arith.constant 0 : i32
    %c0_i32_0 = arith.constant 0 : i32
    %c0_i32_1 = arith.constant 0 : i32
    return %c0_i32, %c0_i32_0 : i32, i32
  }
  func.func @transform_3(%arg0: i32) -> (i32, i32) {
    %c0_i32 = arith.constant 0 : i32
    %c0_i32_0 = arith.constant 0 : i32
    %c0_i32_1 = arith.constant 0 : i32
    return %c0_i32, %c0_i32_0 : i32, i32
  }
  func.func @transform_4(%arg0: i32) -> (i32, i32) {
    %c0_i32 = arith.constant 0 : i32
    %c0_i32_0 = arith.constant 0 : i32
    %c0_i32_1 = arith.constant 0 : i32
    return %c0_i32, %c0_i32_0 : i32, i32
  }
  func.func @transform_5(%arg0: i32) -> (i32, i32) {
    %c0_i32 = arith.constant 0 : i32
    %c0_i32_0 = arith.constant 0 : i32
    %c0_i32_1 = arith.constant 0 : i32
    return %c0_i32, %c0_i32_0 : i32, i32
  }
  func.func @transform_6(%arg0: i32) -> (i32, i32) {
    %c0_i32 = arith.constant 0 : i32
    %c0_i32_0 = arith.constant 0 : i32
    %c0_i32_1 = arith.constant 0 : i32
    return %c0_i32, %c0_i32_0 : i32, i32
  }
  func.func @transform_7(%arg0: i32) -> (i32, i32) {
    %c0_i32 = arith.constant 0 : i32
    %c0_i32_0 = arith.constant 0 : i32
    %c0_i32_1 = arith.constant 0 : i32
    return %c0_i32, %c0_i32_0 : i32, i32
  }
  func.func @transform_8(%arg0: i32) -> (i32, i32) {
    %c0_i32 = arith.constant 0 : i32
    %c0_i32_0 = arith.constant 0 : i32
    %c0_i32_1 = arith.constant 0 : i32
    return %c0_i32, %c0_i32_0 : i32, i32
  }
  func.func @transform_9(%arg0: i32) -> (i32, i32) {
    %c0_i32 = arith.constant 0 : i32
    %c0_i32_0 = arith.constant 0 : i32
    %c0_i32_1 = arith.constant 0 : i32
    return %c0_i32, %c0_i32_0 : i32, i32
  }
  func.func @transform_10(%arg0: i32) -> (i32, i32) {
    %c0_i32 = arith.constant 0 : i32
    %c0_i32_0 = arith.constant 0 : i32
    return %arg0, %c0_i32 : i32, i32
  }
}

</mosaic_0001>

<llo_original>
// kernel: tpu_custom_call.1
$region0: #{tpu_custom_call.1}
  #allocation0 [shape = 'u32[]', space=smem, size = 0x4, offset = 0x4, fixed_abs, tag = 'smem constant byte address 0x4 - core index']
  #allocation1 [shape = 'u32[144,128]{1,0:T(1,128)}', space=vmem, size = 0x12000, scoped, tag = 'internal scratch']
  %s0 = inlined_call_operand.hbm [shape: f32[16,256], index: 0, kind: input, shape index: {}]
  %s1 = inlined_call_operand.hbm [shape: bf16[256,1024], index: 1, kind: input, shape index: {}]
  %s2 = inlined_call_operand.hbm [shape: bf16[1024,512], index: 2, kind: input, shape index: {}]
  %s3 = inlined_call_operand.hbm [shape: bf16[512,256], index: 3, kind: input, shape index: {}]
  %s4 = inlined_call_operand.hbm [shape: bf16[256,128], index: 4, kind: input, shape index: {}]
  %s5 = inlined_call_operand.hbm [shape: bf16[128,256], index: 5, kind: input, shape index: {}]
  %s6 = inlined_call_operand.hbm [shape: bf16[256,512], index: 6, kind: input, shape index: {}]
  %s7 = inlined_call_operand.hbm [shape: bf16[512,1024], index: 7, kind: input, shape index: {}]
  %s8 = inlined_call_operand.hbm [shape: bf16[1024,256], index: 8, kind: input, shape index: {}]
  %s9 = inlined_call_operand.hbm [shape: f32[1,3968], index: 9, kind: input, shape index: {}]
  %s10 = inlined_call_operand.hbm [shape: f32[16,256], index: 10, kind: output, shape index: {}]
  %s11 = sld [smem:[#allocation0]]
  $region90: #{tpu_custom_call.1} parent=0
    _
  %s13 = ssub.s32 1, %s11
  %s14 = scalar_select 0, %s13, %s11
  $region1: #{tpu_custom_call.1} parent=0
    #allocation2 [shape = 'u8[16384]{0}', space=vmem, size = 0x4000, scoped, tag = 'input window, operand 0, single buffered']
    #allocation3 [shape = 's32[1]{0}', space=sflag, size = 0x4, scoped, tag = 'scoped memory for tpu_custom_call.1']
    #allocation4 [shape = 's32[1]{0}', space=sflag, size = 0x4, scoped, tag = 'scoped memory for tpu_custom_call.1']
    #allocation5 [shape = 'u8[524288]{0}', space=vmem, size = 0x80000, scoped, tag = 'input window, operand 1, single buffered']
    #allocation6 [shape = 's32[1]{0}', space=sflag, size = 0x4, scoped, tag = 'scoped memory for tpu_custom_call.1']
    #allocation7 [shape = 'u8[1048576]{0}', space=vmem, size = 0x100000, scoped, tag = 'input window, operand 2, single buffered']
    #allocation8 [shape = 'u8[262144]{0}', space=vmem, size = 0x40000, scoped, tag = 'input window, operand 3, single buffered']
    #allocation9 [shape = 's32[1]{0}', space=sflag, size = 0x4, scoped, tag = 'scoped memory for tpu_custom_call.1']
    #allocation10 [shape = 'u8[65536]{0}', space=vmem, size = 0x10000, scoped, tag = 'input window, operand 4, single buffered']
    #allocation11 [shape = 'u8[65536]{0}', space=vmem, size = 0x10000, scoped, tag = 'input window, operand 5, single buffered']
    #allocation12 [shape = 's32[1]{0}', space=sflag, size = 0x4, scoped, tag = 'scoped memory for tpu_custom_call.1']
    #allocation13 [shape = 'u8[262144]{0}', space=vmem, size = 0x40000, scoped, tag = 'input window, operand 6, single buffered']
    #allocation14 [shape = 'u8[1048576]{0}', space=vmem, size = 0x100000, scoped, tag = 'input window, operand 7, single buffered']
    #allocation15 [shape = 's32[1]{0}', space=sflag, size = 0x4, scoped, tag = 'scoped memory for tpu_custom_call.1']
    #allocation16 [shape = 'u8[524288]{0}', space=vmem, size = 0x80000, scoped, tag = 'input window, operand 8, single buffered']
    #allocation17 [shape = 'u8[15872]{0}', space=vmem, size = 0x4000, scoped, tag = 'input window, operand 9, single buffered']
    #allocation18 [shape = 's32[1]{0}', space=sflag, size = 0x4, scoped, tag = 'scoped memory for tpu_custom_call.1']
    #allocation19 [shape = 'u8[16384]{0}', space=vmem, size = 0x4000, scoped, tag = 'output window, operand 0, single buffered']
    %15 = vsyncpa [#allocation3], 0
    %16 = vsyncpa [#allocation6], 0
    %17 = vsyncpa [#allocation9], 0
    %18 = vsyncpa [#allocation12], 0
    %19 = vsyncpa [#allocation15], 0
    %20 = vsyncpa [#allocation18], 0
    %21 = vsyncpa [#allocation4], 0
    // Predicated region
    $region2: #{tpu_custom_call.1} parent=1 // pred_check
      _
    $region3: #{tpu_custom_call.1} parent=1 // pred_check_branch
      %23 = sbr.rel (0) target = $region5
    $region4: #{tpu_custom_call.1} parent=1 // pred_region
      %s25 = ssub.s32 512, 512
      %26 = vsyncadd [#allocation3], %s25
      %s27 = sshll.u32 [#allocation2], 4
      %s28 = int_to_ptr.vmem [resolvable:$true] %s27
      %33 = dma.hbm_to_vmem [thread:$0]  %s0, 512, %s28, [#allocation3], 256, 256, 16
    $region5: #{tpu_custom_call.1} parent=1 // pred_fallthru
      _
    // Predicated region
    $region6: #{tpu_custom_call.1} parent=1 // pred_check
      _
    $region7: #{tpu_custom_call.1} parent=1 // pred_check_branch
      %35 = sbr.rel (0) target = $region9
    $region8: #{tpu_custom_call.1} parent=1 // pred_region
      %s37 = ssub.s32 16384, 16384
      %38 = vsyncadd [#allocation6], %s37
      %s39 = sshll.u32 [#allocation5], 4
      %s40 = int_to_ptr.vmem [resolvable:$true] %s39
      %45 = dma.hbm_to_vmem [thread:$0]  %s1, 16384, %s40, [#allocation6], 512, 512, 32
    $region9: #{tpu_custom_call.1} parent=1 // pred_fallthru
      _
    // Predicated region
    $region10: #{tpu_custom_call.1} parent=1 // pred_check
      _
    $region11: #{tpu_custom_call.1} parent=1 // pred_check_branch
      %47 = sbr.rel (0) target = $region13
    $region12: #{tpu_custom_call.1} parent=1 // pred_region
      %s49 = ssub.s32 32768, 32768
      %50 = vsyncadd [#allocation6], %s49
      %s51 = sshll.u32 [#allocation7], 4
      %s52 = int_to_ptr.vmem [resolvable:$true] %s51
      %57 = dma.hbm_to_vmem [thread:$0]  %s2, 32768, %s52, [#allocation6], 256, 256, 16
    $region13: #{tpu_custom_call.1} parent=1 // pred_fallthru
      _
    // Predicated region
    $region14: #{tpu_custom_call.1} parent=1 // pred_check
      _
    $region15: #{tpu_custom_call.1} parent=1 // pred_check_branch
      %59 = sbr.rel (0) target = $region17
    $region16: #{tpu_custom_call.1} parent=1 // pred_region
      %s61 = ssub.s32 8192, 8192
      %62 = vsyncadd [#allocation9], %s61
      %s63 = sshll.u32 [#allocation8], 4
      %s64 = int_to_ptr.vmem [resolvable:$true] %s63
      %69 = dma.hbm_to_vmem [thread:$0]  %s3, 8192, %s64, [#allocation9], 128, 128, 8
    $region17: #{tpu_custom_call.1} parent=1 // pred_fallthru
      _
    // Predicated region
    $region18: #{tpu_custom_call.1} parent=1 // pred_check
      _
    $region19: #{tpu_custom_call.1} parent=1 // pred_check_branch
      %71 = sbr.rel (0) target = $region21
    $region20: #{tpu_custom_call.1} parent=1 // pred_region
      %s73 = ssub.s32 2048, 2048
      %74 = vsyncadd [#allocation9], %s73
      %s75 = sshll.u32 [#allocation10], 4
      %s76 = int_to_ptr.vmem [resolvable:$true] %s75
      %81 = dma.hbm_to_vmem [thread:$0]  %s4, 2048, %s76, [#allocation9], 64, 64, 4
    $region21: #{tpu_custom_call.1} parent=1 // pred_fallthru
      _
    // Predicated region
    $region22: #{tpu_custom_call.1} parent=1 // pred_check
      _
    $region23: #{tpu_custom_call.1} parent=1 // pred_check_branch
      %83 = sbr.rel (0) target = $region25
    $region24: #{tpu_custom_call.1} parent=1 // pred_region
      %s85 = ssub.s32 2048, 2048
      %86 = vsyncadd [#allocation12], %s85
      %s87 = sshll.u32 [#allocation11], 4
      %s88 = int_to_ptr.vmem [resolvable:$true] %s87
      %93 = dma.hbm_to_vmem [thread:$0]  %s5, 2048, %s88, [#allocation12], 128, 128, 8
    $region25: #{tpu_custom_call.1} parent=1 // pred_fallthru
      _
    // Predicated region
    $region26: #{tpu_custom_call.1} parent=1 // pred_check
      _
    $region27: #{tpu_custom_call.1} parent=1 // pred_check_branch
      %95 = sbr.rel (0) target = $region29
    $region28: #{tpu_custom_call.1} parent=1 // pred_region
      %s97 = ssub.s32 8192, 8192
      %98 = vsyncadd [#allocation12], %s97
      %s99 = sshll.u32 [#allocation13], 4
      %s100 = int_to_ptr.vmem [resolvable:$true] %s99
      %105 = dma.hbm_to_vmem [thread:$0]  %s6, 8192, %s100, [#allocation12], 256, 256, 16
    $region29: #{tpu_custom_call.1} parent=1 // pred_fallthru
      _
    // Predicated region
    $region30: #{tpu_custom_call.1} parent=1 // pred_check
      _
    $region31: #{tpu_custom_call.1} parent=1 // pred_check_branch
      %107 = sbr.rel (0) target = $region33
    $region32: #{tpu_custom_call.1} parent=1 // pred_region
      %s109 = ssub.s32 32768, 32768
      %110 = vsyncadd [#allocation15], %s109
      %s111 = sshll.u32 [#allocation14], 4
      %s112 = int_to_ptr.vmem [resolvable:$true] %s111
      %117 = dma.hbm_to_vmem [thread:$0]  %s7, 32768, %s112, [#allocation15], 512, 512, 32
    $region33: #{tpu_custom_call.1} parent=1 // pred_fallthru
      _
    // Predicated region
    $region34: #{tpu_custom_call.1} parent=1 // pred_check
      _
    $region35: #{tpu_custom_call.1} parent=1 // pred_check_branch
      %119 = sbr.rel (0) target = $region37
    $region36: #{tpu_custom_call.1} parent=1 // pred_region
      %s121 = ssub.s32 16384, 16384
      %122 = vsyncadd [#allocation15], %s121
      %s123 = sshll.u32 [#allocation16], 4
      %s124 = int_to_ptr.vmem [resolvable:$true] %s123
      %129 = dma.hbm_to_vmem [thread:$0]  %s8, 16384, %s124, [#allocation15], 128, 128, 8
    $region37: #{tpu_custom_call.1} parent=1 // pred_fallthru
      _
    // Predicated region
    $region38: #{tpu_custom_call.1} parent=1 // pred_check
      _
    $region39: #{tpu_custom_call.1} parent=1 // pred_check_branch
      %131 = sbr.rel (0) target = $region41
    $region40: #{tpu_custom_call.1} parent=1 // pred_region
      %s133 = ssub.s32 496, 496
      %134 = vsyncadd [#allocation18], %s133
      %s136 = sshll.u32 [#allocation17], 4
      %s137 = int_to_ptr.vmem [resolvable:$true] %s136
      %139 = dma.hbm_to_vmem [thread:$0]  %s9, 496, %s137, [#allocation18]
    $region41: #{tpu_custom_call.1} parent=1 // pred_fallthru
      _
    // Predicated region
    $region42: #{tpu_custom_call.1} parent=1 // pred_check
      _
    $region43: #{tpu_custom_call.1} parent=1 // pred_check_branch
      %141 = sbr.rel (0) target = $region45
    $region44: #{tpu_custom_call.1} parent=1 // pred_region
      %142 = dma.done [#allocation3], 512
    $region45: #{tpu_custom_call.1} parent=1 // pred_fallthru
      _
    // Predicated region
    $region46: #{tpu_custom_call.1} parent=1 // pred_check
      _
    $region47: #{tpu_custom_call.1} parent=1 // pred_check_branch
      %144 = sbr.rel (0) target = $region49
    $region48: #{tpu_custom_call.1} parent=1 // pred_region
      %145 = dma.done [#allocation6], 16384
    $region49: #{tpu_custom_call.1} parent=1 // pred_fallthru
      _
    // Predicated region
    $region50: #{tpu_custom_call.1} parent=1 // pred_check
      _
    $region51: #{tpu_custom_call.1} parent=1 // pred_check_branch
      %147 = sbr.rel (0) target = $region53
    $region52: #{tpu_custom_call.1} parent=1 // pred_region
      %148 = dma.done [#allocation6], 32768
    $region53: #{tpu_custom_call.1} parent=1 // pred_fallthru
      _
    // Predicated region
    $region54: #{tpu_custom_call.1} parent=1 // pred_check
      _
    $region55: #{tpu_custom_call.1} parent=1 // pred_check_branch
      %150 = sbr.rel (0) target = $region57
    $region56: #{tpu_custom_call.1} parent=1 // pred_region
      %151 = dma.done [#allocation9], 8192
    $region57: #{tpu_custom_call.1} parent=1 // pred_fallthru
      _
    // Predicated region
    $region58: #{tpu_custom_call.1} parent=1 // pred_check
      _
    $region59: #{tpu_custom_call.1} parent=1 // pred_check_branch
      %153 = sbr.rel (0) target = $region61
    $region60: #{tpu_custom_call.1} parent=1 // pred_region
      %154 = dma.done [#allocation9], 2048
    $region61: #{tpu_custom_call.1} parent=1 // pred_fallthru
      _
    // Predicated region
    $region62: #{tpu_custom_call.1} parent=1 // pred_check
      _
    $region63: #{tpu_custom_call.1} parent=1 // pred_check_branch
      %156 = sbr.rel (0) target = $region65
    $region64: #{tpu_custom_call.1} parent=1 // pred_region
      %157 = dma.done [#allocation12], 2048
    $region65: #{tpu_custom_call.1} parent=1 // pred_fallthru
      _
    // Predicated region
    $region66: #{tpu_custom_call.1} parent=1 // pred_check
      _
    $region67: #{tpu_custom_call.1} parent=1 // pred_check_branch
      %159 = sbr.rel (0) target = $region69
    $region68: #{tpu_custom_call.1} parent=1 // pred_region
      %160 = dma.done [#allocation12], 8192
    $region69: #{tpu_custom_call.1} parent=1 // pred_fallthru
      _
    // Predicated region
    $region70: #{tpu_custom_call.1} parent=1 // pred_check
      _
    $region71: #{tpu_custom_call.1} parent=1 // pred_check_branch
      %162 = sbr.rel (0) target = $region73
    $region72: #{tpu_custom_call.1} parent=1 // pred_region
      %163 = dma.done [#allocation15], 32768
    $region73: #{tpu_custom_call.1} parent=1 // pred_fallthru
      _
    // Predicated region
    $region74: #{tpu_custom_call.1} parent=1 // pred_check
      _
    $region75: #{tpu_custom_call.1} parent=1 // pred_check_branch
      %165 = sbr.rel (0) target = $region77
    $region76: #{tpu_custom_call.1} parent=1 // pred_region
      %166 = dma.done [#allocation15], 16384
    $region77: #{tpu_custom_call.1} parent=1 // pred_fallthru
      _
    // Predicated region
    $region78: #{tpu_custom_call.1} parent=1 // pred_check
      _
    $region79: #{tpu_custom_call.1} parent=1 // pred_check_branch
      %168 = sbr.rel (0) target = $region81
    $region80: #{tpu_custom_call.1} parent=1 // pred_region
      %169 = dma.done [#allocation18], 496
    $region81: #{tpu_custom_call.1} parent=1 // pred_fallthru
      _
    %v171 = vld [vmem:[#allocation2] sm:$0xff]
    %v172 = vld [vmem:[#allocation2 + $0x8] sm:$0xff]
    %v173 = vld [vmem:[#allocation2 + $0x10] sm:$0xff]
    %v174 = vld [vmem:[#allocation2 + $0x18] sm:$0xff]
    %v175 = vpack.c.bf16 %v173, %v171
    %v176 = vpack.c.bf16 %v174, %v172
    %v177 = vld [vmem:[#allocation5] sm:$0xff]
    %v178 = vld [vmem:[#allocation5 + $0x8] sm:$0xff]
    %v179 = vld [vmem:[#allocation5 + $0x10] sm:$0xff]
    %v180 = vld [vmem:[#allocation5 + $0x18] sm:$0xff]
    %v181 = vld [vmem:[#allocation5 + $0x20] sm:$0xff]
    %v182 = vld [vmem:[#allocation5 + $0x28] sm:$0xff]
    %v183 = vld [vmem:[#allocation5 + $0x30] sm:$0xff]
    %v184 = vld [vmem:[#allocation5 + $0x38] sm:$0xff]
    %v185 = vld [vmem:[#allocation5 + $0x40] sm:$0xff]
    %v186 = vld [vmem:[#allocation5 + $0x48] sm:$0xff]
    %v187 = vld [vmem:[#allocation5 + $0x50] sm:$0xff]
    %v188 = vld [vmem:[#allocation5 + $0x58] sm:$0xff]
    %v189 = vld [vmem:[#allocation5 + $0x60] sm:$0xff]
    %v190 = vld [vmem:[#allocation5 + $0x68] sm:$0xff]
    %v191 = vld [vmem:[#allocation5 + $0x70] sm:$0xff]
    %v192 = vld [vmem:[#allocation5 + $0x78] sm:$0xff]
    %v193 = vld [vmem:[#allocation5 + $0x80] sm:$0xff]
    %v194 = vld [vmem:[#allocation5 + $0x88] sm:$0xff]
    %v195 = vld [vmem:[#allocation5 + $0x90] sm:$0xff]
    %v196 = vld [vmem:[#allocation5 + $0x98] sm:$0xff]
    %v197 = vld [vmem:[#allocation5 + $0xa0] sm:$0xff]
    %v198 = vld [vmem:[#allocation5 + $0xa8] sm:$0xff]
    %v199 = vld [vmem:[#allocation5 + $0xb0] sm:$0xff]
    %v200 = vld [vmem:[#allocation5 + $0xb8] sm:$0xff]
    %v201 = vld [vmem:[#allocation5 + $0xc0] sm:$0xff]
    %v202 = vld [vmem:[#allocation5 + $0xc8] sm:$0xff]
    %v203 = vld [vmem:[#allocation5 + $0xd0] sm:$0xff]
    %v204 = vld [vmem:[#allocation5 + $0xd8] sm:$0xff]
    %v205 = vld [vmem:[#allocation5 + $0xe0] sm:$0xff]
    %v206 = vld [vmem:[#allocation5 + $0xe8] sm:$0xff]
    %v207 = vld [vmem:[#allocation5 + $0xf0] sm:$0xff]
    %v208 = vld [vmem:[#allocation5 + $0xf8] sm:$0xff]
    %v209 = vld [vmem:[#allocation5 + $0x100] sm:$0xff]
    %v210 = vld [vmem:[#allocation5 + $0x108] sm:$0xff]
    %v211 = vld [vmem:[#allocation5 + $0x110] sm:$0xff]
    %v212 = vld [vmem:[#allocation5 + $0x118] sm:$0xff]
    %v213 = vld [vmem:[#allocation5 + $0x120] sm:$0xff]
    %v214 = vld [vmem:[#allocation5 + $0x128] sm:$0xff]
    %v215 = vld [vmem:[#allocation5 + $0x130] sm:$0xff]
    %v216 = vld [vmem:[#allocation5 + $0x138] sm:$0xff]
    %v217 = vld [vmem:[#allocation5 + $0x140] sm:$0xff]
    %v218 = vld [vmem:[#allocation5 + $0x148] sm:$0xff]
    %v219 = vld [vmem:[#allocation5 + $0x150] sm:$0xff]
    %v220 = vld [vmem:[#allocation5 + $0x158] sm:$0xff]
    %v221 = vld [vmem:[#allocation5 + $0x160] sm:$0xff]
    %v222 = vld [vmem:[#allocation5 + $0x168] sm:$0xff]
    %v223 = vld [vmem:[#allocation5 + $0x170] sm:$0xff]
    %v224 = vld [vmem:[#allocation5 + $0x178] sm:$0xff]
    %v225 = vld [vmem:[#allocation5 + $0x180] sm:$0xff]
    %v226 = vld [vmem:[#allocation5 + $0x188] sm:$0xff]
    %v227 = vld [vmem:[#allocation5 + $0x190] sm:$0xff]
    %v228 = vld [vmem:[#allocation5 + $0x198] sm:$0xff]
    %v229 = vld [vmem:[#allocation5 + $0x1a0] sm:$0xff]
    %v230 = vld [vmem:[#allocation5 + $0x1a8] sm:$0xff]
    %v231 = vld [vmem:[#allocation5 + $0x1b0] sm:$0xff]
    %v232 = vld [vmem:[#allocation5 + $0x1b8] sm:$0xff]
    %v233 = vld [vmem:[#allocation5 + $0x1c0] sm:$0xff]
    %v234 = vld [vmem:[#allocation5 + $0x1c8] sm:$0xff]
    %v235 = vld [vmem:[#allocation5 + $0x1d0] sm:$0xff]
    %v236 = vld [vmem:[#allocation5 + $0x1d8] sm:$0xff]
    %v237 = vld [vmem:[#allocation5 + $0x1e0] sm:$0xff]
    %v238 = vld [vmem:[#allocation5 + $0x1e8] sm:$0xff]
    %v239 = vld [vmem:[#allocation5 + $0x1f0] sm:$0xff]
    %v240 = vld [vmem:[#allocation5 + $0x1f8] sm:$0xff]
    %v241 = vld [vmem:[#allocation5 + $0x200] sm:$0xff]
    %v242 = vld [vmem:[#allocation5 + $0x208] sm:$0xff]
    %v243 = vld [vmem:[#allocation5 + $0x210] sm:$0xff]
    %v244 = vld [vmem:[#allocation5 + $0x218] sm:$0xff]
    %v245 = vld [vmem:[#allocation5 + $0x220] sm:$0xff]
    %v246 = vld [vmem:[#allocation5 + $0x228] sm:$0xff]
    %v247 = vld [vmem:[#allocation5 + $0x230] sm:$0xff]
    %v248 = vld [vmem:[#allocation5 + $0x238] sm:$0xff]
    %v249 = vld [vmem:[#allocation5 + $0x240] sm:$0xff]
    %v250 = vld [vmem:[#allocation5 + $0x248] sm:$0xff]
    %v251 = vld [vmem:[#allocation5 + $0x250] sm:$0xff]
    %v252 = vld [vmem:[#allocation5 + $0x258] sm:$0xff]
    %v253 = vld [vmem:[#allocation5 + $0x260] sm:$0xff]
    %v254 = vld [vmem:[#allocation5 + $0x268] sm:$0xff]
    %v255 = vld [vmem:[#allocation5 + $0x270] sm:$0xff]
    %v256 = vld [vmem:[#allocation5 + $0x278] sm:$0xff]
    %v257 = vld [vmem:[#allocation5 + $0x280] sm:$0xff]
    %v258 = vld [vmem:[#allocation5 + $0x288] sm:$0xff]
    %v259 = vld [vmem:[#allocation5 + $0x290] sm:$0xff]
    %v260 = vld [vmem:[#allocation5 + $0x298] sm:$0xff]
    %v261 = vld [vmem:[#allocation5 + $0x2a0] sm:$0xff]
    %v262 = vld [vmem:[#allocation5 + $0x2a8] sm:$0xff]
    %v263 = vld [vmem:[#allocation5 + $0x2b0] sm:$0xff]
    %v264 = vld [vmem:[#allocation5 + $0x2b8] sm:$0xff]
    %v265 = vld [vmem:[#allocation5 + $0x2c0] sm:$0xff]
    %v266 = vld [vmem:[#allocation5 + $0x2c8] sm:$0xff]
    %v267 = vld [vmem:[#allocation5 + $0x2d0] sm:$0xff]
    %v268 = vld [vmem:[#allocation5 + $0x2d8] sm:$0xff]
    %v269 = vld [vmem:[#allocation5 + $0x2e0] sm:$0xff]
    %v270 = vld [vmem:[#allocation5 + $0x2e8] sm:$0xff]
    %v271 = vld [vmem:[#allocation5 + $0x2f0] sm:$0xff]
    %v272 = vld [vmem:[#allocation5 + $0x2f8] sm:$0xff]
    %v273 = vld [vmem:[#allocation5 + $0x300] sm:$0xff]
    %v274 = vld [vmem:[#allocation5 + $0x308] sm:$0xff]
    %v275 = vld [vmem:[#allocation5 + $0x310] sm:$0xff]
    %v276 = vld [vmem:[#allocation5 + $0x318] sm:$0xff]
    %v277 = vld [vmem:[#allocation5 + $0x320] sm:$0xff]
    %v278 = vld [vmem:[#allocation5 + $0x328] sm:$0xff]
    %v279 = vld [vmem:[#allocation5 + $0x330] sm:$0xff]
    %v280 = vld [vmem:[#allocation5 + $0x338] sm:$0xff]
    %v281 = vld [vmem:[#allocation5 + $0x340] sm:$0xff]
    %v282 = vld [vmem:[#allocation5 + $0x348] sm:$0xff]
    %v283 = vld [vmem:[#allocation5 + $0x350] sm:$0xff]
    %v284 = vld [vmem:[#allocation5 + $0x358] sm:$0xff]
    %v285 = vld [vmem:[#allocation5 + $0x360] sm:$0xff]
    %v286 = vld [vmem:[#allocation5 + $0x368] sm:$0xff]
    %v287 = vld [vmem:[#allocation5 + $0x370] sm:$0xff]
    %v288 = vld [vmem:[#allocation5 + $0x378] sm:$0xff]
    %v289 = vld [vmem:[#allocation5 + $0x380] sm:$0xff]
    %v290 = vld [vmem:[#allocation5 + $0x388] sm:$0xff]
    %v291 = vld [vmem:[#allocation5 + $0x390] sm:$0xff]
    %v292 = vld [vmem:[#allocation5 + $0x398] sm:$0xff]
    %v293 = vld [vmem:[#allocation5 + $0x3a0] sm:$0xff]
    %v294 = vld [vmem:[#allocation5 + $0x3a8] sm:$0xff]
    %v295 = vld [vmem:[#allocation5 + $0x3b0] sm:$0xff]
    %v296 = vld [vmem:[#allocation5 + $0x3b8] sm:$0xff]
    %v297 = vld [vmem:[#allocation5 + $0x3c0] sm:$0xff]
    %v298 = vld [vmem:[#allocation5 + $0x3c8] sm:$0xff]
    %v299 = vld [vmem:[#allocation5 + $0x3d0] sm:$0xff]
    %v300 = vld [vmem:[#allocation5 + $0x3d8] sm:$0xff]
    %v301 = vld [vmem:[#allocation5 + $0x3e0] sm:$0xff]
    %v302 = vld [vmem:[#allocation5 + $0x3e8] sm:$0xff]
    %v303 = vld [vmem:[#allocation5 + $0x3f0] sm:$0xff]
    %v304 = vld [vmem:[#allocation5 + $0x3f8] sm:$0xff]
    %v433 = vunpack.c.l.b16 %v177
    %v434 = vunpack.c.h.b16 %v177
    %v435 = vunpack.c.l.b16 %v178
    %v436 = vunpack.c.h.b16 %v178
    %v437 = vunpack.c.l.b16 %v179
    %v438 = vunpack.c.h.b16 %v179
    %v439 = vunpack.c.l.b16 %v180
    %v440 = vunpack.c.h.b16 %v180
    %v441 = vunpack.c.l.b16 %v181
    %v442 = vunpack.c.h.b16 %v181
    %v443 = vunpack.c.l.b16 %v182
    %v444 = vunpack.c.h.b16 %v182
    %v445 = vunpack.c.l.b16 %v183
    %v446 = vunpack.c.h.b16 %v183
    %v447 = vunpack.c.l.b16 %v184
    %v448 = vunpack.c.h.b16 %v184
    %v449 = vunpack.c.l.b16 %v185
    %v450 = vunpack.c.h.b16 %v185
    %v451 = vunpack.c.l.b16 %v186
    %v452 = vunpack.c.h.b16 %v186
    %v453 = vunpack.c.l.b16 %v187
    %v454 = vunpack.c.h.b16 %v187
    %v455 = vunpack.c.l.b16 %v188
    %v456 = vunpack.c.h.b16 %v188
    %v457 = vunpack.c.l.b16 %v189
    %v458 = vunpack.c.h.b16 %v189
    %v459 = vunpack.c.l.b16 %v190
    %v460 = vunpack.c.h.b16 %v190
    %v461 = vunpack.c.l.b16 %v191
    %v462 = vunpack.c.h.b16 %v191
    %v463 = vunpack.c.l.b16 %v192
    %v464 = vunpack.c.h.b16 %v192
    %v465 = vunpack.c.l.b16 %v193
    %v466 = vunpack.c.h.b16 %v193
    %v467 = vunpack.c.l.b16 %v194
    %v468 = vunpack.c.h.b16 %v194
    %v469 = vunpack.c.l.b16 %v195
    %v470 = vunpack.c.h.b16 %v195
    %v471 = vunpack.c.l.b16 %v196
    %v472 = vunpack.c.h.b16 %v196
    %v473 = vunpack.c.l.b16 %v197
    %v474 = vunpack.c.h.b16 %v197
    %v475 = vunpack.c.l.b16 %v198
    %v476 = vunpack.c.h.b16 %v198
    %v477 = vunpack.c.l.b16 %v199
    %v478 = vunpack.c.h.b16 %v199
    %v479 = vunpack.c.l.b16 %v200
    %v480 = vunpack.c.h.b16 %v200
    %v481 = vunpack.c.l.b16 %v201
    %v482 = vunpack.c.h.b16 %v201
    %v483 = vunpack.c.l.b16 %v202
    %v484 = vunpack.c.h.b16 %v202
    %v485 = vunpack.c.l.b16 %v203
    %v486 = vunpack.c.h.b16 %v203
    %v487 = vunpack.c.l.b16 %v204
    %v488 = vunpack.c.h.b16 %v204
    %v489 = vunpack.c.l.b16 %v205
    %v490 = vunpack.c.h.b16 %v205
    %v491 = vunpack.c.l.b16 %v206
    %v492 = vunpack.c.h.b16 %v206
    %v493 = vunpack.c.l.b16 %v207
    %v494 = vunpack.c.h.b16 %v207
    %v495 = vunpack.c.l.b16 %v208
    %v496 = vunpack.c.h.b16 %v208
    %v497 = vunpack.c.l.b16 %v209
    %v498 = vunpack.c.h.b16 %v209
    %v499 = vunpack.c.l.b16 %v210
    %v500 = vunpack.c.h.b16 %v210
    %v501 = vunpack.c.l.b16 %v211
    %v502 = vunpack.c.h.b16 %v211
    %v503 = vunpack.c.l.b16 %v212
    %v504 = vunpack.c.h.b16 %v212
    %v505 = vunpack.c.l.b16 %v213
    %v506 = vunpack.c.h.b16 %v213
    %v507 = vunpack.c.l.b16 %v214
    %v508 = vunpack.c.h.b16 %v214
    %v509 = vunpack.c.l.b16 %v215
    %v510 = vunpack.c.h.b16 %v215
    %v511 = vunpack.c.l.b16 %v216
    %v512 = vunpack.c.h.b16 %v216
    %v513 = vunpack.c.l.b16 %v217
    %v514 = vunpack.c.h.b16 %v217
    %v515 = vunpack.c.l.b16 %v218
    %v516 = vunpack.c.h.b16 %v218
    %v517 = vunpack.c.l.b16 %v219
    %v518 = vunpack.c.h.b16 %v219
    %v519 = vunpack.c.l.b16 %v220
    %v520 = vunpack.c.h.b16 %v220
    %v521 = vunpack.c.l.b16 %v221
    %v522 = vunpack.c.h.b16 %v221
    %v523 = vunpack.c.l.b16 %v222
    %v524 = vunpack.c.h.b16 %v222
    %v525 = vunpack.c.l.b16 %v223
    %v526 = vunpack.c.h.b16 %v223
    %v527 = vunpack.c.l.b16 %v224
    %v528 = vunpack.c.h.b16 %v224
    %v529 = vunpack.c.l.b16 %v225
    %v530 = vunpack.c.h.b16 %v225
    %v531 = vunpack.c.l.b16 %v226
    %v532 = vunpack.c.h.b16 %v226
    %v533 = vunpack.c.l.b16 %v227
    %v534 = vunpack.c.h.b16 %v227
    %v535 = vunpack.c.l.b16 %v228
    %v536 = vunpack.c.h.b16 %v228
    %v537 = vunpack.c.l.b16 %v229
    %v538 = vunpack.c.h.b16 %v229
    %v539 = vunpack.c.l.b16 %v230
    %v540 = vunpack.c.h.b16 %v230
    %v541 = vunpack.c.l.b16 %v231
    %v542 = vunpack.c.h.b16 %v231
    %v543 = vunpack.c.l.b16 %v232
    %v544 = vunpack.c.h.b16 %v232
    %v545 = vunpack.c.l.b16 %v233
    %v546 = vunpack.c.h.b16 %v233
    %v547 = vunpack.c.l.b16 %v234
    %v548 = vunpack.c.h.b16 %v234
    %v549 = vunpack.c.l.b16 %v235
    %v550 = vunpack.c.h.b16 %v235
    %v551 = vunpack.c.l.b16 %v236
    %v552 = vunpack.c.h.b16 %v236
    %v553 = vunpack.c.l.b16 %v237
    %v554 = vunpack.c.h.b16 %v237
    %v555 = vunpack.c.l.b16 %v238
    %v556 = vunpack.c.h.b16 %v238
    %v557 = vunpack.c.l.b16 %v239
    %v558 = vunpack.c.h.b16 %v239
    %v559 = vunpack.c.l.b16 %v240
    %v560 = vunpack.c.h.b16 %v240
    %v561 = vunpack.c.l.b16 %v241
    %v562 = vunpack.c.h.b16 %v241
    %v563 = vunpack.c.l.b16 %v242
    %v564 = vunpack.c.h.b16 %v242
    %v565 = vunpack.c.l.b16 %v243
    %v566 = vunpack.c.h.b16 %v243
    %v567 = vunpack.c.l.b16 %v244
    %v568 = vunpack.c.h.b16 %v244
    %v569 = vunpack.c.l.b16 %v245
    %v570 = vunpack.c.h.b16 %v245
    %v571 = vunpack.c.l.b16 %v246
    %v572 = vunpack.c.h.b16 %v246
    %v573 = vunpack.c.l.b16 %v247
    %v574 = vunpack.c.h.b16 %v247
    %v575 = vunpack.c.l.b16 %v248
    %v576 = vunpack.c.h.b16 %v248
    %v577 = vunpack.c.l.b16 %v249
    %v578 = vunpack.c.h.b16 %v249
    %v579 = vunpack.c.l.b16 %v250
    %v580 = vunpack.c.h.b16 %v250
    %v581 = vunpack.c.l.b16 %v251
    %v582 = vunpack.c.h.b16 %v251
    %v583 = vunpack.c.l.b16 %v252
    %v584 = vunpack.c.h.b16 %v252
    %v585 = vunpack.c.l.b16 %v253
    %v586 = vunpack.c.h.b16 %v253
    %v587 = vunpack.c.l.b16 %v254
    %v588 = vunpack.c.h.b16 %v254
    %v589 = vunpack.c.l.b16 %v255
    %v590 = vunpack.c.h.b16 %v255
    %v591 = vunpack.c.l.b16 %v256
    %v592 = vunpack.c.h.b16 %v256
    %v593 = vunpack.c.l.b16 %v257
    %v594 = vunpack.c.h.b16 %v257
    %v595 = vunpack.c.l.b16 %v258
    %v596 = vunpack.c.h.b16 %v258
    %v597 = vunpack.c.l.b16 %v259
    %v598 = vunpack.c.h.b16 %v259
    %v599 = vunpack.c.l.b16 %v260
    %v600 = vunpack.c.h.b16 %v260
    %v601 = vunpack.c.l.b16 %v261
    %v602 = vunpack.c.h.b16 %v261
    %v603 = vunpack.c.l.b16 %v262
    %v604 = vunpack.c.h.b16 %v262
    %v605 = vunpack.c.l.b16 %v263
    %v606 = vunpack.c.h.b16 %v263
    %v607 = vunpack.c.l.b16 %v264
    %v608 = vunpack.c.h.b16 %v264
    %v609 = vunpack.c.l.b16 %v265
    %v610 = vunpack.c.h.b16 %v265
    %v611 = vunpack.c.l.b16 %v266
    %v612 = vunpack.c.h.b16 %v266
    %v613 = vunpack.c.l.b16 %v267
    %v614 = vunpack.c.h.b16 %v267
    %v615 = vunpack.c.l.b16 %v268
    %v616 = vunpack.c.h.b16 %v268
    %v617 = vunpack.c.l.b16 %v269
    %v618 = vunpack.c.h.b16 %v269
    %v619 = vunpack.c.l.b16 %v270
    %v620 = vunpack.c.h.b16 %v270
    %v621 = vunpack.c.l.b16 %v271
    %v622 = vunpack.c.h.b16 %v271
    %v623 = vunpack.c.l.b16 %v272
    %v624 = vunpack.c.h.b16 %v272
    %v625 = vunpack.c.l.b16 %v273
    %v626 = vunpack.c.h.b16 %v273
    %v627 = vunpack.c.l.b16 %v274
    %v628 = vunpack.c.h.b16 %v274
    %v629 = vunpack.c.l.b16 %v275
    %v630 = vunpack.c.h.b16 %v275
    %v631 = vunpack.c.l.b16 %v276
    %v632 = vunpack.c.h.b16 %v276
    %v633 = vunpack.c.l.b16 %v277
    %v634 = vunpack.c.h.b16 %v277
    %v635 = vunpack.c.l.b16 %v278
    %v636 = vunpack.c.h.b16 %v278
    %v637 = vunpack.c.l.b16 %v279
    %v638 = vunpack.c.h.b16 %v279
    %v639 = vunpack.c.l.b16 %v280
    %v640 = vunpack.c.h.b16 %v280
    %v641 = vunpack.c.l.b16 %v281
    %v642 = vunpack.c.h.b16 %v281
    %v643 = vunpack.c.l.b16 %v282
    %v644 = vunpack.c.h.b16 %v282
    %v645 = vunpack.c.l.b16 %v283
    %v646 = vunpack.c.h.b16 %v283
    %v647 = vunpack.c.l.b16 %v284
    %v648 = vunpack.c.h.b16 %v284
    %v649 = vunpack.c.l.b16 %v285
    %v650 = vunpack.c.h.b16 %v285
    %v651 = vunpack.c.l.b16 %v286
    %v652 = vunpack.c.h.b16 %v286
    %v653 = vunpack.c.l.b16 %v287
    %v654 = vunpack.c.h.b16 %v287
    %v655 = vunpack.c.l.b16 %v288
    %v656 = vunpack.c.h.b16 %v288
    %v657 = vunpack.c.l.b16 %v289
    %v658 = vunpack.c.h.b16 %v289
    %v659 = vunpack.c.l.b16 %v290
    %v660 = vunpack.c.h.b16 %v290
    %v661 = vunpack.c.l.b16 %v291
    %v662 = vunpack.c.h.b16 %v291
    %v663 = vunpack.c.l.b16 %v292
    %v664 = vunpack.c.h.b16 %v292
    %v665 = vunpack.c.l.b16 %v293
    %v666 = vunpack.c.h.b16 %v293
    %v667 = vunpack.c.l.b16 %v294
    %v668 = vunpack.c.h.b16 %v294
    %v669 = vunpack.c.l.b16 %v295
    %v670 = vunpack.c.h.b16 %v295
    %v671 = vunpack.c.l.b16 %v296
    %v672 = vunpack.c.h.b16 %v296
    %v673 = vunpack.c.l.b16 %v297
    %v674 = vunpack.c.h.b16 %v297
    %v675 = vunpack.c.l.b16 %v298
    %v676 = vunpack.c.h.b16 %v298
    %v677 = vunpack.c.l.b16 %v299
    %v678 = vunpack.c.h.b16 %v299
    %v679 = vunpack.c.l.b16 %v300
    %v680 = vunpack.c.h.b16 %v300
    %v681 = vunpack.c.l.b16 %v301
    %v682 = vunpack.c.h.b16 %v301
    %v683 = vunpack.c.l.b16 %v302
    %v684 = vunpack.c.h.b16 %v302
    %v685 = vunpack.c.l.b16 %v303
    %v686 = vunpack.c.h.b16 %v303
    %v687 = vunpack.c.l.b16 %v304
    %v688 = vunpack.c.h.b16 %v304
    %v689 = vpack.c.b16 %v441, %v433
    %v690 = vpack.c.b16 %v442, %v434
    %v691 = vpack.c.b16 %v443, %v435
    %v692 = vpack.c.b16 %v444, %v436
    %v693 = vpack.c.b16 %v445, %v437
    %v694 = vpack.c.b16 %v446, %v438
    %v695 = vpack.c.b16 %v447, %v439
    %v696 = vpack.c.b16 %v448, %v440
    %v697 = vpack.c.b16 %v457, %v449
    %v698 = vpack.c.b16 %v458, %v450
    %v699 = vpack.c.b16 %v459, %v451
    %v700 = vpack.c.b16 %v460, %v452
    %v701 = vpack.c.b16 %v461, %v453
    %v702 = vpack.c.b16 %v462, %v454
    %v703 = vpack.c.b16 %v463, %v455
    %v704 = vpack.c.b16 %v464, %v456
    %v705 = vpack.c.b16 %v473, %v465
    %v706 = vpack.c.b16 %v474, %v466
    %v707 = vpack.c.b16 %v475, %v467
    %v708 = vpack.c.b16 %v476, %v468
    %v709 = vpack.c.b16 %v477, %v469
    %v710 = vpack.c.b16 %v478, %v470
    %v711 = vpack.c.b16 %v479, %v471
    %v712 = vpack.c.b16 %v480, %v472
    %v713 = vpack.c.b16 %v489, %v481
    %v714 = vpack.c.b16 %v490, %v482
    %v715 = vpack.c.b16 %v491, %v483
    %v716 = vpack.c.b16 %v492, %v484
    %v717 = vpack.c.b16 %v493, %v485
    %v718 = vpack.c.b16 %v494, %v486
    %v719 = vpack.c.b16 %v495, %v487
    %v720 = vpack.c.b16 %v496, %v488
    %v721 = vpack.c.b16 %v505, %v497
    %v722 = vpack.c.b16 %v506, %v498
    %v723 = vpack.c.b16 %v507, %v499
    %v724 = vpack.c.b16 %v508, %v500
    %v725 = vpack.c.b16 %v509, %v501
    %v726 = vpack.c.b16 %v510, %v502
    %v727 = vpack.c.b16 %v511, %v503
    %v728 = vpack.c.b16 %v512, %v504
    %v729 = vpack.c.b16 %v521, %v513
    %v730 = vpack.c.b16 %v522, %v514
    %v731 = vpack.c.b16 %v523, %v515
    %v732 = vpack.c.b16 %v524, %v516
    %v733 = vpack.c.b16 %v525, %v517
    %v734 = vpack.c.b16 %v526, %v518
    %v735 = vpack.c.b16 %v527, %v519
    %v736 = vpack.c.b16 %v528, %v520
    %v737 = vpack.c.b16 %v537, %v529
    %v738 = vpack.c.b16 %v538, %v530
    %v739 = vpack.c.b16 %v539, %v531
    %v740 = vpack.c.b16 %v540, %v532
    %v741 = vpack.c.b16 %v541, %v533
    %v742 = vpack.c.b16 %v542, %v534
    %v743 = vpack.c.b16 %v543, %v535
    %v744 = vpack.c.b16 %v544, %v536
    %v745 = vpack.c.b16 %v553, %v545
    %v746 = vpack.c.b16 %v554, %v546
    %v747 = vpack.c.b16 %v555, %v547
    %v748 = vpack.c.b16 %v556, %v548
    %v749 = vpack.c.b16 %v557, %v549
    %v750 = vpack.c.b16 %v558, %v550
    %v751 = vpack.c.b16 %v559, %v551
    %v752 = vpack.c.b16 %v560, %v552
    %v753 = vpack.c.b16 %v569, %v561
    %v754 = vpack.c.b16 %v570, %v562
    %v755 = vpack.c.b16 %v571, %v563
    %v756 = vpack.c.b16 %v572, %v564
    %v757 = vpack.c.b16 %v573, %v565
    %v758 = vpack.c.b16 %v574, %v566
    %v759 = vpack.c.b16 %v575, %v567
    %v760 = vpack.c.b16 %v576, %v568
    %v761 = vpack.c.b16 %v585, %v577
    %v762 = vpack.c.b16 %v586, %v578
    %v763 = vpack.c.b16 %v587, %v579
    %v764 = vpack.c.b16 %v588, %v580
    %v765 = vpack.c.b16 %v589, %v581
    %v766 = vpack.c.b16 %v590, %v582
    %v767 = vpack.c.b16 %v591, %v583
    %v768 = vpack.c.b16 %v592, %v584
    %v769 = vpack.c.b16 %v601, %v593
    %v770 = vpack.c.b16 %v602, %v594
    %v771 = vpack.c.b16 %v603, %v595
    %v772 = vpack.c.b16 %v604, %v596
    %v773 = vpack.c.b16 %v605, %v597
    %v774 = vpack.c.b16 %v606, %v598
    %v775 = vpack.c.b16 %v607, %v599
    %v776 = vpack.c.b16 %v608, %v600
    %v777 = vpack.c.b16 %v617, %v609
    %v778 = vpack.c.b16 %v618, %v610
    %v779 = vpack.c.b16 %v619, %v611
    %v780 = vpack.c.b16 %v620, %v612
    %v781 = vpack.c.b16 %v621, %v613
    %v782 = vpack.c.b16 %v622, %v614
    %v783 = vpack.c.b16 %v623, %v615
    %v784 = vpack.c.b16 %v624, %v616
    %v785 = vpack.c.b16 %v633, %v625
    %v786 = vpack.c.b16 %v634, %v626
    %v787 = vpack.c.b16 %v635, %v627
    %v788 = vpack.c.b16 %v636, %v628
    %v789 = vpack.c.b16 %v637, %v629
    %v790 = vpack.c.b16 %v638, %v630
    %v791 = vpack.c.b16 %v639, %v631
    %v792 = vpack.c.b16 %v640, %v632
    %v793 = vpack.c.b16 %v649, %v641
    %v794 = vpack.c.b16 %v650, %v642
    %v795 = vpack.c.b16 %v651, %v643
    %v796 = vpack.c.b16 %v652, %v644
    %v797 = vpack.c.b16 %v653, %v645
    %v798 = vpack.c.b16 %v654, %v646
    %v799 = vpack.c.b16 %v655, %v647
    %v800 = vpack.c.b16 %v656, %v648
    %v801 = vpack.c.b16 %v665, %v657
    %v802 = vpack.c.b16 %v666, %v658
    %v803 = vpack.c.b16 %v667, %v659
    %v804 = vpack.c.b16 %v668, %v660
    %v805 = vpack.c.b16 %v669, %v661
    %v806 = vpack.c.b16 %v670, %v662
    %v807 = vpack.c.b16 %v671, %v663
    %v808 = vpack.c.b16 %v672, %v664
    %v809 = vpack.c.b16 %v681, %v673
    %v810 = vpack.c.b16 %v682, %v674
    %v811 = vpack.c.b16 %v683, %v675
    %v812 = vpack.c.b16 %v684, %v676
    %v813 = vpack.c.b16 %v685, %v677
    %v814 = vpack.c.b16 %v686, %v678
    %v815 = vpack.c.b16 %v687, %v679
    %v816 = vpack.c.b16 %v688, %v680
    %945 = vmatprep.subr.bf16.mxu0 %v746
    %946 = vmatpush1.bf16.msra.mxu0 %v745
    %947 = vmatprep.subr.bf16.mxu0 %v738
    %948 = vmatpush1.bf16.msra.mxu0 %v737
    %949 = vmatprep.subr.bf16.mxu0 %v730
    %950 = vmatpush1.bf16.msra.mxu0 %v729
    %951 = vmatprep.subr.bf16.mxu0 %v722
    %952 = vmatpush1.bf16.msra.mxu0 %v721
    %953 = vmatprep.subr.bf16.mxu0 %v714
    %954 = vmatpush1.bf16.msra.mxu0 %v713
    %955 = vmatprep.subr.bf16.mxu0 %v706
    %956 = vmatpush1.bf16.msra.mxu0 %v705
    %957 = vmatprep.subr.bf16.mxu0 %v698
    %958 = vmatpush1.bf16.msra.mxu0 %v697
    %959 = vmatprep.subr.bf16.mxu0 %v690
    %960 = vmatpush1.bf16.msra.mxu0 %v689
    %961 = vmatprep.subr.bf16.mxu0 %v810
    %962 = vmatpush2.bf16.msra.mxu0 %v809
    %963 = vmatprep.subr.bf16.mxu0 %v802
    %964 = vmatpush2.bf16.msra.mxu0 %v801
    %965 = vmatprep.subr.bf16.mxu0 %v794
    %966 = vmatpush2.bf16.msra.mxu0 %v793
    %967 = vmatprep.subr.bf16.mxu0 %v786
    %968 = vmatpush2.bf16.msra.mxu0 %v785
    %969 = vmatprep.subr.bf16.mxu0 %v778
    %970 = vmatpush2.bf16.msra.mxu0 %v777
    %971 = vmatprep.subr.bf16.mxu0 %v770
    %972 = vmatpush2.bf16.msra.mxu0 %v769
    %973 = vmatprep.subr.bf16.mxu0 %v762
    %974 = vmatpush2.bf16.msra.mxu0 %v761
    %975 = vmatprep.subr.bf16.mxu0 %v754
    %976 = vmatpush2.bf16.msra.mxu0 %v753
    %977 = vmatprep.mubr.bf16.mxu0 %v176
    %978 = vmatmul.mubr.bf16.gmra.mxu0 %v175
    %v979 = vpop.f32.mrf.mxu0
    %v980 = vadd.f32 0.0, %v979
    %v981 = vpop.f32.mrf.mxu0
    %v982 = vadd.f32 0.0, %v981
    %v983 = vpop.f32.mrf.mxu0
    %v984 = vadd.f32 0.0, %v983
    %v985 = vpop.f32.mrf.mxu0
    %v986 = vadd.f32 0.0, %v985
    %987 = vdwg.mxu0
    %988 = vmatprep.subr.bf16.mxu0 %v748
    %989 = vmatpush1.bf16.msra.mxu0 %v747
    %990 = vmatprep.subr.bf16.mxu0 %v740
    %991 = vmatpush1.bf16.msra.mxu0 %v739
    %992 = vmatprep.subr.bf16.mxu0 %v732
    %993 = vmatpush1.bf16.msra.mxu0 %v731
    %994 = vmatprep.subr.bf16.mxu0 %v724
    %995 = vmatpush1.bf16.msra.mxu0 %v723
    %996 = vmatprep.subr.bf16.mxu0 %v716
    %997 = vmatpush1.bf16.msra.mxu0 %v715
    %998 = vmatprep.subr.bf16.mxu0 %v708
    %999 = vmatpush1.bf16.msra.mxu0 %v707
    %1000 = vmatprep.subr.bf16.mxu0 %v700
    %1001 = vmatpush1.bf16.msra.mxu0 %v699
    %1002 = vmatprep.subr.bf16.mxu0 %v692
    %1003 = vmatpush1.bf16.msra.mxu0 %v691
    %1004 = vmatprep.subr.bf16.mxu0 %v812
    %1005 = vmatpush2.bf16.msra.mxu0 %v811
    %1006 = vmatprep.subr.bf16.mxu0 %v804
    %1007 = vmatpush2.bf16.msra.mxu0 %v803
    %1008 = vmatprep.subr.bf16.mxu0 %v796
    %1009 = vmatpush2.bf16.msra.mxu0 %v795
    %1010 = vmatprep.subr.bf16.mxu0 %v788
    %1011 = vmatpush2.bf16.msra.mxu0 %v787
    %1012 = vmatprep.subr.bf16.mxu0 %v780
    %1013 = vmatpush2.bf16.msra.mxu0 %v779
    %1014 = vmatprep.subr.bf16.mxu0 %v772
    %1015 = vmatpush2.bf16.msra.mxu0 %v771
    %1016 = vmatprep.subr.bf16.mxu0 %v764
    %1017 = vmatpush2.bf16.msra.mxu0 %v763
    %1018 = vmatprep.subr.bf16.mxu0 %v756
    %1019 = vmatpush2.bf16.msra.mxu0 %v755
    %1020 = vmatprep.mubr.bf16.mxu0 %v176
    %1021 = vmatmul.mubr.bf16.gmra.mxu0 %v175
    %v1022 = vpop.f32.mrf.mxu0
    %v1023 = vadd.f32 0.0, %v1022
    %v1024 = vpop.f32.mrf.mxu0
    %v1025 = vadd.f32 0.0, %v1024
    %v1026 = vpop.f32.mrf.mxu0
    %v1027 = vadd.f32 0.0, %v1026
    %v1028 = vpop.f32.mrf.mxu0
    %v1029 = vadd.f32 0.0, %v1028
    %1030 = vdwg.mxu0
    %1031 = vmatprep.subr.bf16.mxu0 %v750
    %1032 = vmatpush1.bf16.msra.mxu0 %v749
    %1033 = vmatprep.subr.bf16.mxu0 %v742
    %1034 = vmatpush1.bf16.msra.mxu0 %v741
    %1035 = vmatprep.subr.bf16.mxu0 %v734
    %1036 = vmatpush1.bf16.msra.mxu0 %v733
    %1037 = vmatprep.subr.bf16.mxu0 %v726
    %1038 = vmatpush1.bf16.msra.mxu0 %v725
    %1039 = vmatprep.subr.bf16.mxu0 %v718
    %1040 = vmatpush1.bf16.msra.mxu0 %v717
    %1041 = vmatprep.subr.bf16.mxu0 %v710
    %1042 = vmatpush1.bf16.msra.mxu0 %v709
    %1043 = vmatprep.subr.bf16.mxu0 %v702
    %1044 = vmatpush1.bf16.msra.mxu0 %v701
    %1045 = vmatprep.subr.bf16.mxu0 %v694
    %1046 = vmatpush1.bf16.msra.mxu0 %v693
    %1047 = vmatprep.subr.bf16.mxu0 %v814
    %1048 = vmatpush2.bf16.msra.mxu0 %v813
    %1049 = vmatprep.subr.bf16.mxu0 %v806
    %1050 = vmatpush2.bf16.msra.mxu0 %v805
    %1051 = vmatprep.subr.bf16.mxu0 %v798
    %1052 = vmatpush2.bf16.msra.mxu0 %v797
    %1053 = vmatprep.subr.bf16.mxu0 %v790
    %1054 = vmatpush2.bf16.msra.mxu0 %v789
    %1055 = vmatprep.subr.bf16.mxu0 %v782
    %1056 = vmatpush2.bf16.msra.mxu0 %v781
    %1057 = vmatprep.subr.bf16.mxu0 %v774
    %1058 = vmatpush2.bf16.msra.mxu0 %v773
    %1059 = vmatprep.subr.bf16.mxu0 %v766
    %1060 = vmatpush2.bf16.msra.mxu0 %v765
    %1061 = vmatprep.subr.bf16.mxu0 %v758
    %1062 = vmatpush2.bf16.msra.mxu0 %v757
    %1063 = vmatprep.mubr.bf16.mxu0 %v176
    %1064 = vmatmul.mubr.bf16.gmra.mxu0 %v175
    %v1065 = vpop.f32.mrf.mxu0
    %v1066 = vadd.f32 0.0, %v1065
    %v1067 = vpop.f32.mrf.mxu0
    %v1068 = vadd.f32 0.0, %v1067
    %v1069 = vpop.f32.mrf.mxu0
    %v1070 = vadd.f32 0.0, %v1069
    %v1071 = vpop.f32.mrf.mxu0
    %v1072 = vadd.f32 0.0, %v1071
    %1073 = vdwg.mxu0
    %1074 = vmatprep.subr.bf16.mxu0 %v752
    %1075 = vmatpush1.bf16.msra.mxu0 %v751
    %1076 = vmatprep.subr.bf16.mxu0 %v744
    %1077 = vmatpush1.bf16.msra.mxu0 %v743
    %1078 = vmatprep.subr.bf16.mxu0 %v736
    %1079 = vmatpush1.bf16.msra.mxu0 %v735
    %1080 = vmatprep.subr.bf16.mxu0 %v728
    %1081 = vmatpush1.bf16.msra.mxu0 %v727
    %1082 = vmatprep.subr.bf16.mxu0 %v720
    %1083 = vmatpush1.bf16.msra.mxu0 %v719
    %1084 = vmatprep.subr.bf16.mxu0 %v712
    %1085 = vmatpush1.bf16.msra.mxu0 %v711
    %1086 = vmatprep.subr.bf16.mxu0 %v704
    %1087 = vmatpush1.bf16.msra.mxu0 %v703
    %1088 = vmatprep.subr.bf16.mxu0 %v696
    %1089 = vmatpush1.bf16.msra.mxu0 %v695
    %1090 = vmatprep.subr.bf16.mxu0 %v816
    %1091 = vmatpush2.bf16.msra.mxu0 %v815
    %1092 = vmatprep.subr.bf16.mxu0 %v808
    %1093 = vmatpush2.bf16.msra.mxu0 %v807
    %1094 = vmatprep.subr.bf16.mxu0 %v800
    %1095 = vmatpush2.bf16.msra.mxu0 %v799
    %1096 = vmatprep.subr.bf16.mxu0 %v792
    %1097 = vmatpush2.bf16.msra.mxu0 %v791
    %1098 = vmatprep.subr.bf16.mxu0 %v784
    %1099 = vmatpush2.bf16.msra.mxu0 %v783
    %1100 = vmatprep.subr.bf16.mxu0 %v776
    %1101 = vmatpush2.bf16.msra.mxu0 %v775
    %1102 = vmatprep.subr.bf16.mxu0 %v768
    %1103 = vmatpush2.bf16.msra.mxu0 %v767
    %1104 = vmatprep.subr.bf16.mxu0 %v760
    %1105 = vmatpush2.bf16.msra.mxu0 %v759
    %1106 = vmatprep.mubr.bf16.mxu0 %v176
    %1107 = vmatmul.mubr.bf16.gmra.mxu0 %v175
    %v1108 = vpop.f32.mrf.mxu0
    %v1109 = vadd.f32 0.0, %v1108
    %v1110 = vpop.f32.mrf.mxu0
    %v1111 = vadd.f32 0.0, %v1110
    %v1112 = vpop.f32.mrf.mxu0
    %v1113 = vadd.f32 0.0, %v1112
    %v1114 = vpop.f32.mrf.mxu0
    %v1115 = vadd.f32 0.0, %v1114
    %1116 = vdwg.mxu0
    %v1117 = vld [vmem:[#allocation17] sm:$0xff]
    %v1118 = vpack.c.bf16 %v984, %v980
    %v1119 = vpack.c.bf16 %v986, %v982
    %v1120 = vpack.c.bf16 %v1027, %v1023
    %v1121 = vpack.c.bf16 %v1029, %v1025
    %v1122 = vpack.c.bf16 %v1070, %v1066
    %v1123 = vpack.c.bf16 %v1072, %v1068
    %v1124 = vpack.c.bf16 %v1113, %v1109
    %v1125 = vpack.c.bf16 %v1115, %v1111
    %v1127 = vlaneseq
    %v1128 = vshrl.u32 %v1127, 7
    %v1129 = vsub.s32 0, %v1128
    %v1130 = vrot.slane %v1117, %v1129
    %v1131 = vlaneseq
    %v1132 = vshrl.u32 %v1131, 7
    %v1133 = vsub.s32 1, %v1132
    %v1134 = vrot.slane %v1117, %v1133
    %v1135 = vlaneseq
    %v1136 = vshrl.u32 %v1135, 7
    %v1137 = vsub.s32 2, %v1136
    %v1138 = vrot.slane %v1117, %v1137
    %v1139 = vlaneseq
    %v1140 = vshrl.u32 %v1139, 7
    %v1141 = vsub.s32 3, %v1140
    %v1142 = vrot.slane %v1117, %v1141
    %v1143 = vlaneseq
    %v1144 = vshrl.u32 %v1143, 7
    %v1145 = vsub.s32 4, %v1144
    %v1146 = vrot.slane %v1117, %v1145
    %v1147 = vlaneseq
    %v1148 = vshrl.u32 %v1147, 7
    %v1149 = vsub.s32 5, %v1148
    %v1150 = vrot.slane %v1117, %v1149
    %v1151 = vlaneseq
    %v1152 = vshrl.u32 %v1151, 7
    %v1153 = vsub.s32 6, %v1152
    %v1154 = vrot.slane %v1117, %v1153
    %v1155 = vlaneseq
    %v1156 = vshrl.u32 %v1155, 7
    %v1157 = vsub.s32 7, %v1156
    %v1158 = vrot.slane %v1117, %v1157
    %v1167 = vpack.c.bf16 %v1130, %v1130
    %v1168 = vpack.c.bf16 %v1134, %v1134
    %v1169 = vpack.c.bf16 %v1138, %v1138
    %v1170 = vpack.c.bf16 %v1142, %v1142
    %v1171 = vpack.c.bf16 %v1146, %v1146
    %v1172 = vpack.c.bf16 %v1150, %v1150
    %v1173 = vpack.c.bf16 %v1154, %v1154
    %v1174 = vpack.c.bf16 %v1158, %v1158
    %v1176 = vpack.i.b16 %v1167, %v1167
    %v1178 = vlaneseq
    %v1179 = vshrl.u32 %v1178, 7
    %v1180 = vsub.s32 0, %v1179
    %v1181 = vrot.slane %v1176, %v1180
    %v1183 = vpack.i.b16 %v1168, %v1168
    %v1185 = vlaneseq
    %v1186 = vshrl.u32 %v1185, 7
    %v1187 = vsub.s32 0, %v1186
    %v1188 = vrot.slane %v1183, %v1187
    %v1190 = vpack.i.b16 %v1169, %v1169
    %v1192 = vlaneseq
    %v1193 = vshrl.u32 %v1192, 7
    %v1194 = vsub.s32 0, %v1193
    %v1195 = vrot.slane %v1190, %v1194
    %v1197 = vpack.i.b16 %v1170, %v1170
    %v1199 = vlaneseq
    %v1200 = vshrl.u32 %v1199, 7
    %v1201 = vsub.s32 0, %v1200
    %v1202 = vrot.slane %v1197, %v1201
    %v1204 = vpack.i.b16 %v1171, %v1171
    %v1206 = vlaneseq
    %v1207 = vshrl.u32 %v1206, 7
    %v1208 = vsub.s32 0, %v1207
    %v1209 = vrot.slane %v1204, %v1208
    %v1211 = vpack.i.b16 %v1172, %v1172
    %v1213 = vlaneseq
    %v1214 = vshrl.u32 %v1213, 7
    %v1215 = vsub.s32 0, %v1214
    %v1216 = vrot.slane %v1211, %v1215
    %v1218 = vpack.i.b16 %v1173, %v1173
    %v1220 = vlaneseq
    %v1221 = vshrl.u32 %v1220, 7
    %v1222 = vsub.s32 0, %v1221
    %v1223 = vrot.slane %v1218, %v1222
    %v1225 = vpack.i.b16 %v1174, %v1174
    %v1227 = vlaneseq
    %v1228 = vshrl.u32 %v1227, 7
    %v1229 = vsub.s32 0, %v1228
    %v1230 = vrot.slane %v1225, %v1229
    %v1231 = vadd.bf16 %v1118, %v1181
    %v1232 = vadd.bf16 %v1119, %v1188
    %v1233 = vadd.bf16 %v1120, %v1195
    %v1234 = vadd.bf16 %v1121, %v1202
    %v1235 = vadd.bf16 %v1122, %v1209
    %v1236 = vadd.bf16 %v1123, %v1216
    %v1237 = vadd.bf16 %v1124, %v1223
    %v1238 = vadd.bf16 %v1125, %v1230
    %v1239 = vmax.bf16 %v1231, 0
    %v1240 = vmax.bf16 %v1232, 0
    %v1241 = vmax.bf16 %v1233, 0
    %v1242 = vmax.bf16 %v1234, 0
    %v1243 = vmax.bf16 %v1235, 0
    %v1244 = vmax.bf16 %v1236, 0
    %v1245 = vmax.bf16 %v1237, 0
    %v1246 = vmax.bf16 %v1238, 0
    %v1247 = vld [vmem:[#allocation7] sm:$0xff]
    %v1248 = vld [vmem:[#allocation7 + $0x8] sm:$0xff]
    %v1249 = vld [vmem:[#allocation7 + $0x10] sm:$0xff]
    %v1250 = vld [vmem:[#allocation7 + $0x18] sm:$0xff]
    %v1251 = vld [vmem:[#allocation7 + $0x20] sm:$0xff]
    %v1252 = vld [vmem:[#allocation7 + $0x28] sm:$0xff]
    %v1253 = vld [vmem:[#allocation7 + $0x30] sm:$0xff]
    %v1254 = vld [vmem:[#allocation7 + $0x38] sm:$0xff]
    %v1255 = vld [vmem:[#allocation7 + $0x40] sm:$0xff]
    %v1256 = vld [vmem:[#allocation7 + $0x48] sm:$0xff]
    %v1257 = vld [vmem:[#allocation7 + $0x50] sm:$0xff]
    %v1258 = vld [vmem:[#allocation7 + $0x58] sm:$0xff]
    %v1259 = vld [vmem:[#allocation7 + $0x60] sm:$0xff]
    %v1260 = vld [vmem:[#allocation7 + $0x68] sm:$0xff]
    %v1261 = vld [vmem:[#allocation7 + $0x70] sm:$0xff]
    %v1262 = vld [vmem:[#allocation7 + $0x78] sm:$0xff]
    %v1263 = vld [vmem:[#allocation7 + $0x80] sm:$0xff]
    %v1264 = vld [vmem:[#allocation7 + $0x88] sm:$0xff]
    %v1265 = vld [vmem:[#allocation7 + $0x90] sm:$0xff]
    %v1266 = vld [vmem:[#allocation7 + $0x98] sm:$0xff]
    %v1267 = vld [vmem:[#allocation7 + $0xa0] sm:$0xff]
    %v1268 = vld [vmem:[#allocation7 + $0xa8] sm:$0xff]
    %v1269 = vld [vmem:[#allocation7 + $0xb0] sm:$0xff]
    %v1270 = vld [vmem:[#allocation7 + $0xb8] sm:$0xff]
    %v1271 = vld [vmem:[#allocation7 + $0xc0] sm:$0xff]
    %v1272 = vld [vmem:[#allocation7 + $0xc8] sm:$0xff]
    %v1273 = vld [vmem:[#allocation7 + $0xd0] sm:$0xff]
    %v1274 = vld [vmem:[#allocation7 + $0xd8] sm:$0xff]
    %v1275 = vld [vmem:[#allocation7 + $0xe0] sm:$0xff]
    %v1276 = vld [vmem:[#allocation7 + $0xe8] sm:$0xff]
    %v1277 = vld [vmem:[#allocation7 + $0xf0] sm:$0xff]
    %v1278 = vld [vmem:[#allocation7 + $0xf8] sm:$0xff]
    %v1279 = vld [vmem:[#allocation7 + $0x100] sm:$0xff]
    %v1280 = vld [vmem:[#allocation7 + $0x108] sm:$0xff]
    %v1281 = vld [vmem:[#allocation7 + $0x110] sm:$0xff]
    %v1282 = vld [vmem:[#allocation7 + $0x118] sm:$0xff]
    %v1283 = vld [vmem:[#allocation7 + $0x120] sm:$0xff]
    %v1284 = vld [vmem:[#allocation7 + $0x128] sm:$0xff]
    %v1285 = vld [vmem:[#allocation7 + $0x130] sm:$0xff]
    %v1286 = vld [vmem:[#allocation7 + $0x138] sm:$0xff]
    %v1287 = vld [vmem:[#allocation7 + $0x140] sm:$0xff]
    %v1288 = vld [vmem:[#allocation7 + $0x148] sm:$0xff]
    %v1289 = vld [vmem:[#allocation7 + $0x150] sm:$0xff]
    %v1290 = vld [vmem:[#allocation7 + $0x158] sm:$0xff]
    %v1291 = vld [vmem:[#allocation7 + $0x160] sm:$0xff]
    %v1292 = vld [vmem:[#allocation7 + $0x168] sm:$0xff]
    %v1293 = vld [vmem:[#allocation7 + $0x170] sm:$0xff]
    %v1294 = vld [vmem:[#allocation7 + $0x178] sm:$0xff]
    %v1295 = vld [vmem:[#allocation7 + $0x180] sm:$0xff]
    %v1296 = vld [vmem:[#allocation7 + $0x188] sm:$0xff]
    %v1297 = vld [vmem:[#allocation7 + $0x190] sm:$0xff]
    %v1298 = vld [vmem:[#allocation7 + $0x198] sm:$0xff]
    %v1299 = vld [vmem:[#allocation7 + $0x1a0] sm:$0xff]
    %v1300 = vld [vmem:[#allocation7 + $0x1a8] sm:$0xff]
    %v1301 = vld [vmem:[#allocation7 + $0x1b0] sm:$0xff]
    %v1302 = vld [vmem:[#allocation7 + $0x1b8] sm:$0xff]
    %v1303 = vld [vmem:[#allocation7 + $0x1c0] sm:$0xff]
    %v1304 = vld [vmem:[#allocation7 + $0x1c8] sm:$0xff]
    %v1305 = vld [vmem:[#allocation7 + $0x1d0] sm:$0xff]
    %v1306 = vld [vmem:[#allocation7 + $0x1d8] sm:$0xff]
    %v1307 = vld [vmem:[#allocation7 + $0x1e0] sm:$0xff]
    %v1308 = vld [vmem:[#allocation7 + $0x1e8] sm:$0xff]
    %v1309 = vld [vmem:[#allocation7 + $0x1f0] sm:$0xff]
    %v1310 = vld [vmem:[#allocation7 + $0x1f8] sm:$0xff]
    %v1311 = vld [vmem:[#allocation7 + $0x200] sm:$0xff]
    %v1312 = vld [vmem:[#allocation7 + $0x208] sm:$0xff]
    %v1313 = vld [vmem:[#allocation7 + $0x210] sm:$0xff]
    %v1314 = vld [vmem:[#allocation7 + $0x218] sm:$0xff]
    %v1315 = vld [vmem:[#allocation7 + $0x220] sm:$0xff]
    %v1316 = vld [vmem:[#allocation7 + $0x228] sm:$0xff]
    %v1317 = vld [vmem:[#allocation7 + $0x230] sm:$0xff]
    %v1318 = vld [vmem:[#allocation7 + $0x238] sm:$0xff]
    %v1319 = vld [vmem:[#allocation7 + $0x240] sm:$0xff]
    %v1320 = vld [vmem:[#allocation7 + $0x248] sm:$0xff]
    %v1321 = vld [vmem:[#allocation7 + $0x250] sm:$0xff]
    %v1322 = vld [vmem:[#allocation7 + $0x258] sm:$0xff]
    %v1323 = vld [vmem:[#allocation7 + $0x260] sm:$0xff]
    %v1324 = vld [vmem:[#allocation7 + $0x268] sm:$0xff]
    %v1325 = vld [vmem:[#allocation7 + $0x270] sm:$0xff]
    %v1326 = vld [vmem:[#allocation7 + $0x278] sm:$0xff]
    %v1327 = vld [vmem:[#allocation7 + $0x280] sm:$0xff]
    %v1328 = vld [vmem:[#allocation7 + $0x288] sm:$0xff]
    %v1329 = vld [vmem:[#allocation7 + $0x290] sm:$0xff]
    %v1330 = vld [vmem:[#allocation7 + $0x298] sm:$0xff]
    %v1331 = vld [vmem:[#allocation7 + $0x2a0] sm:$0xff]
    %v1332 = vld [vmem:[#allocation7 + $0x2a8] sm:$0xff]
    %v1333 = vld [vmem:[#allocation7 + $0x2b0] sm:$0xff]
    %v1334 = vld [vmem:[#allocation7 + $0x2b8] sm:$0xff]
    %v1335 = vld [vmem:[#allocation7 + $0x2c0] sm:$0xff]
    %v1336 = vld [vmem:[#allocation7 + $0x2c8] sm:$0xff]
    %v1337 = vld [vmem:[#allocation7 + $0x2d0] sm:$0xff]
    %v1338 = vld [vmem:[#allocation7 + $0x2d8] sm:$0xff]
    %v1339 = vld [vmem:[#allocation7 + $0x2e0] sm:$0xff]
    %v1340 = vld [vmem:[#allocation7 + $0x2e8] sm:$0xff]
    %v1341 = vld [vmem:[#allocation7 + $0x2f0] sm:$0xff]
    %v1342 = vld [vmem:[#allocation7 + $0x2f8] sm:$0xff]
    %v1343 = vld [vmem:[#allocation7 + $0x300] sm:$0xff]
    %v1344 = vld [vmem:[#allocation7 + $0x308] sm:$0xff]
    %v1345 = vld [vmem:[#allocation7 + $0x310] sm:$0xff]
    %v1346 = vld [vmem:[#allocation7 + $0x318] sm:$0xff]
    %v1347 = vld [vmem:[#allocation7 + $0x320] sm:$0xff]
    %v1348 = vld [vmem:[#allocation7 + $0x328] sm:$0xff]
    %v1349 = vld [vmem:[#allocation7 + $0x330] sm:$0xff]
    %v1350 = vld [vmem:[#allocation7 + $0x338] sm:$0xff]
    %v1351 = vld [vmem:[#allocation7 + $0x340] sm:$0xff]
    %v1352 = vld [vmem:[#allocation7 + $0x348] sm:$0xff]
    %v1353 = vld [vmem:[#allocation7 + $0x350] sm:$0xff]
    %v1354 = vld [vmem:[#allocation7 + $0x358] sm:$0xff]
    %v1355 = vld [vmem:[#allocation7 + $0x360] sm:$0xff]
    %v1356 = vld [vmem:[#allocation7 + $0x368] sm:$0xff]
    %v1357 = vld [vmem:[#allocation7 + $0x370] sm:$0xff]
    %v1358 = vld [vmem:[#allocation7 + $0x378] sm:$0xff]
    %v1359 = vld [vmem:[#allocation7 + $0x380] sm:$0xff]
    %v1360 = vld [vmem:[#allocation7 + $0x388] sm:$0xff]
    %v1361 = vld [vmem:[#allocation7 + $0x390] sm:$0xff]
    %v1362 = vld [vmem:[#allocation7 + $0x398] sm:$0xff]
    %v1363 = vld [vmem:[#allocation7 + $0x3a0] sm:$0xff]
    %v1364 = vld [vmem:[#allocation7 + $0x3a8] sm:$0xff]
    %v1365 = vld [vmem:[#allocation7 + $0x3b0] sm:$0xff]
    %v1366 = vld [vmem:[#allocation7 + $0x3b8] sm:$0xff]
    %v1367 = vld [vmem:[#allocation7 + $0x3c0] sm:$0xff]
    %v1368 = vld [vmem:[#allocation7 + $0x3c8] sm:$0xff]
    %v1369 = vld [vmem:[#allocation7 + $0x3d0] sm:$0xff]
    %v1370 = vld [vmem:[#allocation7 + $0x3d8] sm:$0xff]
    %v1371 = vld [vmem:[#allocation7 + $0x3e0] sm:$0xff]
    %v1372 = vld [vmem:[#allocation7 + $0x3e8] sm:$0xff]
    %v1373 = vld [vmem:[#allocation7 + $0x3f0] sm:$0xff]
    %v1374 = vld [vmem:[#allocation7 + $0x3f8] sm:$0xff]
    %v1375 = vld [vmem:[#allocation7 + $0x400] sm:$0xff]
    %v1376 = vld [vmem:[#allocation7 + $0x408] sm:$0xff]
    %v1377 = vld [vmem:[#allocation7 + $0x410] sm:$0xff]
    %v1378 = vld [vmem:[#allocation7 + $0x418] sm:$0xff]
    %v1379 = vld [vmem:[#allocation7 + $0x420] sm:$0xff]
    %v1380 = vld [vmem:[#allocation7 + $0x428] sm:$0xff]
    %v1381 = vld [vmem:[#allocation7 + $0x430] sm:$0xff]
    %v1382 = vld [vmem:[#allocation7 + $0x438] sm:$0xff]
    %v1383 = vld [vmem:[#allocation7 + $0x440] sm:$0xff]
    %v1384 = vld [vmem:[#allocation7 + $0x448] sm:$0xff]
    %v1385 = vld [vmem:[#allocation7 + $0x450] sm:$0xff]
    %v1386 = vld [vmem:[#allocation7 + $0x458] sm:$0xff]
    %v1387 = vld [vmem:[#allocation7 + $0x460] sm:$0xff]
    %v1388 = vld [vmem:[#allocation7 + $0x468] sm:$0xff]
    %v1389 = vld [vmem:[#allocation7 + $0x470] sm:$0xff]
    %v1390 = vld [vmem:[#allocation7 + $0x478] sm:$0xff]
    %v1391 = vld [vmem:[#allocation7 + $0x480] sm:$0xff]
    %v1392 = vld [vmem:[#allocation7 + $0x488] sm:$0xff]
    %v1393 = vld [vmem:[#allocation7 + $0x490] sm:$0xff]
    %v1394 = vld [vmem:[#allocation7 + $0x498] sm:$0xff]
    %v1395 = vld [vmem:[#allocation7 + $0x4a0] sm:$0xff]
    %v1396 = vld [vmem:[#allocation7 + $0x4a8] sm:$0xff]
    %v1397 = vld [vmem:[#allocation7 + $0x4b0] sm:$0xff]
    %v1398 = vld [vmem:[#allocation7 + $0x4b8] sm:$0xff]
    %v1399 = vld [vmem:[#allocation7 + $0x4c0] sm:$0xff]
    %v1400 = vld [vmem:[#allocation7 + $0x4c8] sm:$0xff]
    %v1401 = vld [vmem:[#allocation7 + $0x4d0] sm:$0xff]
    %v1402 = vld [vmem:[#allocation7 + $0x4d8] sm:$0xff]
    %v1403 = vld [vmem:[#allocation7 + $0x4e0] sm:$0xff]
    %v1404 = vld [vmem:[#allocation7 + $0x4e8] sm:$0xff]
    %v1405 = vld [vmem:[#allocation7 + $0x4f0] sm:$0xff]
    %v1406 = vld [vmem:[#allocation7 + $0x4f8] sm:$0xff]
    %v1407 = vld [vmem:[#allocation7 + $0x500] sm:$0xff]
    %v1408 = vld [vmem:[#allocation7 + $0x508] sm:$0xff]
    %v1409 = vld [vmem:[#allocation7 + $0x510] sm:$0xff]
    %v1410 = vld [vmem:[#allocation7 + $0x518] sm:$0xff]
    %v1411 = vld [vmem:[#allocation7 + $0x520] sm:$0xff]
    %v1412 = vld [vmem:[#allocation7 + $0x528] sm:$0xff]
    %v1413 = vld [vmem:[#allocation7 + $0x530] sm:$0xff]
    %v1414 = vld [vmem:[#allocation7 + $0x538] sm:$0xff]
    %v1415 = vld [vmem:[#allocation7 + $0x540] sm:$0xff]
    %v1416 = vld [vmem:[#allocation7 + $0x548] sm:$0xff]
    %v1417 = vld [vmem:[#allocation7 + $0x550] sm:$0xff]
    %v1418 = vld [vmem:[#allocation7 + $0x558] sm:$0xff]
    %v1419 = vld [vmem:[#allocation7 + $0x560] sm:$0xff]
    %v1420 = vld [vmem:[#allocation7 + $0x568] sm:$0xff]
    %v1421 = vld [vmem:[#allocation7 + $0x570] sm:$0xff]
    %v1422 = vld [vmem:[#allocation7 + $0x578] sm:$0xff]
    %v1423 = vld [vmem:[#allocation7 + $0x580] sm:$0xff]
    %v1424 = vld [vmem:[#allocation7 + $0x588] sm:$0xff]
    %v1425 = vld [vmem:[#allocation7 + $0x590] sm:$0xff]
    %v1426 = vld [vmem:[#allocation7 + $0x598] sm:$0xff]
    %v1427 = vld [vmem:[#allocation7 + $0x5a0] sm:$0xff]
    %v1428 = vld [vmem:[#allocation7 + $0x5a8] sm:$0xff]
    %v1429 = vld [vmem:[#allocation7 + $0x5b0] sm:$0xff]
    %v1430 = vld [vmem:[#allocation7 + $0x5b8] sm:$0xff]
    %v1431 = vld [vmem:[#allocation7 + $0x5c0] sm:$0xff]
    %v1432 = vld [vmem:[#allocation7 + $0x5c8] sm:$0xff]
    %v1433 = vld [vmem:[#allocation7 + $0x5d0] sm:$0xff]
    %v1434 = vld [vmem:[#allocation7 + $0x5d8] sm:$0xff]
    %v1435 = vld [vmem:[#allocation7 + $0x5e0] sm:$0xff]
    %v1436 = vld [vmem:[#allocation7 + $0x5e8] sm:$0xff]
    %v1437 = vld [vmem:[#allocation7 + $0x5f0] sm:$0xff]
    %v1438 = vld [vmem:[#allocation7 + $0x5f8] sm:$0xff]
    %v1439 = vld [vmem:[#allocation7 + $0x600] sm:$0xff]
    %v1440 = vld [vmem:[#allocation7 + $0x608] sm:$0xff]
    %v1441 = vld [vmem:[#allocation7 + $0x610] sm:$0xff]
    %v1442 = vld [vmem:[#allocation7 + $0x618] sm:$0xff]
    %v1443 = vld [vmem:[#allocation7 + $0x620] sm:$0xff]
    %v1444 = vld [vmem:[#allocation7 + $0x628] sm:$0xff]
    %v1445 = vld [vmem:[#allocation7 + $0x630] sm:$0xff]
    %v1446 = vld [vmem:[#allocation7 + $0x638] sm:$0xff]
    %v1447 = vld [vmem:[#allocation7 + $0x640] sm:$0xff]
    %v1448 = vld [vmem:[#allocation7 + $0x648] sm:$0xff]
    %v1449 = vld [vmem:[#allocation7 + $0x650] sm:$0xff]
    %v1450 = vld [vmem:[#allocation7 + $0x658] sm:$0xff]
    %v1451 = vld [vmem:[#allocation7 + $0x660] sm:$0xff]
    %v1452 = vld [vmem:[#allocation7 + $0x668] sm:$0xff]
    %v1453 = vld [vmem:[#allocation7 + $0x670] sm:$0xff]
    %v1454 = vld [vmem:[#allocation7 + $0x678] sm:$0xff]
    %v1455 = vld [vmem:[#allocation7 + $0x680] sm:$0xff]
    %v1456 = vld [vmem:[#allocation7 + $0x688] sm:$0xff]
    %v1457 = vld [vmem:[#allocation7 + $0x690] sm:$0xff]
    %v1458 = vld [vmem:[#allocation7 + $0x698] sm:$0xff]
    %v1459 = vld [vmem:[#allocation7 + $0x6a0] sm:$0xff]
    %v1460 = vld [vmem:[#allocation7 + $0x6a8] sm:$0xff]
    %v1461 = vld [vmem:[#allocation7 + $0x6b0] sm:$0xff]
    %v1462 = vld [vmem:[#allocation7 + $0x6b8] sm:$0xff]
    %v1463 = vld [vmem:[#allocation7 + $0x6c0] sm:$0xff]
    %v1464 = vld [vmem:[#allocation7 + $0x6c8] sm:$0xff]
    %v1465 = vld [vmem:[#allocation7 + $0x6d0] sm:$0xff]
    %v1466 = vld [vmem:[#allocation7 + $0x6d8] sm:$0xff]
    %v1467 = vld [vmem:[#allocation7 + $0x6e0] sm:$0xff]
    %v1468 = vld [vmem:[#allocation7 + $0x6e8] sm:$0xff]
    %v1469 = vld [vmem:[#allocation7 + $0x6f0] sm:$0xff]
    %v1470 = vld [vmem:[#allocation7 + $0x6f8] sm:$0xff]
    %v1471 = vld [vmem:[#allocation7 + $0x700] sm:$0xff]
    %v1472 = vld [vmem:[#allocation7 + $0x708] sm:$0xff]
    %v1473 = vld [vmem:[#allocation7 + $0x710] sm:$0xff]
    %v1474 = vld [vmem:[#allocation7 + $0x718] sm:$0xff]
    %v1475 = vld [vmem:[#allocation7 + $0x720] sm:$0xff]
    %v1476 = vld [vmem:[#allocation7 + $0x728] sm:$0xff]
    %v1477 = vld [vmem:[#allocation7 + $0x730] sm:$0xff]
    %v1478 = vld [vmem:[#allocation7 + $0x738] sm:$0xff]
    %v1479 = vld [vmem:[#allocation7 + $0x740] sm:$0xff]
    %v1480 = vld [vmem:[#allocation7 + $0x748] sm:$0xff]
    %v1481 = vld [vmem:[#allocation7 + $0x750] sm:$0xff]
    %v1482 = vld [vmem:[#allocation7 + $0x758] sm:$0xff]
    %v1483 = vld [vmem:[#allocation7 + $0x760] sm:$0xff]
    %v1484 = vld [vmem:[#allocation7 + $0x768] sm:$0xff]
    %v1485 = vld [vmem:[#allocation7 + $0x770] sm:$0xff]
    %v1486 = vld [vmem:[#allocation7 + $0x778] sm:$0xff]
    %v1487 = vld [vmem:[#allocation7 + $0x780] sm:$0xff]
    %v1488 = vld [vmem:[#allocation7 + $0x788] sm:$0xff]
    %v1489 = vld [vmem:[#allocation7 + $0x790] sm:$0xff]
    %v1490 = vld [vmem:[#allocation7 + $0x798] sm:$0xff]
    %v1491 = vld [vmem:[#allocation7 + $0x7a0] sm:$0xff]
    %v1492 = vld [vmem:[#allocation7 + $0x7a8] sm:$0xff]
    %v1493 = vld [vmem:[#allocation7 + $0x7b0] sm:$0xff]
    %v1494 = vld [vmem:[#allocation7 + $0x7b8] sm:$0xff]
    %v1495 = vld [vmem:[#allocation7 + $0x7c0] sm:$0xff]
    %v1496 = vld [vmem:[#allocation7 + $0x7c8] sm:$0xff]
    %v1497 = vld [vmem:[#allocation7 + $0x7d0] sm:$0xff]
    %v1498 = vld [vmem:[#allocation7 + $0x7d8] sm:$0xff]
    %v1499 = vld [vmem:[#allocation7 + $0x7e0] sm:$0xff]
    %v1500 = vld [vmem:[#allocation7 + $0x7e8] sm:$0xff]
    %v1501 = vld [vmem:[#allocation7 + $0x7f0] sm:$0xff]
    %v1502 = vld [vmem:[#allocation7 + $0x7f8] sm:$0xff]
    %v1759 = vunpack.c.l.b16 %v1247
    %v1760 = vunpack.c.h.b16 %v1247
    %v1761 = vunpack.c.l.b16 %v1248
    %v1762 = vunpack.c.h.b16 %v1248
    %v1763 = vunpack.c.l.b16 %v1249
    %v1764 = vunpack.c.h.b16 %v1249
    %v1765 = vunpack.c.l.b16 %v1250
    %v1766 = vunpack.c.h.b16 %v1250
    %v1767 = vunpack.c.l.b16 %v1251
    %v1768 = vunpack.c.h.b16 %v1251
    %v1769 = vunpack.c.l.b16 %v1252
    %v1770 = vunpack.c.h.b16 %v1252
    %v1771 = vunpack.c.l.b16 %v1253
    %v1772 = vunpack.c.h.b16 %v1253
    %v1773 = vunpack.c.l.b16 %v1254
    %v1774 = vunpack.c.h.b16 %v1254
    %v1775 = vunpack.c.l.b16 %v1255
    %v1776 = vunpack.c.h.b16 %v1255
    %v1777 = vunpack.c.l.b16 %v1256
    %v1778 = vunpack.c.h.b16 %v1256
    %v1779 = vunpack.c.l.b16 %v1257
    %v1780 = vunpack.c.h.b16 %v1257
    %v1781 = vunpack.c.l.b16 %v1258
    %v1782 = vunpack.c.h.b16 %v1258
    %v1783 = vunpack.c.l.b16 %v1259
    %v1784 = vunpack.c.h.b16 %v1259
    %v1785 = vunpack.c.l.b16 %v1260
    %v1786 = vunpack.c.h.b16 %v1260
    %v1787 = vunpack.c.l.b16 %v1261
    %v1788 = vunpack.c.h.b16 %v1261
    %v1789 = vunpack.c.l.b16 %v1262
    %v1790 = vunpack.c.h.b16 %v1262
    %v1791 = vunpack.c.l.b16 %v1263
    %v1792 = vunpack.c.h.b16 %v1263
    %v1793 = vunpack.c.l.b16 %v1264
    %v1794 = vunpack.c.h.b16 %v1264
    %v1795 = vunpack.c.l.b16 %v1265
    %v1796 = vunpack.c.h.b16 %v1265
    %v1797 = vunpack.c.l.b16 %v1266
    %v1798 = vunpack.c.h.b16 %v1266
    %v1799 = vunpack.c.l.b16 %v1267
    %v1800 = vunpack.c.h.b16 %v1267
    %v1801 = vunpack.c.l.b16 %v1268
    %v1802 = vunpack.c.h.b16 %v1268
    %v1803 = vunpack.c.l.b16 %v1269
    %v1804 = vunpack.c.h.b16 %v1269
    %v1805 = vunpack.c.l.b16 %v1270
    %v1806 = vunpack.c.h.b16 %v1270
    %v1807 = vunpack.c.l.b16 %v1271
    %v1808 = vunpack.c.h.b16 %v1271
    %v1809 = vunpack.c.l.b16 %v1272
    %v1810 = vunpack.c.h.b16 %v1272
    %v1811 = vunpack.c.l.b16 %v1273
    %v1812 = vunpack.c.h.b16 %v1273
    %v1813 = vunpack.c.l.b16 %v1274
    %v1814 = vunpack.c.h.b16 %v1274
    %v1815 = vunpack.c.l.b16 %v1275
    %v1816 = vunpack.c.h.b16 %v1275
    %v1817 = vunpack.c.l.b16 %v1276
    %v1818 = vunpack.c.h.b16 %v1276
    %v1819 = vunpack.c.l.b16 %v1277
    %v1820 = vunpack.c.h.b16 %v1277
    %v1821 = vunpack.c.l.b16 %v1278
    %v1822 = vunpack.c.h.b16 %v1278
    %v1823 = vunpack.c.l.b16 %v1279
    %v1824 = vunpack.c.h.b16 %v1279
    %v1825 = vunpack.c.l.b16 %v1280
    %v1826 = vunpack.c.h.b16 %v1280
    %v1827 = vunpack.c.l.b16 %v1281
    %v1828 = vunpack.c.h.b16 %v1281
    %v1829 = vunpack.c.l.b16 %v1282
    %v1830 = vunpack.c.h.b16 %v1282
    %v1831 = vunpack.c.l.b16 %v1283
    %v1832 = vunpack.c.h.b16 %v1283
    %v1833 = vunpack.c.l.b16 %v1284
    %v1834 = vunpack.c.h.b16 %v1284
    %v1835 = vunpack.c.l.b16 %v1285
    %v1836 = vunpack.c.h.b16 %v1285
    %v1837 = vunpack.c.l.b16 %v1286
    %v1838 = vunpack.c.h.b16 %v1286
    %v1839 = vunpack.c.l.b16 %v1287
    %v1840 = vunpack.c.h.b16 %v1287
    %v1841 = vunpack.c.l.b16 %v1288
    %v1842 = vunpack.c.h.b16 %v1288
    %v1843 = vunpack.c.l.b16 %v1289
    %v1844 = vunpack.c.h.b16 %v1289
    %v1845 = vunpack.c.l.b16 %v1290
    %v1846 = vunpack.c.h.b16 %v1290
    %v1847 = vunpack.c.l.b16 %v1291
    %v1848 = vunpack.c.h.b16 %v1291
    %v1849 = vunpack.c.l.b16 %v1292
    %v1850 = vunpack.c.h.b16 %v1292
    %v1851 = vunpack.c.l.b16 %v1293
    %v1852 = vunpack.c.h.b16 %v1293
    %v1853 = vunpack.c.l.b16 %v1294
    %v1854 = vunpack.c.h.b16 %v1294
    %v1855 = vunpack.c.l.b16 %v1295
    %v1856 = vunpack.c.h.b16 %v1295
    %v1857 = vunpack.c.l.b16 %v1296
    %v1858 = vunpack.c.h.b16 %v1296
    %v1859 = vunpack.c.l.b16 %v1297
    %v1860 = vunpack.c.h.b16 %v1297
    %v1861 = vunpack.c.l.b16 %v1298
    %v1862 = vunpack.c.h.b16 %v1298
    %v1863 = vunpack.c.l.b16 %v1299
    %v1864 = vunpack.c.h.b16 %v1299
    %v1865 = vunpack.c.l.b16 %v1300
    %v1866 = vunpack.c.h.b16 %v1300
    %v1867 = vunpack.c.l.b16 %v1301
    %v1868 = vunpack.c.h.b16 %v1301
    %v1869 = vunpack.c.l.b16 %v1302
    %v1870 = vunpack.c.h.b16 %v1302
    %v1871 = vunpack.c.l.b16 %v1303
    %v1872 = vunpack.c.h.b16 %v1303
    %v1873 = vunpack.c.l.b16 %v1304
    %v1874 = vunpack.c.h.b16 %v1304
    %v1875 = vunpack.c.l.b16 %v1305
    %v1876 = vunpack.c.h.b16 %v1305
    %v1877 = vunpack.c.l.b16 %v1306
    %v1878 = vunpack.c.h.b16 %v1306
    %v1879 = vunpack.c.l.b16 %v1307
    %v1880 = vunpack.c.h.b16 %v1307
    %v1881 = vunpack.c.l.b16 %v1308
    %v1882 = vunpack.c.h.b16 %v1308
    %v1883 = vunpack.c.l.b16 %v1309
    %v1884 = vunpack.c.h.b16 %v1309
    %v1885 = vunpack.c.l.b16 %v1310
    %v1886 = vunpack.c.h.b16 %v1310
    %v1887 = vunpack.c.l.b16 %v1311
    %v1888 = vunpack.c.h.b16 %v1311
    %v1889 = vunpack.c.l.b16 %v1312
    %v1890 = vunpack.c.h.b16 %v1312
    %v1891 = vunpack.c.l.b16 %v1313
    %v1892 = vunpack.c.h.b16 %v1313
    %v1893 = vunpack.c.l.b16 %v1314
    %v1894 = vunpack.c.h.b16 %v1314
    %v1895 = vunpack.c.l.b16 %v1315
    %v1896 = vunpack.c.h.b16 %v1315
    %v1897 = vunpack.c.l.b16 %v1316
    %v1898 = vunpack.c.h.b16 %v1316
    %v1899 = vunpack.c.l.b16 %v1317
    %v1900 = vunpack.c.h.b16 %v1317
    %v1901 = vunpack.c.l.b16 %v1318
    %v1902 = vunpack.c.h.b16 %v1318
    %v1903 = vunpack.c.l.b16 %v1319
    %v1904 = vunpack.c.h.b16 %v1319
    %v1905 = vunpack.c.l.b16 %v1320
    %v1906 = vunpack.c.h.b16 %v1320
    %v1907 = vunpack.c.l.b16 %v1321
    %v1908 = vunpack.c.h.b16 %v1321
    %v1909 = vunpack.c.l.b16 %v1322
    %v1910 = vunpack.c.h.b16 %v1322
    %v1911 = vunpack.c.l.b16 %v1323
    %v1912 = vunpack.c.h.b16 %v1323
    %v1913 = vunpack.c.l.b16 %v1324
    %v1914 = vunpack.c.h.b16 %v1324
    %v1915 = vunpack.c.l.b16 %v1325
    %v1916 = vunpack.c.h.b16 %v1325
    %v1917 = vunpack.c.l.b16 %v1326
    %v1918 = vunpack.c.h.b16 %v1326
    %v1919 = vunpack.c.l.b16 %v1327
    %v1920 = vunpack.c.h.b16 %v1327
    %v1921 = vunpack.c.l.b16 %v1328
    %v1922 = vunpack.c.h.b16 %v1328
    %v1923 = vunpack.c.l.b16 %v1329
    %v1924 = vunpack.c.h.b16 %v1329
    %v1925 = vunpack.c.l.b16 %v1330
    %v1926 = vunpack.c.h.b16 %v1330
    %v1927 = vunpack.c.l.b16 %v1331
    %v1928 = vunpack.c.h.b16 %v1331
    %v1929 = vunpack.c.l.b16 %v1332
    %v1930 = vunpack.c.h.b16 %v1332
    %v1931 = vunpack.c.l.b16 %v1333
    %v1932 = vunpack.c.h.b16 %v1333
    %v1933 = vunpack.c.l.b16 %v1334
    %v1934 = vunpack.c.h.b16 %v1334
    %v1935 = vunpack.c.l.b16 %v1335
    %v1936 = vunpack.c.h.b16 %v1335
    %v1937 = vunpack.c.l.b16 %v1336
    %v1938 = vunpack.c.h.b16 %v1336
    %v1939 = vunpack.c.l.b16 %v1337
    %v1940 = vunpack.c.h.b16 %v1337
    %v1941 = vunpack.c.l.b16 %v1338
    %v1942 = vunpack.c.h.b16 %v1338
    %v1943 = vunpack.c.l.b16 %v1339
    %v1944 = vunpack.c.h.b16 %v1339
    %v1945 = vunpack.c.l.b16 %v1340
    %v1946 = vunpack.c.h.b16 %v1340
    %v1947 = vunpack.c.l.b16 %v1341
    %v1948 = vunpack.c.h.b16 %v1341
    %v1949 = vunpack.c.l.b16 %v1342
    %v1950 = vunpack.c.h.b16 %v1342
    %v1951 = vunpack.c.l.b16 %v1343
    %v1952 = vunpack.c.h.b16 %v1343
    %v1953 = vunpack.c.l.b16 %v1344
    %v1954 = vunpack.c.h.b16 %v1344
    %v1955 = vunpack.c.l.b16 %v1345
    %v1956 = vunpack.c.h.b16 %v1345
    %v1957 = vunpack.c.l.b16 %v1346
    %v1958 = vunpack.c.h.b16 %v1346
    %v1959 = vunpack.c.l.b16 %v1347
    %v1960 = vunpack.c.h.b16 %v1347
    %v1961 = vunpack.c.l.b16 %v1348
    %v1962 = vunpack.c.h.b16 %v1348
    %v1963 = vunpack.c.l.b16 %v1349
    %v1964 = vunpack.c.h.b16 %v1349
    %v1965 = vunpack.c.l.b16 %v1350
    %v1966 = vunpack.c.h.b16 %v1350
    %v1967 = vunpack.c.l.b16 %v1351
    %v1968 = vunpack.c.h.b16 %v1351
    %v1969 = vunpack.c.l.b16 %v1352
    %v1970 = vunpack.c.h.b16 %v1352
    %v1971 = vunpack.c.l.b16 %v1353
    %v1972 = vunpack.c.h.b16 %v1353
    %v1973 = vunpack.c.l.b16 %v1354
    %v1974 = vunpack.c.h.b16 %v1354
    %v1975 = vunpack.c.l.b16 %v1355
    %v1976 = vunpack.c.h.b16 %v1355
    %v1977 = vunpack.c.l.b16 %v1356
    %v1978 = vunpack.c.h.b16 %v1356
    %v1979 = vunpack.c.l.b16 %v1357
    %v1980 = vunpack.c.h.b16 %v1357
    %v1981 = vunpack.c.l.b16 %v1358
    %v1982 = vunpack.c.h.b16 %v1358
    %v1983 = vunpack.c.l.b16 %v1359
    %v1984 = vunpack.c.h.b16 %v1359
    %v1985 = vunpack.c.l.b16 %v1360
    %v1986 = vunpack.c.h.b16 %v1360
    %v1987 = vunpack.c.l.b16 %v1361
    %v1988 = vunpack.c.h.b16 %v1361
    %v1989 = vunpack.c.l.b16 %v1362
    %v1990 = vunpack.c.h.b16 %v1362
    %v1991 = vunpack.c.l.b16 %v1363
    %v1992 = vunpack.c.h.b16 %v1363
    %v1993 = vunpack.c.l.b16 %v1364
    %v1994 = vunpack.c.h.b16 %v1364
    %v1995 = vunpack.c.l.b16 %v1365
    %v1996 = vunpack.c.h.b16 %v1365
    %v1997 = vunpack.c.l.b16 %v1366
    %v1998 = vunpack.c.h.b16 %v1366
    %v1999 = vunpack.c.l.b16 %v1367
    %v2000 = vunpack.c.h.b16 %v1367
    %v2001 = vunpack.c.l.b16 %v1368
    %v2002 = vunpack.c.h.b16 %v1368
    %v2003 = vunpack.c.l.b16 %v1369
    %v2004 = vunpack.c.h.b16 %v1369
    %v2005 = vunpack.c.l.b16 %v1370
    %v2006 = vunpack.c.h.b16 %v1370
    %v2007 = vunpack.c.l.b16 %v1371
    %v2008 = vunpack.c.h.b16 %v1371
    %v2009 = vunpack.c.l.b16 %v1372
    %v2010 = vunpack.c.h.b16 %v1372
    %v2011 = vunpack.c.l.b16 %v1373
    %v2012 = vunpack.c.h.b16 %v1373
    %v2013 = vunpack.c.l.b16 %v1374
    %v2014 = vunpack.c.h.b16 %v1374
    %v2015 = vunpack.c.l.b16 %v1375
    %v2016 = vunpack.c.h.b16 %v1375
    %v2017 = vunpack.c.l.b16 %v1376
    %v2018 = vunpack.c.h.b16 %v1376
    %v2019 = vunpack.c.l.b16 %v1377
    %v2020 = vunpack.c.h.b16 %v1377
    %v2021 = vunpack.c.l.b16 %v1378
    %v2022 = vunpack.c.h.b16 %v1378
    %v2023 = vunpack.c.l.b16 %v1379
    %v2024 = vunpack.c.h.b16 %v1379
    %v2025 = vunpack.c.l.b16 %v1380
    %v2026 = vunpack.c.h.b16 %v1380
    %v2027 = vunpack.c.l.b16 %v1381
    %v2028 = vunpack.c.h.b16 %v1381
    %v2029 = vunpack.c.l.b16 %v1382
    %v2030 = vunpack.c.h.b16 %v1382
    %v2031 = vunpack.c.l.b16 %v1383
    %v2032 = vunpack.c.h.b16 %v1383
    %v2033 = vunpack.c.l.b16 %v1384
    %v2034 = vunpack.c.h.b16 %v1384
    %v2035 = vunpack.c.l.b16 %v1385
    %v2036 = vunpack.c.h.b16 %v1385
    %v2037 = vunpack.c.l.b16 %v1386
    %v2038 = vunpack.c.h.b16 %v1386
    %v2039 = vunpack.c.l.b16 %v1387
    %v2040 = vunpack.c.h.b16 %v1387
    %v2041 = vunpack.c.l.b16 %v1388
    %v2042 = vunpack.c.h.b16 %v1388
    %v2043 = vunpack.c.l.b16 %v1389
    %v2044 = vunpack.c.h.b16 %v1389
    %v2045 = vunpack.c.l.b16 %v1390
    %v2046 = vunpack.c.h.b16 %v1390
    %v2047 = vunpack.c.l.b16 %v1391
    %v2048 = vunpack.c.h.b16 %v1391
    %v2049 = vunpack.c.l.b16 %v1392
    %v2050 = vunpack.c.h.b16 %v1392
    %v2051 = vunpack.c.l.b16 %v1393
    %v2052 = vunpack.c.h.b16 %v1393
    %v2053 = vunpack.c.l.b16 %v1394
    %v2054 = vunpack.c.h.b16 %v1394
    %v2055 = vunpack.c.l.b16 %v1395
    %v2056 = vunpack.c.h.b16 %v1395
    %v2057 = vunpack.c.l.b16 %v1396
    %v2058 = vunpack.c.h.b16 %v1396
    %v2059 = vunpack.c.l.b16 %v1397
    %v2060 = vunpack.c.h.b16 %v1397
    %v2061 = vunpack.c.l.b16 %v1398
    %v2062 = vunpack.c.h.b16 %v1398
    %v2063 = vunpack.c.l.b16 %v1399
    %v2064 = vunpack.c.h.b16 %v1399
    %v2065 = vunpack.c.l.b16 %v1400
    %v2066 = vunpack.c.h.b16 %v1400
    %v2067 = vunpack.c.l.b16 %v1401
    %v2068 = vunpack.c.h.b16 %v1401
    %v2069 = vunpack.c.l.b16 %v1402
    %v2070 = vunpack.c.h.b16 %v1402
    %v2071 = vunpack.c.l.b16 %v1403
    %v2072 = vunpack.c.h.b16 %v1403
    %v2073 = vunpack.c.l.b16 %v1404
    %v2074 = vunpack.c.h.b16 %v1404
    %v2075 = vunpack.c.l.b16 %v1405
    %v2076 = vunpack.c.h.b16 %v1405
    %v2077 = vunpack.c.l.b16 %v1406
    %v2078 = vunpack.c.h.b16 %v1406
    %v2079 = vunpack.c.l.b16 %v1407
    %v2080 = vunpack.c.h.b16 %v1407
    %v2081 = vunpack.c.l.b16 %v1408
    %v2082 = vunpack.c.h.b16 %v1408
    %v2083 = vunpack.c.l.b16 %v1409
    %v2084 = vunpack.c.h.b16 %v1409
    %v2085 = vunpack.c.l.b16 %v1410
    %v2086 = vunpack.c.h.b16 %v1410
    %v2087 = vunpack.c.l.b16 %v1411
    %v2088 = vunpack.c.h.b16 %v1411
    %v2089 = vunpack.c.l.b16 %v1412
    %v2090 = vunpack.c.h.b16 %v1412
    %v2091 = vunpack.c.l.b16 %v1413
    %v2092 = vunpack.c.h.b16 %v1413
    %v2093 = vunpack.c.l.b16 %v1414
    %v2094 = vunpack.c.h.b16 %v1414
    %v2095 = vunpack.c.l.b16 %v1415
    %v2096 = vunpack.c.h.b16 %v1415
    %v2097 = vunpack.c.l.b16 %v1416
    %v2098 = vunpack.c.h.b16 %v1416
    %v2099 = vunpack.c.l.b16 %v1417
    %v2100 = vunpack.c.h.b16 %v1417
    %v2101 = vunpack.c.l.b16 %v1418
    %v2102 = vunpack.c.h.b16 %v1418
    %v2103 = vunpack.c.l.b16 %v1419
    %v2104 = vunpack.c.h.b16 %v1419
    %v2105 = vunpack.c.l.b16 %v1420
    %v2106 = vunpack.c.h.b16 %v1420
    %v2107 = vunpack.c.l.b16 %v1421
    %v2108 = vunpack.c.h.b16 %v1421
    %v2109 = vunpack.c.l.b16 %v1422
    %v2110 = vunpack.c.h.b16 %v1422
    %v2111 = vunpack.c.l.b16 %v1423
    %v2112 = vunpack.c.h.b16 %v1423
    %v2113 = vunpack.c.l.b16 %v1424
    %v2114 = vunpack.c.h.b16 %v1424
    %v2115 = vunpack.c.l.b16 %v1425
    %v2116 = vunpack.c.h.b16 %v1425
    %v2117 = vunpack.c.l.b16 %v1426
    %v2118 = vunpack.c.h.b16 %v1426
    %v2119 = vunpack.c.l.b16 %v1427
    %v2120 = vunpack.c.h.b16 %v1427
    %v2121 = vunpack.c.l.b16 %v1428
    %v2122 = vunpack.c.h.b16 %v1428
    %v2123 = vunpack.c.l.b16 %v1429
    %v2124 = vunpack.c.h.b16 %v1429
    %v2125 = vunpack.c.l.b16 %v1430
    %v2126 = vunpack.c.h.b16 %v1430
    %v2127 = vunpack.c.l.b16 %v1431
    %v2128 = vunpack.c.h.b16 %v1431
    %v2129 = vunpack.c.l.b16 %v1432
    %v2130 = vunpack.c.h.b16 %v1432
    %v2131 = vunpack.c.l.b16 %v1433
    %v2132 = vunpack.c.h.b16 %v1433
    %v2133 = vunpack.c.l.b16 %v1434
    %v2134 = vunpack.c.h.b16 %v1434
    %v2135 = vunpack.c.l.b16 %v1435
    %v2136 = vunpack.c.h.b16 %v1435
    %v2137 = vunpack.c.l.b16 %v1436
    %v2138 = vunpack.c.h.b16 %v1436
    %v2139 = vunpack.c.l.b16 %v1437
    %v2140 = vunpack.c.h.b16 %v1437
    %v2141 = vunpack.c.l.b16 %v1438
    %v2142 = vunpack.c.h.b16 %v1438
    %v2143 = vunpack.c.l.b16 %v1439
    %v2144 = vunpack.c.h.b16 %v1439
    %v2145 = vunpack.c.l.b16 %v1440
    %v2146 = vunpack.c.h.b16 %v1440
    %v2147 = vunpack.c.l.b16 %v1441
    %v2148 = vunpack.c.h.b16 %v1441
    %v2149 = vunpack.c.l.b16 %v1442
    %v2150 = vunpack.c.h.b16 %v1442
    %v2151 = vunpack.c.l.b16 %v1443
    %v2152 = vunpack.c.h.b16 %v1443
    %v2153 = vunpack.c.l.b16 %v1444
    %v2154 = vunpack.c.h.b16 %v1444
    %v2155 = vunpack.c.l.b16 %v1445
    %v2156 = vunpack.c.h.b16 %v1445
    %v2157 = vunpack.c.l.b16 %v1446
    %v2158 = vunpack.c.h.b16 %v1446
    %v2159 = vunpack.c.l.b16 %v1447
    %v2160 = vunpack.c.h.b16 %v1447
    %v2161 = vunpack.c.l.b16 %v1448
    %v2162 = vunpack.c.h.b16 %v1448
    %v2163 = vunpack.c.l.b16 %v1449
    %v2164 = vunpack.c.h.b16 %v1449
    %v2165 = vunpack.c.l.b16 %v1450
    %v2166 = vunpack.c.h.b16 %v1450
    %v2167 = vunpack.c.l.b16 %v1451
    %v2168 = vunpack.c.h.b16 %v1451
    %v2169 = vunpack.c.l.b16 %v1452
    %v2170 = vunpack.c.h.b16 %v1452
    %v2171 = vunpack.c.l.b16 %v1453
    %v2172 = vunpack.c.h.b16 %v1453
    %v2173 = vunpack.c.l.b16 %v1454
    %v2174 = vunpack.c.h.b16 %v1454
    %v2175 = vunpack.c.l.b16 %v1455
    %v2176 = vunpack.c.h.b16 %v1455
    %v2177 = vunpack.c.l.b16 %v1456
    %v2178 = vunpack.c.h.b16 %v1456
    %v2179 = vunpack.c.l.b16 %v1457
    %v2180 = vunpack.c.h.b16 %v1457
    %v2181 = vunpack.c.l.b16 %v1458
    %v2182 = vunpack.c.h.b16 %v1458
    %v2183 = vunpack.c.l.b16 %v1459
    %v2184 = vunpack.c.h.b16 %v1459
    %v2185 = vunpack.c.l.b16 %v1460
    %v2186 = vunpack.c.h.b16 %v1460
    %v2187 = vunpack.c.l.b16 %v1461
    %v2188 = vunpack.c.h.b16 %v1461
    %v2189 = vunpack.c.l.b16 %v1462
    %v2190 = vunpack.c.h.b16 %v1462
    %v2191 = vunpack.c.l.b16 %v1463
    %v2192 = vunpack.c.h.b16 %v1463
    %v2193 = vunpack.c.l.b16 %v1464
    %v2194 = vunpack.c.h.b16 %v1464
    %v2195 = vunpack.c.l.b16 %v1465
    %v2196 = vunpack.c.h.b16 %v1465
    %v2197 = vunpack.c.l.b16 %v1466
    %v2198 = vunpack.c.h.b16 %v1466
    %v2199 = vunpack.c.l.b16 %v1467
    %v2200 = vunpack.c.h.b16 %v1467
    %v2201 = vunpack.c.l.b16 %v1468
    %v2202 = vunpack.c.h.b16 %v1468
    %v2203 = vunpack.c.l.b16 %v1469
    %v2204 = vunpack.c.h.b16 %v1469
    %v2205 = vunpack.c.l.b16 %v1470
    %v2206 = vunpack.c.h.b16 %v1470
    %v2207 = vunpack.c.l.b16 %v1471
    %v2208 = vunpack.c.h.b16 %v1471
    %v2209 = vunpack.c.l.b16 %v1472
    %v2210 = vunpack.c.h.b16 %v1472
    %v2211 = vunpack.c.l.b16 %v1473
    %v2212 = vunpack.c.h.b16 %v1473
    %v2213 = vunpack.c.l.b16 %v1474
    %v2214 = vunpack.c.h.b16 %v1474
    %v2215 = vunpack.c.l.b16 %v1475
    %v2216 = vunpack.c.h.b16 %v1475
    %v2217 = vunpack.c.l.b16 %v1476
    %v2218 = vunpack.c.h.b16 %v1476
    %v2219 = vunpack.c.l.b16 %v1477
    %v2220 = vunpack.c.h.b16 %v1477
    %v2221 = vunpack.c.l.b16 %v1478
    %v2222 = vunpack.c.h.b16 %v1478
    %v2223 = vunpack.c.l.b16 %v1479
    %v2224 = vunpack.c.h.b16 %v1479
    %v2225 = vunpack.c.l.b16 %v1480
    %v2226 = vunpack.c.h.b16 %v1480
    %v2227 = vunpack.c.l.b16 %v1481
    %v2228 = vunpack.c.h.b16 %v1481
    %v2229 = vunpack.c.l.b16 %v1482
    %v2230 = vunpack.c.h.b16 %v1482
    %v2231 = vunpack.c.l.b16 %v1483
    %v2232 = vunpack.c.h.b16 %v1483
    %v2233 = vunpack.c.l.b16 %v1484
    %v2234 = vunpack.c.h.b16 %v1484
    %v2235 = vunpack.c.l.b16 %v1485
    %v2236 = vunpack.c.h.b16 %v1485
    %v2237 = vunpack.c.l.b16 %v1486
    %v2238 = vunpack.c.h.b16 %v1486
    %v2239 = vunpack.c.l.b16 %v1487
    %v2240 = vunpack.c.h.b16 %v1487
    %v2241 = vunpack.c.l.b16 %v1488
    %v2242 = vunpack.c.h.b16 %v1488
    %v2243 = vunpack.c.l.b16 %v1489
    %v2244 = vunpack.c.h.b16 %v1489
    %v2245 = vunpack.c.l.b16 %v1490
    %v2246 = vunpack.c.h.b16 %v1490
    %v2247 = vunpack.c.l.b16 %v1491
    %v2248 = vunpack.c.h.b16 %v1491
    %v2249 = vunpack.c.l.b16 %v1492
    %v2250 = vunpack.c.h.b16 %v1492
    %v2251 = vunpack.c.l.b16 %v1493
    %v2252 = vunpack.c.h.b16 %v1493
    %v2253 = vunpack.c.l.b16 %v1494
    %v2254 = vunpack.c.h.b16 %v1494
    %v2255 = vunpack.c.l.b16 %v1495
    %v2256 = vunpack.c.h.b16 %v1495
    %v2257 = vunpack.c.l.b16 %v1496
    %v2258 = vunpack.c.h.b16 %v1496
    %v2259 = vunpack.c.l.b16 %v1497
    %v2260 = vunpack.c.h.b16 %v1497
    %v2261 = vunpack.c.l.b16 %v1498
    %v2262 = vunpack.c.h.b16 %v1498
    %v2263 = vunpack.c.l.b16 %v1499
    %v2264 = vunpack.c.h.b16 %v1499
    %v2265 = vunpack.c.l.b16 %v1500
    %v2266 = vunpack.c.h.b16 %v1500
    %v2267 = vunpack.c.l.b16 %v1501
    %v2268 = vunpack.c.h.b16 %v1501
    %v2269 = vunpack.c.l.b16 %v1502
    %v2270 = vunpack.c.h.b16 %v1502
    %v2271 = vpack.c.b16 %v1763, %v1759
    %v2272 = vpack.c.b16 %v1764, %v1760
    %v2273 = vpack.c.b16 %v1765, %v1761
    %v2274 = vpack.c.b16 %v1766, %v1762
    %v2275 = vpack.c.b16 %v1771, %v1767
    %v2276 = vpack.c.b16 %v1772, %v1768
    %v2277 = vpack.c.b16 %v1773, %v1769
    %v2278 = vpack.c.b16 %v1774, %v1770
    %v2279 = vpack.c.b16 %v1779, %v1775
    %v2280 = vpack.c.b16 %v1780, %v1776
    %v2281 = vpack.c.b16 %v1781, %v1777
    %v2282 = vpack.c.b16 %v1782, %v1778
    %v2283 = vpack.c.b16 %v1787, %v1783
    %v2284 = vpack.c.b16 %v1788, %v1784
    %v2285 = vpack.c.b16 %v1789, %v1785
    %v2286 = vpack.c.b16 %v1790, %v1786
    %v2287 = vpack.c.b16 %v1795, %v1791
    %v2288 = vpack.c.b16 %v1796, %v1792
    %v2289 = vpack.c.b16 %v1797, %v1793
    %v2290 = vpack.c.b16 %v1798, %v1794
    %v2291 = vpack.c.b16 %v1803, %v1799
    %v2292 = vpack.c.b16 %v1804, %v1800
    %v2293 = vpack.c.b16 %v1805, %v1801
    %v2294 = vpack.c.b16 %v1806, %v1802
    %v2295 = vpack.c.b16 %v1811, %v1807
    %v2296 = vpack.c.b16 %v1812, %v1808
    %v2297 = vpack.c.b16 %v1813, %v1809
    %v2298 = vpack.c.b16 %v1814, %v1810
    %v2299 = vpack.c.b16 %v1819, %v1815
    %v2300 = vpack.c.b16 %v1820, %v1816
    %v2301 = vpack.c.b16 %v1821, %v1817
    %v2302 = vpack.c.b16 %v1822, %v1818
    %v2303 = vpack.c.b16 %v1827, %v1823
    %v2304 = vpack.c.b16 %v1828, %v1824
    %v2305 = vpack.c.b16 %v1829, %v1825
    %v2306 = vpack.c.b16 %v1830, %v1826
    %v2307 = vpack.c.b16 %v1835, %v1831
    %v2308 = vpack.c.b16 %v1836, %v1832
    %v2309 = vpack.c.b16 %v1837, %v1833
    %v2310 = vpack.c.b16 %v1838, %v1834
    %v2311 = vpack.c.b16 %v1843, %v1839
    %v2312 = vpack.c.b16 %v1844, %v1840
    %v2313 = vpack.c.b16 %v1845, %v1841
    %v2314 = vpack.c.b16 %v1846, %v1842
    %v2315 = vpack.c.b16 %v1851, %v1847
    %v2316 = vpack.c.b16 %v1852, %v1848
    %v2317 = vpack.c.b16 %v1853, %v1849
    %v2318 = vpack.c.b16 %v1854, %v1850
    %v2319 = vpack.c.b16 %v1859, %v1855
    %v2320 = vpack.c.b16 %v1860, %v1856
    %v2321 = vpack.c.b16 %v1861, %v1857
    %v2322 = vpack.c.b16 %v1862, %v1858
    %v2323 = vpack.c.b16 %v1867, %v1863
    %v2324 = vpack.c.b16 %v1868, %v1864
    %v2325 = vpack.c.b16 %v1869, %v1865
    %v2326 = vpack.c.b16 %v1870, %v1866
    %v2327 = vpack.c.b16 %v1875, %v1871
    %v2328 = vpack.c.b16 %v1876, %v1872
    %v2329 = vpack.c.b16 %v1877, %v1873
    %v2330 = vpack.c.b16 %v1878, %v1874
    %v2331 = vpack.c.b16 %v1883, %v1879
    %v2332 = vpack.c.b16 %v1884, %v1880
    %v2333 = vpack.c.b16 %v1885, %v1881
    %v2334 = vpack.c.b16 %v1886, %v1882
    %v2335 = vpack.c.b16 %v1891, %v1887
    %v2336 = vpack.c.b16 %v1892, %v1888
    %v2337 = vpack.c.b16 %v1893, %v1889
    %v2338 = vpack.c.b16 %v1894, %v1890
    %v2339 = vpack.c.b16 %v1899, %v1895
    %v2340 = vpack.c.b16 %v1900, %v1896
    %v2341 = vpack.c.b16 %v1901, %v1897
    %v2342 = vpack.c.b16 %v1902, %v1898
    %v2343 = vpack.c.b16 %v1907, %v1903
    %v2344 = vpack.c.b16 %v1908, %v1904
    %v2345 = vpack.c.b16 %v1909, %v1905
    %v2346 = vpack.c.b16 %v1910, %v1906
    %v2347 = vpack.c.b16 %v1915, %v1911
    %v2348 = vpack.c.b16 %v1916, %v1912
    %v2349 = vpack.c.b16 %v1917, %v1913
    %v2350 = vpack.c.b16 %v1918, %v1914
    %v2351 = vpack.c.b16 %v1923, %v1919
    %v2352 = vpack.c.b16 %v1924, %v1920
    %v2353 = vpack.c.b16 %v1925, %v1921
    %v2354 = vpack.c.b16 %v1926, %v1922
    %v2355 = vpack.c.b16 %v1931, %v1927
    %v2356 = vpack.c.b16 %v1932, %v1928
    %v2357 = vpack.c.b16 %v1933, %v1929
    %v2358 = vpack.c.b16 %v1934, %v1930
    %v2359 = vpack.c.b16 %v1939, %v1935
    %v2360 = vpack.c.b16 %v1940, %v1936
    %v2361 = vpack.c.b16 %v1941, %v1937
    %v2362 = vpack.c.b16 %v1942, %v1938
    %v2363 = vpack.c.b16 %v1947, %v1943
    %v2364 = vpack.c.b16 %v1948, %v1944
    %v2365 = vpack.c.b16 %v1949, %v1945
    %v2366 = vpack.c.b16 %v1950, %v1946
    %v2367 = vpack.c.b16 %v1955, %v1951
    %v2368 = vpack.c.b16 %v1956, %v1952
    %v2369 = vpack.c.b16 %v1957, %v1953
    %v2370 = vpack.c.b16 %v1958, %v1954
    %v2371 = vpack.c.b16 %v1963, %v1959
    %v2372 = vpack.c.b16 %v1964, %v1960
    %v2373 = vpack.c.b16 %v1965, %v1961
    %v2374 = vpack.c.b16 %v1966, %v1962
    %v2375 = vpack.c.b16 %v1971, %v1967
    %v2376 = vpack.c.b16 %v1972, %v1968
    %v2377 = vpack.c.b16 %v1973, %v1969
    %v2378 = vpack.c.b16 %v1974, %v1970
    %v2379 = vpack.c.b16 %v1979, %v1975
    %v2380 = vpack.c.b16 %v1980, %v1976
    %v2381 = vpack.c.b16 %v1981, %v1977
    %v2382 = vpack.c.b16 %v1982, %v1978
    %v2383 = vpack.c.b16 %v1987, %v1983
    %v2384 = vpack.c.b16 %v1988, %v1984
    %v2385 = vpack.c.b16 %v1989, %v1985
    %v2386 = vpack.c.b16 %v1990, %v1986
    %v2387 = vpack.c.b16 %v1995, %v1991
    %v2388 = vpack.c.b16 %v1996, %v1992
    %v2389 = vpack.c.b16 %v1997, %v1993
    %v2390 = vpack.c.b16 %v1998, %v1994
    %v2391 = vpack.c.b16 %v2003, %v1999
    %v2392 = vpack.c.b16 %v2004, %v2000
    %v2393 = vpack.c.b16 %v2005, %v2001
    %v2394 = vpack.c.b16 %v2006, %v2002
    %v2395 = vpack.c.b16 %v2011, %v2007
    %v2396 = vpack.c.b16 %v2012, %v2008
    %v2397 = vpack.c.b16 %v2013, %v2009
    %v2398 = vpack.c.b16 %v2014, %v2010
    %v2399 = vpack.c.b16 %v2019, %v2015
    %v2400 = vpack.c.b16 %v2020, %v2016
    %v2401 = vpack.c.b16 %v2021, %v2017
    %v2402 = vpack.c.b16 %v2022, %v2018
    %v2403 = vpack.c.b16 %v2027, %v2023
    %v2404 = vpack.c.b16 %v2028, %v2024
    %v2405 = vpack.c.b16 %v2029, %v2025
    %v2406 = vpack.c.b16 %v2030, %v2026
    %v2407 = vpack.c.b16 %v2035, %v2031
    %v2408 = vpack.c.b16 %v2036, %v2032
    %v2409 = vpack.c.b16 %v2037, %v2033
    %v2410 = vpack.c.b16 %v2038, %v2034
    %v2411 = vpack.c.b16 %v2043, %v2039
    %v2412 = vpack.c.b16 %v2044, %v2040
    %v2413 = vpack.c.b16 %v2045, %v2041
    %v2414 = vpack.c.b16 %v2046, %v2042
    %v2415 = vpack.c.b16 %v2051, %v2047
    %v2416 = vpack.c.b16 %v2052, %v2048
    %v2417 = vpack.c.b16 %v2053, %v2049
    %v2418 = vpack.c.b16 %v2054, %v2050
    %v2419 = vpack.c.b16 %v2059, %v2055
    %v2420 = vpack.c.b16 %v2060, %v2056
    %v2421 = vpack.c.b16 %v2061, %v2057
    %v2422 = vpack.c.b16 %v2062, %v2058
    %v2423 = vpack.c.b16 %v2067, %v2063
    %v2424 = vpack.c.b16 %v2068, %v2064
    %v2425 = vpack.c.b16 %v2069, %v2065
    %v2426 = vpack.c.b16 %v2070, %v2066
    %v2427 = vpack.c.b16 %v2075, %v2071
    %v2428 = vpack.c.b16 %v2076, %v2072
    %v2429 = vpack.c.b16 %v2077, %v2073
    %v2430 = vpack.c.b16 %v2078, %v2074
    %v2431 = vpack.c.b16 %v2083, %v2079
    %v2432 = vpack.c.b16 %v2084, %v2080
    %v2433 = vpack.c.b16 %v2085, %v2081
    %v2434 = vpack.c.b16 %v2086, %v2082
    %v2435 = vpack.c.b16 %v2091, %v2087
    %v2436 = vpack.c.b16 %v2092, %v2088
    %v2437 = vpack.c.b16 %v2093, %v2089
    %v2438 = vpack.c.b16 %v2094, %v2090
    %v2439 = vpack.c.b16 %v2099, %v2095
    %v2440 = vpack.c.b16 %v2100, %v2096
    %v2441 = vpack.c.b16 %v2101, %v2097
    %v2442 = vpack.c.b16 %v2102, %v2098
    %v2443 = vpack.c.b16 %v2107, %v2103
    %v2444 = vpack.c.b16 %v2108, %v2104
    %v2445 = vpack.c.b16 %v2109, %v2105
    %v2446 = vpack.c.b16 %v2110, %v2106
    %v2447 = vpack.c.b16 %v2115, %v2111
    %v2448 = vpack.c.b16 %v2116, %v2112
    %v2449 = vpack.c.b16 %v2117, %v2113
    %v2450 = vpack.c.b16 %v2118, %v2114
    %v2451 = vpack.c.b16 %v2123, %v2119
    %v2452 = vpack.c.b16 %v2124, %v2120
    %v2453 = vpack.c.b16 %v2125, %v2121
    %v2454 = vpack.c.b16 %v2126, %v2122
    %v2455 = vpack.c.b16 %v2131, %v2127
    %v2456 = vpack.c.b16 %v2132, %v2128
    %v2457 = vpack.c.b16 %v2133, %v2129
    %v2458 = vpack.c.b16 %v2134, %v2130
    %v2459 = vpack.c.b16 %v2139, %v2135
    %v2460 = vpack.c.b16 %v2140, %v2136
    %v2461 = vpack.c.b16 %v2141, %v2137
    %v2462 = vpack.c.b16 %v2142, %v2138
    %v2463 = vpack.c.b16 %v2147, %v2143
    %v2464 = vpack.c.b16 %v2148, %v2144
    %v2465 = vpack.c.b16 %v2149, %v2145
    %v2466 = vpack.c.b16 %v2150, %v2146
    %v2467 = vpack.c.b16 %v2155, %v2151
    %v2468 = vpack.c.b16 %v2156, %v2152
    %v2469 = vpack.c.b16 %v2157, %v2153
    %v2470 = vpack.c.b16 %v2158, %v2154
    %v2471 = vpack.c.b16 %v2163, %v2159
    %v2472 = vpack.c.b16 %v2164, %v2160
    %v2473 = vpack.c.b16 %v2165, %v2161
    %v2474 = vpack.c.b16 %v2166, %v2162
    %v2475 = vpack.c.b16 %v2171, %v2167
    %v2476 = vpack.c.b16 %v2172, %v2168
    %v2477 = vpack.c.b16 %v2173, %v2169
    %v2478 = vpack.c.b16 %v2174, %v2170
    %v2479 = vpack.c.b16 %v2179, %v2175
    %v2480 = vpack.c.b16 %v2180, %v2176
    %v2481 = vpack.c.b16 %v2181, %v2177
    %v2482 = vpack.c.b16 %v2182, %v2178
    %v2483 = vpack.c.b16 %v2187, %v2183
    %v2484 = vpack.c.b16 %v2188, %v2184
    %v2485 = vpack.c.b16 %v2189, %v2185
    %v2486 = vpack.c.b16 %v2190, %v2186
    %v2487 = vpack.c.b16 %v2195, %v2191
    %v2488 = vpack.c.b16 %v2196, %v2192
    %v2489 = vpack.c.b16 %v2197, %v2193
    %v2490 = vpack.c.b16 %v2198, %v2194
    %v2491 = vpack.c.b16 %v2203, %v2199
    %v2492 = vpack.c.b16 %v2204, %v2200
    %v2493 = vpack.c.b16 %v2205, %v2201
    %v2494 = vpack.c.b16 %v2206, %v2202
    %v2495 = vpack.c.b16 %v2211, %v2207
    %v2496 = vpack.c.b16 %v2212, %v2208
    %v2497 = vpack.c.b16 %v2213, %v2209
    %v2498 = vpack.c.b16 %v2214, %v2210
    %v2499 = vpack.c.b16 %v2219, %v2215
    %v2500 = vpack.c.b16 %v2220, %v2216
    %v2501 = vpack.c.b16 %v2221, %v2217
    %v2502 = vpack.c.b16 %v2222, %v2218
    %v2503 = vpack.c.b16 %v2227, %v2223
    %v2504 = vpack.c.b16 %v2228, %v2224
    %v2505 = vpack.c.b16 %v2229, %v2225
    %v2506 = vpack.c.b16 %v2230, %v2226
    %v2507 = vpack.c.b16 %v2235, %v2231
    %v2508 = vpack.c.b16 %v2236, %v2232
    %v2509 = vpack.c.b16 %v2237, %v2233
    %v2510 = vpack.c.b16 %v2238, %v2234
    %v2511 = vpack.c.b16 %v2243, %v2239
    %v2512 = vpack.c.b16 %v2244, %v2240
    %v2513 = vpack.c.b16 %v2245, %v2241
    %v2514 = vpack.c.b16 %v2246, %v2242
    %v2515 = vpack.c.b16 %v2251, %v2247
    %v2516 = vpack.c.b16 %v2252, %v2248
    %v2517 = vpack.c.b16 %v2253, %v2249
    %v2518 = vpack.c.b16 %v2254, %v2250
    %v2519 = vpack.c.b16 %v2259, %v2255
    %v2520 = vpack.c.b16 %v2260, %v2256
    %v2521 = vpack.c.b16 %v2261, %v2257
    %v2522 = vpack.c.b16 %v2262, %v2258
    %v2523 = vpack.c.b16 %v2267, %v2263
    %v2524 = vpack.c.b16 %v2268, %v2264
    %v2525 = vpack.c.b16 %v2269, %v2265
    %v2526 = vpack.c.b16 %v2270, %v2266
    %2783 = vmatprep.subr.bf16.mxu0 %v2300
    %2784 = vmatpush1.bf16.msra.mxu0 %v2299
    %2785 = vmatprep.subr.bf16.mxu0 %v2296
    %2786 = vmatpush1.bf16.msra.mxu0 %v2295
    %2787 = vmatprep.subr.bf16.mxu0 %v2292
    %2788 = vmatpush1.bf16.msra.mxu0 %v2291
    %2789 = vmatprep.subr.bf16.mxu0 %v2288
    %2790 = vmatpush1.bf16.msra.mxu0 %v2287
    %2791 = vmatprep.subr.bf16.mxu0 %v2284
    %2792 = vmatpush1.bf16.msra.mxu0 %v2283
    %2793 = vmatprep.subr.bf16.mxu0 %v2280
    %2794 = vmatpush1.bf16.msra.mxu0 %v2279
    %2795 = vmatprep.subr.bf16.mxu0 %v2276
    %2796 = vmatpush1.bf16.msra.mxu0 %v2275
    %2797 = vmatprep.subr.bf16.mxu0 %v2272
    %2798 = vmatpush1.bf16.msra.mxu0 %v2271
    %2799 = vmatprep.subr.bf16.mxu0 %v2332
    %2800 = vmatpush2.bf16.msra.mxu0 %v2331
    %2801 = vmatprep.subr.bf16.mxu0 %v2328
    %2802 = vmatpush2.bf16.msra.mxu0 %v2327
    %2803 = vmatprep.subr.bf16.mxu0 %v2324
    %2804 = vmatpush2.bf16.msra.mxu0 %v2323
    %2805 = vmatprep.subr.bf16.mxu0 %v2320
    %2806 = vmatpush2.bf16.msra.mxu0 %v2319
    %2807 = vmatprep.subr.bf16.mxu0 %v2316
    %2808 = vmatpush2.bf16.msra.mxu0 %v2315
    %2809 = vmatprep.subr.bf16.mxu0 %v2312
    %2810 = vmatpush2.bf16.msra.mxu0 %v2311
    %2811 = vmatprep.subr.bf16.mxu0 %v2308
    %2812 = vmatpush2.bf16.msra.mxu0 %v2307
    %2813 = vmatprep.subr.bf16.mxu0 %v2304
    %2814 = vmatpush2.bf16.msra.mxu0 %v2303
    %2815 = vmatprep.mubr.bf16.mxu0 %v1240
    %2816 = vmatmul.mubr.bf16.gmra.mxu0 %v1239
    %v2817 = vpop.f32.mrf.mxu0
    %v2818 = vadd.f32 0.0, %v2817
    %v2819 = vpop.f32.mrf.mxu0
    %v2820 = vadd.f32 0.0, %v2819
    %v2821 = vpop.f32.mrf.mxu0
    %v2822 = vadd.f32 0.0, %v2821
    %v2823 = vpop.f32.mrf.mxu0
    %v2824 = vadd.f32 0.0, %v2823
    %2825 = vdwg.mxu0
    %2826 = vmatprep.subr.bf16.mxu0 %v2364
    %2827 = vmatpush1.bf16.msra.mxu0 %v2363
    %2828 = vmatprep.subr.bf16.mxu0 %v2360
    %2829 = vmatpush1.bf16.msra.mxu0 %v2359
    %2830 = vmatprep.subr.bf16.mxu0 %v2356
    %2831 = vmatpush1.bf16.msra.mxu0 %v2355
    %2832 = vmatprep.subr.bf16.mxu0 %v2352
    %2833 = vmatpush1.bf16.msra.mxu0 %v2351
    %2834 = vmatprep.subr.bf16.mxu0 %v2348
    %2835 = vmatpush1.bf16.msra.mxu0 %v2347
    %2836 = vmatprep.subr.bf16.mxu0 %v2344
    %2837 = vmatpush1.bf16.msra.mxu0 %v2343
    %2838 = vmatprep.subr.bf16.mxu0 %v2340
    %2839 = vmatpush1.bf16.msra.mxu0 %v2339
    %2840 = vmatprep.subr.bf16.mxu0 %v2336
    %2841 = vmatpush1.bf16.msra.mxu0 %v2335
    %2842 = vmatprep.subr.bf16.mxu0 %v2396
    %2843 = vmatpush2.bf16.msra.mxu0 %v2395
    %2844 = vmatprep.subr.bf16.mxu0 %v2392
    %2845 = vmatpush2.bf16.msra.mxu0 %v2391
    %2846 = vmatprep.subr.bf16.mxu0 %v2388
    %2847 = vmatpush2.bf16.msra.mxu0 %v2387
    %2848 = vmatprep.subr.bf16.mxu0 %v2384
    %2849 = vmatpush2.bf16.msra.mxu0 %v2383
    %2850 = vmatprep.subr.bf16.mxu0 %v2380
    %2851 = vmatpush2.bf16.msra.mxu0 %v2379
    %2852 = vmatprep.subr.bf16.mxu0 %v2376
    %2853 = vmatpush2.bf16.msra.mxu0 %v2375
    %2854 = vmatprep.subr.bf16.mxu0 %v2372
    %2855 = vmatpush2.bf16.msra.mxu0 %v2371
    %2856 = vmatprep.subr.bf16.mxu0 %v2368
    %2857 = vmatpush2.bf16.msra.mxu0 %v2367
    %2858 = vmatprep.mubr.bf16.mxu0 %v1242
    %2859 = vmatmul.mubr.bf16.gmra.mxu0 %v1241
    %v2860 = vpop.f32.mrf.mxu0
    %v2861 = vadd.f32 %v2818, %v2860
    %v2862 = vpop.f32.mrf.mxu0
    %v2863 = vadd.f32 %v2820, %v2862
    %v2864 = vpop.f32.mrf.mxu0
    %v2865 = vadd.f32 %v2822, %v2864
    %v2866 = vpop.f32.mrf.mxu0
    %v2867 = vadd.f32 %v2824, %v2866
    %2868 = vdwg.mxu0
    %2869 = vmatprep.subr.bf16.mxu0 %v2428
    %2870 = vmatpush1.bf16.msra.mxu0 %v2427
    %2871 = vmatprep.subr.bf16.mxu0 %v2424
    %2872 = vmatpush1.bf16.msra.mxu0 %v2423
    %2873 = vmatprep.subr.bf16.mxu0 %v2420
    %2874 = vmatpush1.bf16.msra.mxu0 %v2419
    %2875 = vmatprep.subr.bf16.mxu0 %v2416
    %2876 = vmatpush1.bf16.msra.mxu0 %v2415
    %2877 = vmatprep.subr.bf16.mxu0 %v2412
    %2878 = vmatpush1.bf16.msra.mxu0 %v2411
    %2879 = vmatprep.subr.bf16.mxu0 %v2408
    %2880 = vmatpush1.bf16.msra.mxu0 %v2407
    %2881 = vmatprep.subr.bf16.mxu0 %v2404
    %2882 = vmatpush1.bf16.msra.mxu0 %v2403
    %2883 = vmatprep.subr.bf16.mxu0 %v2400
    %2884 = vmatpush1.bf16.msra.mxu0 %v2399
    %2885 = vmatprep.subr.bf16.mxu0 %v2460
    %2886 = vmatpush2.bf16.msra.mxu0 %v2459
    %2887 = vmatprep.subr.bf16.mxu0 %v2456
    %2888 = vmatpush2.bf16.msra.mxu0 %v2455
    %2889 = vmatprep.subr.bf16.mxu0 %v2452
    %2890 = vmatpush2.bf16.msra.mxu0 %v2451
    %2891 = vmatprep.subr.bf16.mxu0 %v2448
    %2892 = vmatpush2.bf16.msra.mxu0 %v2447
    %2893 = vmatprep.subr.bf16.mxu0 %v2444
    %2894 = vmatpush2.bf16.msra.mxu0 %v2443
    %2895 = vmatprep.subr.bf16.mxu0 %v2440
    %2896 = vmatpush2.bf16.msra.mxu0 %v2439
    %2897 = vmatprep.subr.bf16.mxu0 %v2436
    %2898 = vmatpush2.bf16.msra.mxu0 %v2435
    %2899 = vmatprep.subr.bf16.mxu0 %v2432
    %2900 = vmatpush2.bf16.msra.mxu0 %v2431
    %2901 = vmatprep.mubr.bf16.mxu0 %v1244
    %2902 = vmatmul.mubr.bf16.gmra.mxu0 %v1243
    %v2903 = vpop.f32.mrf.mxu0
    %v2904 = vadd.f32 %v2861, %v2903
    %v2905 = vpop.f32.mrf.mxu0
    %v2906 = vadd.f32 %v2863, %v2905
    %v2907 = vpop.f32.mrf.mxu0
    %v2908 = vadd.f32 %v2865, %v2907
    %v2909 = vpop.f32.mrf.mxu0
    %v2910 = vadd.f32 %v2867, %v2909
    %2911 = vdwg.mxu0
    %2912 = vmatprep.subr.bf16.mxu0 %v2492
    %2913 = vmatpush1.bf16.msra.mxu0 %v2491
    %2914 = vmatprep.subr.bf16.mxu0 %v2488
    %2915 = vmatpush1.bf16.msra.mxu0 %v2487
    %2916 = vmatprep.subr.bf16.mxu0 %v2484
    %2917 = vmatpush1.bf16.msra.mxu0 %v2483
    %2918 = vmatprep.subr.bf16.mxu0 %v2480
    %2919 = vmatpush1.bf16.msra.mxu0 %v2479
    %2920 = vmatprep.subr.bf16.mxu0 %v2476
    %2921 = vmatpush1.bf16.msra.mxu0 %v2475
    %2922 = vmatprep.subr.bf16.mxu0 %v2472
    %2923 = vmatpush1.bf16.msra.mxu0 %v2471
    %2924 = vmatprep.subr.bf16.mxu0 %v2468
    %2925 = vmatpush1.bf16.msra.mxu0 %v2467
    %2926 = vmatprep.subr.bf16.mxu0 %v2464
    %2927 = vmatpush1.bf16.msra.mxu0 %v2463
    %2928 = vmatprep.subr.bf16.mxu0 %v2524
    %2929 = vmatpush2.bf16.msra.mxu0 %v2523
    %2930 = vmatprep.subr.bf16.mxu0 %v2520
    %2931 = vmatpush2.bf16.msra.mxu0 %v2519
    %2932 = vmatprep.subr.bf16.mxu0 %v2516
    %2933 = vmatpush2.bf16.msra.mxu0 %v2515
    %2934 = vmatprep.subr.bf16.mxu0 %v2512
    %2935 = vmatpush2.bf16.msra.mxu0 %v2511
    %2936 = vmatprep.subr.bf16.mxu0 %v2508
    %2937 = vmatpush2.bf16.msra.mxu0 %v2507
    %2938 = vmatprep.subr.bf16.mxu0 %v2504
    %2939 = vmatpush2.bf16.msra.mxu0 %v2503
    %2940 = vmatprep.subr.bf16.mxu0 %v2500
    %2941 = vmatpush2.bf16.msra.mxu0 %v2499
    %2942 = vmatprep.subr.bf16.mxu0 %v2496
    %2943 = vmatpush2.bf16.msra.mxu0 %v2495
    %2944 = vmatprep.mubr.bf16.mxu0 %v1246
    %2945 = vmatmul.mubr.bf16.gmra.mxu0 %v1245
    %v2946 = vpop.f32.mrf.mxu0
    %v2947 = vadd.f32 %v2904, %v2946
    %v2948 = vpop.f32.mrf.mxu0
    %v2949 = vadd.f32 %v2906, %v2948
    %v2950 = vpop.f32.mrf.mxu0
    %v2951 = vadd.f32 %v2908, %v2950
    %v2952 = vpop.f32.mrf.mxu0
    %v2953 = vadd.f32 %v2910, %v2952
    %2954 = vdwg.mxu0
    %2955 = vmatprep.subr.bf16.mxu0 %v2302
    %2956 = vmatpush1.bf16.msra.mxu0 %v2301
    %2957 = vmatprep.subr.bf16.mxu0 %v2298
    %2958 = vmatpush1.bf16.msra.mxu0 %v2297
    %2959 = vmatprep.subr.bf16.mxu0 %v2294
    %2960 = vmatpush1.bf16.msra.mxu0 %v2293
    %2961 = vmatprep.subr.bf16.mxu0 %v2290
    %2962 = vmatpush1.bf16.msra.mxu0 %v2289
    %2963 = vmatprep.subr.bf16.mxu0 %v2286
    %2964 = vmatpush1.bf16.msra.mxu0 %v2285
    %2965 = vmatprep.subr.bf16.mxu0 %v2282
    %2966 = vmatpush1.bf16.msra.mxu0 %v2281
    %2967 = vmatprep.subr.bf16.mxu0 %v2278
    %2968 = vmatpush1.bf16.msra.mxu0 %v2277
    %2969 = vmatprep.subr.bf16.mxu0 %v2274
    %2970 = vmatpush1.bf16.msra.mxu0 %v2273
    %2971 = vmatprep.subr.bf16.mxu0 %v2334
    %2972 = vmatpush2.bf16.msra.mxu0 %v2333
    %2973 = vmatprep.subr.bf16.mxu0 %v2330
    %2974 = vmatpush2.bf16.msra.mxu0 %v2329
    %2975 = vmatprep.subr.bf16.mxu0 %v2326
    %2976 = vmatpush2.bf16.msra.mxu0 %v2325
    %2977 = vmatprep.subr.bf16.mxu0 %v2322
    %2978 = vmatpush2.bf16.msra.mxu0 %v2321
    %2979 = vmatprep.subr.bf16.mxu0 %v2318
    %2980 = vmatpush2.bf16.msra.mxu0 %v2317
    %2981 = vmatprep.subr.bf16.mxu0 %v2314
    %2982 = vmatpush2.bf16.msra.mxu0 %v2313
    %2983 = vmatprep.subr.bf16.mxu0 %v2310
    %2984 = vmatpush2.bf16.msra.mxu0 %v2309
    %2985 = vmatprep.subr.bf16.mxu0 %v2306
    %2986 = vmatpush2.bf16.msra.mxu0 %v2305
    %2987 = vmatprep.mubr.bf16.mxu0 %v1240
    %2988 = vmatmul.mubr.bf16.gmra.mxu0 %v1239
    %v2989 = vpop.f32.mrf.mxu0
    %v2990 = vadd.f32 0.0, %v2989
    %v2991 = vpop.f32.mrf.mxu0
    %v2992 = vadd.f32 0.0, %v2991
    %v2993 = vpop.f32.mrf.mxu0
    %v2994 = vadd.f32 0.0, %v2993
    %v2995 = vpop.f32.mrf.mxu0
    %v2996 = vadd.f32 0.0, %v2995
    %2997 = vdwg.mxu0
    %2998 = vmatprep.subr.bf16.mxu0 %v2366
    %2999 = vmatpush1.bf16.msra.mxu0 %v2365
    %3000 = vmatprep.subr.bf16.mxu0 %v2362
    %3001 = vmatpush1.bf16.msra.mxu0 %v2361
    %3002 = vmatprep.subr.bf16.mxu0 %v2358
    %3003 = vmatpush1.bf16.msra.mxu0 %v2357
    %3004 = vmatprep.subr.bf16.mxu0 %v2354
    %3005 = vmatpush1.bf16.msra.mxu0 %v2353
    %3006 = vmatprep.subr.bf16.mxu0 %v2350
    %3007 = vmatpush1.bf16.msra.mxu0 %v2349
    %3008 = vmatprep.subr.bf16.mxu0 %v2346
    %3009 = vmatpush1.bf16.msra.mxu0 %v2345
    %3010 = vmatprep.subr.bf16.mxu0 %v2342
    %3011 = vmatpush1.bf16.msra.mxu0 %v2341
    %3012 = vmatprep.subr.bf16.mxu0 %v2338
    %3013 = vmatpush1.bf16.msra.mxu0 %v2337
    %3014 = vmatprep.subr.bf16.mxu0 %v2398
    %3015 = vmatpush2.bf16.msra.mxu0 %v2397
    %3016 = vmatprep.subr.bf16.mxu0 %v2394
    %3017 = vmatpush2.bf16.msra.mxu0 %v2393
    %3018 = vmatprep.subr.bf16.mxu0 %v2390
    %3019 = vmatpush2.bf16.msra.mxu0 %v2389
    %3020 = vmatprep.subr.bf16.mxu0 %v2386
    %3021 = vmatpush2.bf16.msra.mxu0 %v2385
    %3022 = vmatprep.subr.bf16.mxu0 %v2382
    %3023 = vmatpush2.bf16.msra.mxu0 %v2381
    %3024 = vmatprep.subr.bf16.mxu0 %v2378
    %3025 = vmatpush2.bf16.msra.mxu0 %v2377
    %3026 = vmatprep.subr.bf16.mxu0 %v2374
    %3027 = vmatpush2.bf16.msra.mxu0 %v2373
    %3028 = vmatprep.subr.bf16.mxu0 %v2370
    %3029 = vmatpush2.bf16.msra.mxu0 %v2369
    %3030 = vmatprep.mubr.bf16.mxu0 %v1242
    %3031 = vmatmul.mubr.bf16.gmra.mxu0 %v1241
    %v3032 = vpop.f32.mrf.mxu0
    %v3033 = vadd.f32 %v2990, %v3032
    %v3034 = vpop.f32.mrf.mxu0
    %v3035 = vadd.f32 %v2992, %v3034
    %v3036 = vpop.f32.mrf.mxu0
    %v3037 = vadd.f32 %v2994, %v3036
    %v3038 = vpop.f32.mrf.mxu0
    %v3039 = vadd.f32 %v2996, %v3038
    %3040 = vdwg.mxu0
    %3041 = vmatprep.subr.bf16.mxu0 %v2430
    %3042 = vmatpush1.bf16.msra.mxu0 %v2429
    %3043 = vmatprep.subr.bf16.mxu0 %v2426
    %3044 = vmatpush1.bf16.msra.mxu0 %v2425
    %3045 = vmatprep.subr.bf16.mxu0 %v2422
    %3046 = vmatpush1.bf16.msra.mxu0 %v2421
    %3047 = vmatprep.subr.bf16.mxu0 %v2418
    %3048 = vmatpush1.bf16.msra.mxu0 %v2417
    %3049 = vmatprep.subr.bf16.mxu0 %v2414
    %3050 = vmatpush1.bf16.msra.mxu0 %v2413
    %3051 = vmatprep.subr.bf16.mxu0 %v2410
    %3052 = vmatpush1.bf16.msra.mxu0 %v2409
    %3053 = vmatprep.subr.bf16.mxu0 %v2406
    %3054 = vmatpush1.bf16.msra.mxu0 %v2405
    %3055 = vmatprep.subr.bf16.mxu0 %v2402
    %3056 = vmatpush1.bf16.msra.mxu0 %v2401
    %3057 = vmatprep.subr.bf16.mxu0 %v2462
    %3058 = vmatpush2.bf16.msra.mxu0 %v2461
    %3059 = vmatprep.subr.bf16.mxu0 %v2458
    %3060 = vmatpush2.bf16.msra.mxu0 %v2457
    %3061 = vmatprep.subr.bf16.mxu0 %v2454
    %3062 = vmatpush2.bf16.msra.mxu0 %v2453
    %3063 = vmatprep.subr.bf16.mxu0 %v2450
    %3064 = vmatpush2.bf16.msra.mxu0 %v2449
    %3065 = vmatprep.subr.bf16.mxu0 %v2446
    %3066 = vmatpush2.bf16.msra.mxu0 %v2445
    %3067 = vmatprep.subr.bf16.mxu0 %v2442
    %3068 = vmatpush2.bf16.msra.mxu0 %v2441
    %3069 = vmatprep.subr.bf16.mxu0 %v2438
    %3070 = vmatpush2.bf16.msra.mxu0 %v2437
    %3071 = vmatprep.subr.bf16.mxu0 %v2434
    %3072 = vmatpush2.bf16.msra.mxu0 %v2433
    %3073 = vmatprep.mubr.bf16.mxu0 %v1244
    %3074 = vmatmul.mubr.bf16.gmra.mxu0 %v1243
    %v3075 = vpop.f32.mrf.mxu0
    %v3076 = vadd.f32 %v3033, %v3075
    %v3077 = vpop.f32.mrf.mxu0
    %v3078 = vadd.f32 %v3035, %v3077
    %v3079 = vpop.f32.mrf.mxu0
    %v3080 = vadd.f32 %v3037, %v3079
    %v3081 = vpop.f32.mrf.mxu0
    %v3082 = vadd.f32 %v3039, %v3081
    %3083 = vdwg.mxu0
    %3084 = vmatprep.subr.bf16.mxu0 %v2494
    %3085 = vmatpush1.bf16.msra.mxu0 %v2493
    %3086 = vmatprep.subr.bf16.mxu0 %v2490
    %3087 = vmatpush1.bf16.msra.mxu0 %v2489
    %3088 = vmatprep.subr.bf16.mxu0 %v2486
    %3089 = vmatpush1.bf16.msra.mxu0 %v2485
    %3090 = vmatprep.subr.bf16.mxu0 %v2482
    %3091 = vmatpush1.bf16.msra.mxu0 %v2481
    %3092 = vmatprep.subr.bf16.mxu0 %v2478
    %3093 = vmatpush1.bf16.msra.mxu0 %v2477
    %3094 = vmatprep.subr.bf16.mxu0 %v2474
    %3095 = vmatpush1.bf16.msra.mxu0 %v2473
    %3096 = vmatprep.subr.bf16.mxu0 %v2470
    %3097 = vmatpush1.bf16.msra.mxu0 %v2469
    %3098 = vmatprep.subr.bf16.mxu0 %v2466
    %3099 = vmatpush1.bf16.msra.mxu0 %v2465
    %3100 = vmatprep.subr.bf16.mxu0 %v2526
    %3101 = vmatpush2.bf16.msra.mxu0 %v2525
    %3102 = vmatprep.subr.bf16.mxu0 %v2522
    %3103 = vmatpush2.bf16.msra.mxu0 %v2521
    %3104 = vmatprep.subr.bf16.mxu0 %v2518
    %3105 = vmatpush2.bf16.msra.mxu0 %v2517
    %3106 = vmatprep.subr.bf16.mxu0 %v2514
    %3107 = vmatpush2.bf16.msra.mxu0 %v2513
    %3108 = vmatprep.subr.bf16.mxu0 %v2510
    %3109 = vmatpush2.bf16.msra.mxu0 %v2509
    %3110 = vmatprep.subr.bf16.mxu0 %v2506
    %3111 = vmatpush2.bf16.msra.mxu0 %v2505
    %3112 = vmatprep.subr.bf16.mxu0 %v2502
    %3113 = vmatpush2.bf16.msra.mxu0 %v2501
    %3114 = vmatprep.subr.bf16.mxu0 %v2498
    %3115 = vmatpush2.bf16.msra.mxu0 %v2497
    %3116 = vmatprep.mubr.bf16.mxu0 %v1246
    %3117 = vmatmul.mubr.bf16.gmra.mxu0 %v1245
    %v3118 = vpop.f32.mrf.mxu0
    %v3119 = vadd.f32 %v3076, %v3118
    %v3120 = vpop.f32.mrf.mxu0
    %v3121 = vadd.f32 %v3078, %v3120
    %v3122 = vpop.f32.mrf.mxu0
    %v3123 = vadd.f32 %v3080, %v3122
    %v3124 = vpop.f32.mrf.mxu0
    %v3125 = vadd.f32 %v3082, %v3124
    %3126 = vdwg.mxu0
    %v3127 = vld [vmem:[#allocation17 + $0x8] sm:$0xf]
    %v3128 = vpack.c.bf16 %v2951, %v2947
    %v3129 = vpack.c.bf16 %v2953, %v2949
    %v3130 = vpack.c.bf16 %v3123, %v3119
    %v3131 = vpack.c.bf16 %v3125, %v3121
    %v3133 = vlaneseq
    %v3134 = vshrl.u32 %v3133, 7
    %v3135 = vsub.s32 0, %v3134
    %v3136 = vrot.slane %v3127, %v3135
    %v3137 = vlaneseq
    %v3138 = vshrl.u32 %v3137, 7
    %v3139 = vsub.s32 1, %v3138
    %v3140 = vrot.slane %v3127, %v3139
    %v3141 = vlaneseq
    %v3142 = vshrl.u32 %v3141, 7
    %v3143 = vsub.s32 2, %v3142
    %v3144 = vrot.slane %v3127, %v3143
    %v3145 = vlaneseq
    %v3146 = vshrl.u32 %v3145, 7
    %v3147 = vsub.s32 3, %v3146
    %v3148 = vrot.slane %v3127, %v3147
    %v3153 = vpack.c.bf16 %v3136, %v3136
    %v3154 = vpack.c.bf16 %v3140, %v3140
    %v3155 = vpack.c.bf16 %v3144, %v3144
    %v3156 = vpack.c.bf16 %v3148, %v3148
    %v3158 = vpack.i.b16 %v3153, %v3153
    %v3160 = vlaneseq
    %v3161 = vshrl.u32 %v3160, 7
    %v3162 = vsub.s32 0, %v3161
    %v3163 = vrot.slane %v3158, %v3162
    %v3165 = vpack.i.b16 %v3154, %v3154
    %v3167 = vlaneseq
    %v3168 = vshrl.u32 %v3167, 7
    %v3169 = vsub.s32 0, %v3168
    %v3170 = vrot.slane %v3165, %v3169
    %v3172 = vpack.i.b16 %v3155, %v3155
    %v3174 = vlaneseq
    %v3175 = vshrl.u32 %v3174, 7
    %v3176 = vsub.s32 0, %v3175
    %v3177 = vrot.slane %v3172, %v3176
    %v3179 = vpack.i.b16 %v3156, %v3156
    %v3181 = vlaneseq
    %v3182 = vshrl.u32 %v3181, 7
    %v3183 = vsub.s32 0, %v3182
    %v3184 = vrot.slane %v3179, %v3183
    %v3185 = vadd.bf16 %v3128, %v3163
    %v3186 = vadd.bf16 %v3129, %v3170
    %v3187 = vadd.bf16 %v3130, %v3177
    %v3188 = vadd.bf16 %v3131, %v3184
    %v3189 = vmax.bf16 %v3185, 0
    %v3190 = vmax.bf16 %v3186, 0
    %v3191 = vmax.bf16 %v3187, 0
    %v3192 = vmax.bf16 %v3188, 0
    %v3193 = vld [vmem:[#allocation8] sm:$0xff]
    %v3194 = vld [vmem:[#allocation8 + $0x8] sm:$0xff]
    %v3195 = vld [vmem:[#allocation8 + $0x10] sm:$0xff]
    %v3196 = vld [vmem:[#allocation8 + $0x18] sm:$0xff]
    %v3197 = vld [vmem:[#allocation8 + $0x20] sm:$0xff]
    %v3198 = vld [vmem:[#allocation8 + $0x28] sm:$0xff]
    %v3199 = vld [vmem:[#allocation8 + $0x30] sm:$0xff]
    %v3200 = vld [vmem:[#allocation8 + $0x38] sm:$0xff]
    %v3201 = vld [vmem:[#allocation8 + $0x40] sm:$0xff]
    %v3202 = vld [vmem:[#allocation8 + $0x48] sm:$0xff]
    %v3203 = vld [vmem:[#allocation8 + $0x50] sm:$0xff]
    %v3204 = vld [vmem:[#allocation8 + $0x58] sm:$0xff]
    %v3205 = vld [vmem:[#allocation8 + $0x60] sm:$0xff]
    %v3206 = vld [vmem:[#allocation8 + $0x68] sm:$0xff]
    %v3207 = vld [vmem:[#allocation8 + $0x70] sm:$0xff]
    %v3208 = vld [vmem:[#allocation8 + $0x78] sm:$0xff]
    %v3209 = vld [vmem:[#allocation8 + $0x80] sm:$0xff]
    %v3210 = vld [vmem:[#allocation8 + $0x88] sm:$0xff]
    %v3211 = vld [vmem:[#allocation8 + $0x90] sm:$0xff]
    %v3212 = vld [vmem:[#allocation8 + $0x98] sm:$0xff]
    %v3213 = vld [vmem:[#allocation8 + $0xa0] sm:$0xff]
    %v3214 = vld [vmem:[#allocation8 + $0xa8] sm:$0xff]
    %v3215 = vld [vmem:[#allocation8 + $0xb0] sm:$0xff]
    %v3216 = vld [vmem:[#allocation8 + $0xb8] sm:$0xff]
    %v3217 = vld [vmem:[#allocation8 + $0xc0] sm:$0xff]
    %v3218 = vld [vmem:[#allocation8 + $0xc8] sm:$0xff]
    %v3219 = vld [vmem:[#allocation8 + $0xd0] sm:$0xff]
    %v3220 = vld [vmem:[#allocation8 + $0xd8] sm:$0xff]
    %v3221 = vld [vmem:[#allocation8 + $0xe0] sm:$0xff]
    %v3222 = vld [vmem:[#allocation8 + $0xe8] sm:$0xff]
    %v3223 = vld [vmem:[#allocation8 + $0xf0] sm:$0xff]
    %v3224 = vld [vmem:[#allocation8 + $0xf8] sm:$0xff]
    %v3225 = vld [vmem:[#allocation8 + $0x100] sm:$0xff]
    %v3226 = vld [vmem:[#allocation8 + $0x108] sm:$0xff]
    %v3227 = vld [vmem:[#allocation8 + $0x110] sm:$0xff]
    %v3228 = vld [vmem:[#allocation8 + $0x118] sm:$0xff]
    %v3229 = vld [vmem:[#allocation8 + $0x120] sm:$0xff]
    %v3230 = vld [vmem:[#allocation8 + $0x128] sm:$0xff]
    %v3231 = vld [vmem:[#allocation8 + $0x130] sm:$0xff]
    %v3232 = vld [vmem:[#allocation8 + $0x138] sm:$0xff]
    %v3233 = vld [vmem:[#allocation8 + $0x140] sm:$0xff]
    %v3234 = vld [vmem:[#allocation8 + $0x148] sm:$0xff]
    %v3235 = vld [vmem:[#allocation8 + $0x150] sm:$0xff]
    %v3236 = vld [vmem:[#allocation8 + $0x158] sm:$0xff]
    %v3237 = vld [vmem:[#allocation8 + $0x160] sm:$0xff]
    %v3238 = vld [vmem:[#allocation8 + $0x168] sm:$0xff]
    %v3239 = vld [vmem:[#allocation8 + $0x170] sm:$0xff]
    %v3240 = vld [vmem:[#allocation8 + $0x178] sm:$0xff]
    %v3241 = vld [vmem:[#allocation8 + $0x180] sm:$0xff]
    %v3242 = vld [vmem:[#allocation8 + $0x188] sm:$0xff]
    %v3243 = vld [vmem:[#allocation8 + $0x190] sm:$0xff]
    %v3244 = vld [vmem:[#allocation8 + $0x198] sm:$0xff]
    %v3245 = vld [vmem:[#allocation8 + $0x1a0] sm:$0xff]
    %v3246 = vld [vmem:[#allocation8 + $0x1a8] sm:$0xff]
    %v3247 = vld [vmem:[#allocation8 + $0x1b0] sm:$0xff]
    %v3248 = vld [vmem:[#allocation8 + $0x1b8] sm:$0xff]
    %v3249 = vld [vmem:[#allocation8 + $0x1c0] sm:$0xff]
    %v3250 = vld [vmem:[#allocation8 + $0x1c8] sm:$0xff]
    %v3251 = vld [vmem:[#allocation8 + $0x1d0] sm:$0xff]
    %v3252 = vld [vmem:[#allocation8 + $0x1d8] sm:$0xff]
    %v3253 = vld [vmem:[#allocation8 + $0x1e0] sm:$0xff]
    %v3254 = vld [vmem:[#allocation8 + $0x1e8] sm:$0xff]
    %v3255 = vld [vmem:[#allocation8 + $0x1f0] sm:$0xff]
    %v3256 = vld [vmem:[#allocation8 + $0x1f8] sm:$0xff]
    %v3321 = vunpack.c.l.b16 %v3193
    %v3322 = vunpack.c.h.b16 %v3193
    %v3323 = vunpack.c.l.b16 %v3194
    %v3324 = vunpack.c.h.b16 %v3194
    %v3325 = vunpack.c.l.b16 %v3195
    %v3326 = vunpack.c.h.b16 %v3195
    %v3327 = vunpack.c.l.b16 %v3196
    %v3328 = vunpack.c.h.b16 %v3196
    %v3329 = vunpack.c.l.b16 %v3197
    %v3330 = vunpack.c.h.b16 %v3197
    %v3331 = vunpack.c.l.b16 %v3198
    %v3332 = vunpack.c.h.b16 %v3198
    %v3333 = vunpack.c.l.b16 %v3199
    %v3334 = vunpack.c.h.b16 %v3199
    %v3335 = vunpack.c.l.b16 %v3200
    %v3336 = vunpack.c.h.b16 %v3200
    %v3337 = vunpack.c.l.b16 %v3201
    %v3338 = vunpack.c.h.b16 %v3201
    %v3339 = vunpack.c.l.b16 %v3202
    %v3340 = vunpack.c.h.b16 %v3202
    %v3341 = vunpack.c.l.b16 %v3203
    %v3342 = vunpack.c.h.b16 %v3203
    %v3343 = vunpack.c.l.b16 %v3204
    %v3344 = vunpack.c.h.b16 %v3204
    %v3345 = vunpack.c.l.b16 %v3205
    %v3346 = vunpack.c.h.b16 %v3205
    %v3347 = vunpack.c.l.b16 %v3206
    %v3348 = vunpack.c.h.b16 %v3206
    %v3349 = vunpack.c.l.b16 %v3207
    %v3350 = vunpack.c.h.b16 %v3207
    %v3351 = vunpack.c.l.b16 %v3208
    %v3352 = vunpack.c.h.b16 %v3208
    %v3353 = vunpack.c.l.b16 %v3209
    %v3354 = vunpack.c.h.b16 %v3209
    %v3355 = vunpack.c.l.b16 %v3210
    %v3356 = vunpack.c.h.b16 %v3210
    %v3357 = vunpack.c.l.b16 %v3211
    %v3358 = vunpack.c.h.b16 %v3211
    %v3359 = vunpack.c.l.b16 %v3212
    %v3360 = vunpack.c.h.b16 %v3212
    %v3361 = vunpack.c.l.b16 %v3213
    %v3362 = vunpack.c.h.b16 %v3213
    %v3363 = vunpack.c.l.b16 %v3214
    %v3364 = vunpack.c.h.b16 %v3214
    %v3365 = vunpack.c.l.b16 %v3215
    %v3366 = vunpack.c.h.b16 %v3215
    %v3367 = vunpack.c.l.b16 %v3216
    %v3368 = vunpack.c.h.b16 %v3216
    %v3369 = vunpack.c.l.b16 %v3217
    %v3370 = vunpack.c.h.b16 %v3217
    %v3371 = vunpack.c.l.b16 %v3218
    %v3372 = vunpack.c.h.b16 %v3218
    %v3373 = vunpack.c.l.b16 %v3219
    %v3374 = vunpack.c.h.b16 %v3219
    %v3375 = vunpack.c.l.b16 %v3220
    %v3376 = vunpack.c.h.b16 %v3220
    %v3377 = vunpack.c.l.b16 %v3221
    %v3378 = vunpack.c.h.b16 %v3221
    %v3379 = vunpack.c.l.b16 %v3222
    %v3380 = vunpack.c.h.b16 %v3222
    %v3381 = vunpack.c.l.b16 %v3223
    %v3382 = vunpack.c.h.b16 %v3223
    %v3383 = vunpack.c.l.b16 %v3224
    %v3384 = vunpack.c.h.b16 %v3224
    %v3385 = vunpack.c.l.b16 %v3225
    %v3386 = vunpack.c.h.b16 %v3225
    %v3387 = vunpack.c.l.b16 %v3226
    %v3388 = vunpack.c.h.b16 %v3226
    %v3389 = vunpack.c.l.b16 %v3227
    %v3390 = vunpack.c.h.b16 %v3227
    %v3391 = vunpack.c.l.b16 %v3228
    %v3392 = vunpack.c.h.b16 %v3228
    %v3393 = vunpack.c.l.b16 %v3229
    %v3394 = vunpack.c.h.b16 %v3229
    %v3395 = vunpack.c.l.b16 %v3230
    %v3396 = vunpack.c.h.b16 %v3230
    %v3397 = vunpack.c.l.b16 %v3231
    %v3398 = vunpack.c.h.b16 %v3231
    %v3399 = vunpack.c.l.b16 %v3232
    %v3400 = vunpack.c.h.b16 %v3232
    %v3401 = vunpack.c.l.b16 %v3233
    %v3402 = vunpack.c.h.b16 %v3233
    %v3403 = vunpack.c.l.b16 %v3234
    %v3404 = vunpack.c.h.b16 %v3234
    %v3405 = vunpack.c.l.b16 %v3235
    %v3406 = vunpack.c.h.b16 %v3235
    %v3407 = vunpack.c.l.b16 %v3236
    %v3408 = vunpack.c.h.b16 %v3236
    %v3409 = vunpack.c.l.b16 %v3237
    %v3410 = vunpack.c.h.b16 %v3237
    %v3411 = vunpack.c.l.b16 %v3238
    %v3412 = vunpack.c.h.b16 %v3238
    %v3413 = vunpack.c.l.b16 %v3239
    %v3414 = vunpack.c.h.b16 %v3239
    %v3415 = vunpack.c.l.b16 %v3240
    %v3416 = vunpack.c.h.b16 %v3240
    %v3417 = vunpack.c.l.b16 %v3241
    %v3418 = vunpack.c.h.b16 %v3241
    %v3419 = vunpack.c.l.b16 %v3242
    %v3420 = vunpack.c.h.b16 %v3242
    %v3421 = vunpack.c.l.b16 %v3243
    %v3422 = vunpack.c.h.b16 %v3243
    %v3423 = vunpack.c.l.b16 %v3244
    %v3424 = vunpack.c.h.b16 %v3244
    %v3425 = vunpack.c.l.b16 %v3245
    %v3426 = vunpack.c.h.b16 %v3245
    %v3427 = vunpack.c.l.b16 %v3246
    %v3428 = vunpack.c.h.b16 %v3246
    %v3429 = vunpack.c.l.b16 %v3247
    %v3430 = vunpack.c.h.b16 %v3247
    %v3431 = vunpack.c.l.b16 %v3248
    %v3432 = vunpack.c.h.b16 %v3248
    %v3433 = vunpack.c.l.b16 %v3249
    %v3434 = vunpack.c.h.b16 %v3249
    %v3435 = vunpack.c.l.b16 %v3250
    %v3436 = vunpack.c.h.b16 %v3250
    %v3437 = vunpack.c.l.b16 %v3251
    %v3438 = vunpack.c.h.b16 %v3251
    %v3439 = vunpack.c.l.b16 %v3252
    %v3440 = vunpack.c.h.b16 %v3252
    %v3441 = vunpack.c.l.b16 %v3253
    %v3442 = vunpack.c.h.b16 %v3253
    %v3443 = vunpack.c.l.b16 %v3254
    %v3444 = vunpack.c.h.b16 %v3254
    %v3445 = vunpack.c.l.b16 %v3255
    %v3446 = vunpack.c.h.b16 %v3255
    %v3447 = vunpack.c.l.b16 %v3256
    %v3448 = vunpack.c.h.b16 %v3256
    %v3449 = vpack.c.b16 %v3323, %v3321
    %v3450 = vpack.c.b16 %v3324, %v3322
    %v3451 = vpack.c.b16 %v3327, %v3325
    %v3452 = vpack.c.b16 %v3328, %v3326
    %v3453 = vpack.c.b16 %v3331, %v3329
    %v3454 = vpack.c.b16 %v3332, %v3330
    %v3455 = vpack.c.b16 %v3335, %v3333
    %v3456 = vpack.c.b16 %v3336, %v3334
    %v3457 = vpack.c.b16 %v3339, %v3337
    %v3458 = vpack.c.b16 %v3340, %v3338
    %v3459 = vpack.c.b16 %v3343, %v3341
    %v3460 = vpack.c.b16 %v3344, %v3342
    %v3461 = vpack.c.b16 %v3347, %v3345
    %v3462 = vpack.c.b16 %v3348, %v3346
    %v3463 = vpack.c.b16 %v3351, %v3349
    %v3464 = vpack.c.b16 %v3352, %v3350
    %v3465 = vpack.c.b16 %v3355, %v3353
    %v3466 = vpack.c.b16 %v3356, %v3354
    %v3467 = vpack.c.b16 %v3359, %v3357
    %v3468 = vpack.c.b16 %v3360, %v3358
    %v3469 = vpack.c.b16 %v3363, %v3361
    %v3470 = vpack.c.b16 %v3364, %v3362
    %v3471 = vpack.c.b16 %v3367, %v3365
    %v3472 = vpack.c.b16 %v3368, %v3366
    %v3473 = vpack.c.b16 %v3371, %v3369
    %v3474 = vpack.c.b16 %v3372, %v3370
    %v3475 = vpack.c.b16 %v3375, %v3373
    %v3476 = vpack.c.b16 %v3376, %v3374
    %v3477 = vpack.c.b16 %v3379, %v3377
    %v3478 = vpack.c.b16 %v3380, %v3378
    %v3479 = vpack.c.b16 %v3383, %v3381
    %v3480 = vpack.c.b16 %v3384, %v3382
    %v3481 = vpack.c.b16 %v3387, %v3385
    %v3482 = vpack.c.b16 %v3388, %v3386
    %v3483 = vpack.c.b16 %v3391, %v3389
    %v3484 = vpack.c.b16 %v3392, %v3390
    %v3485 = vpack.c.b16 %v3395, %v3393
    %v3486 = vpack.c.b16 %v3396, %v3394
    %v3487 = vpack.c.b16 %v3399, %v3397
    %v3488 = vpack.c.b16 %v3400, %v3398
    %v3489 = vpack.c.b16 %v3403, %v3401
    %v3490 = vpack.c.b16 %v3404, %v3402
    %v3491 = vpack.c.b16 %v3407, %v3405
    %v3492 = vpack.c.b16 %v3408, %v3406
    %v3493 = vpack.c.b16 %v3411, %v3409
    %v3494 = vpack.c.b16 %v3412, %v3410
    %v3495 = vpack.c.b16 %v3415, %v3413
    %v3496 = vpack.c.b16 %v3416, %v3414
    %v3497 = vpack.c.b16 %v3419, %v3417
    %v3498 = vpack.c.b16 %v3420, %v3418
    %v3499 = vpack.c.b16 %v3423, %v3421
    %v3500 = vpack.c.b16 %v3424, %v3422
    %v3501 = vpack.c.b16 %v3427, %v3425
    %v3502 = vpack.c.b16 %v3428, %v3426
    %v3503 = vpack.c.b16 %v3431, %v3429
    %v3504 = vpack.c.b16 %v3432, %v3430
    %v3505 = vpack.c.b16 %v3435, %v3433
    %v3506 = vpack.c.b16 %v3436, %v3434
    %v3507 = vpack.c.b16 %v3439, %v3437
    %v3508 = vpack.c.b16 %v3440, %v3438
    %v3509 = vpack.c.b16 %v3443, %v3441
    %v3510 = vpack.c.b16 %v3444, %v3442
    %v3511 = vpack.c.b16 %v3447, %v3445
    %v3512 = vpack.c.b16 %v3448, %v3446
    %3577 = vmatprep.subr.bf16.mxu0 %v3464
    %3578 = vmatpush1.bf16.msra.mxu0 %v3463
    %3579 = vmatprep.subr.bf16.mxu0 %v3462
    %3580 = vmatpush1.bf16.msra.mxu0 %v3461
    %3581 = vmatprep.subr.bf16.mxu0 %v3460
    %3582 = vmatpush1.bf16.msra.mxu0 %v3459
    %3583 = vmatprep.subr.bf16.mxu0 %v3458
    %3584 = vmatpush1.bf16.msra.mxu0 %v3457
    %3585 = vmatprep.subr.bf16.mxu0 %v3456
    %3586 = vmatpush1.bf16.msra.mxu0 %v3455
    %3587 = vmatprep.subr.bf16.mxu0 %v3454
    %3588 = vmatpush1.bf16.msra.mxu0 %v3453
    %3589 = vmatprep.subr.bf16.mxu0 %v3452
    %3590 = vmatpush1.bf16.msra.mxu0 %v3451
    %3591 = vmatprep.subr.bf16.mxu0 %v3450
    %3592 = vmatpush1.bf16.msra.mxu0 %v3449
    %3593 = vmatprep.subr.bf16.mxu0 %v3480
    %3594 = vmatpush2.bf16.msra.mxu0 %v3479
    %3595 = vmatprep.subr.bf16.mxu0 %v3478
    %3596 = vmatpush2.bf16.msra.mxu0 %v3477
    %3597 = vmatprep.subr.bf16.mxu0 %v3476
    %3598 = vmatpush2.bf16.msra.mxu0 %v3475
    %3599 = vmatprep.subr.bf16.mxu0 %v3474
    %3600 = vmatpush2.bf16.msra.mxu0 %v3473
    %3601 = vmatprep.subr.bf16.mxu0 %v3472
    %3602 = vmatpush2.bf16.msra.mxu0 %v3471
    %3603 = vmatprep.subr.bf16.mxu0 %v3470
    %3604 = vmatpush2.bf16.msra.mxu0 %v3469
    %3605 = vmatprep.subr.bf16.mxu0 %v3468
    %3606 = vmatpush2.bf16.msra.mxu0 %v3467
    %3607 = vmatprep.subr.bf16.mxu0 %v3466
    %3608 = vmatpush2.bf16.msra.mxu0 %v3465
    %3609 = vmatprep.mubr.bf16.mxu0 %v3190
    %3610 = vmatmul.mubr.bf16.gmra.mxu0 %v3189
    %v3611 = vpop.f32.mrf.mxu0
    %v3612 = vadd.f32 0.0, %v3611
    %v3613 = vpop.f32.mrf.mxu0
    %v3614 = vadd.f32 0.0, %v3613
    %v3615 = vpop.f32.mrf.mxu0
    %v3616 = vadd.f32 0.0, %v3615
    %v3617 = vpop.f32.mrf.mxu0
    %v3618 = vadd.f32 0.0, %v3617
    %3619 = vdwg.mxu0
    %3620 = vmatprep.subr.bf16.mxu0 %v3496
    %3621 = vmatpush1.bf16.msra.mxu0 %v3495
    %3622 = vmatprep.subr.bf16.mxu0 %v3494
    %3623 = vmatpush1.bf16.msra.mxu0 %v3493
    %3624 = vmatprep.subr.bf16.mxu0 %v3492
    %3625 = vmatpush1.bf16.msra.mxu0 %v3491
    %3626 = vmatprep.subr.bf16.mxu0 %v3490
    %3627 = vmatpush1.bf16.msra.mxu0 %v3489
    %3628 = vmatprep.subr.bf16.mxu0 %v3488
    %3629 = vmatpush1.bf16.msra.mxu0 %v3487
    %3630 = vmatprep.subr.bf16.mxu0 %v3486
    %3631 = vmatpush1.bf16.msra.mxu0 %v3485
    %3632 = vmatprep.subr.bf16.mxu0 %v3484
    %3633 = vmatpush1.bf16.msra.mxu0 %v3483
    %3634 = vmatprep.subr.bf16.mxu0 %v3482
    %3635 = vmatpush1.bf16.msra.mxu0 %v3481
    %3636 = vmatprep.subr.bf16.mxu0 %v3512
    %3637 = vmatpush2.bf16.msra.mxu0 %v3511
    %3638 = vmatprep.subr.bf16.mxu0 %v3510
    %3639 = vmatpush2.bf16.msra.mxu0 %v3509
    %3640 = vmatprep.subr.bf16.mxu0 %v3508
    %3641 = vmatpush2.bf16.msra.mxu0 %v3507
    %3642 = vmatprep.subr.bf16.mxu0 %v3506
    %3643 = vmatpush2.bf16.msra.mxu0 %v3505
    %3644 = vmatprep.subr.bf16.mxu0 %v3504
    %3645 = vmatpush2.bf16.msra.mxu0 %v3503
    %3646 = vmatprep.subr.bf16.mxu0 %v3502
    %3647 = vmatpush2.bf16.msra.mxu0 %v3501
    %3648 = vmatprep.subr.bf16.mxu0 %v3500
    %3649 = vmatpush2.bf16.msra.mxu0 %v3499
    %3650 = vmatprep.subr.bf16.mxu0 %v3498
    %3651 = vmatpush2.bf16.msra.mxu0 %v3497
    %3652 = vmatprep.mubr.bf16.mxu0 %v3192
    %3653 = vmatmul.mubr.bf16.gmra.mxu0 %v3191
    %v3654 = vpop.f32.mrf.mxu0
    %v3655 = vadd.f32 %v3612, %v3654
    %v3656 = vpop.f32.mrf.mxu0
    %v3657 = vadd.f32 %v3614, %v3656
    %v3658 = vpop.f32.mrf.mxu0
    %v3659 = vadd.f32 %v3616, %v3658
    %v3660 = vpop.f32.mrf.mxu0
    %v3661 = vadd.f32 %v3618, %v3660
    %3662 = vdwg.mxu0
    %v3663 = vld [vmem:[#allocation17 + $0xc] sm:$0x3]
    %v3664 = vpack.c.bf16 %v3659, %v3655
    %v3665 = vpack.c.bf16 %v3661, %v3657
    %v3667 = vlaneseq
    %v3668 = vshrl.u32 %v3667, 7
    %v3669 = vsub.s32 0, %v3668
    %v3670 = vrot.slane %v3663, %v3669
    %v3671 = vlaneseq
    %v3672 = vshrl.u32 %v3671, 7
    %v3673 = vsub.s32 1, %v3672
    %v3674 = vrot.slane %v3663, %v3673
    %v3677 = vpack.c.bf16 %v3670, %v3670
    %v3678 = vpack.c.bf16 %v3674, %v3674
    %v3680 = vpack.i.b16 %v3677, %v3677
    %v3682 = vlaneseq
    %v3683 = vshrl.u32 %v3682, 7
    %v3684 = vsub.s32 0, %v3683
    %v3685 = vrot.slane %v3680, %v3684
    %v3687 = vpack.i.b16 %v3678, %v3678
    %v3689 = vlaneseq
    %v3690 = vshrl.u32 %v3689, 7
    %v3691 = vsub.s32 0, %v3690
    %v3692 = vrot.slane %v3687, %v3691
    %v3693 = vadd.bf16 %v3664, %v3685
    %v3694 = vadd.bf16 %v3665, %v3692
    %v3695 = vmax.bf16 %v3693, 0
    %v3696 = vmax.bf16 %v3694, 0
    %v3697 = vld [vmem:[#allocation10] sm:$0xf]
    %v3698 = vld [vmem:[#allocation10 + $0x4] sm:$0xf]
    %v3699 = vld [vmem:[#allocation10 + $0x8] sm:$0xf]
    %v3700 = vld [vmem:[#allocation10 + $0xc] sm:$0xf]
    %v3701 = vld [vmem:[#allocation10 + $0x10] sm:$0xf]
    %v3702 = vld [vmem:[#allocation10 + $0x14] sm:$0xf]
    %v3703 = vld [vmem:[#allocation10 + $0x18] sm:$0xf]
    %v3704 = vld [vmem:[#allocation10 + $0x1c] sm:$0xf]
    %v3705 = vld [vmem:[#allocation10 + $0x20] sm:$0xf]
    %v3706 = vld [vmem:[#allocation10 + $0x24] sm:$0xf]
    %v3707 = vld [vmem:[#allocation10 + $0x28] sm:$0xf]
    %v3708 = vld [vmem:[#allocation10 + $0x2c] sm:$0xf]
    %v3709 = vld [vmem:[#allocation10 + $0x30] sm:$0xf]
    %v3710 = vld [vmem:[#allocation10 + $0x34] sm:$0xf]
    %v3711 = vld [vmem:[#allocation10 + $0x38] sm:$0xf]
    %v3712 = vld [vmem:[#allocation10 + $0x3c] sm:$0xf]
    %v3713 = vld [vmem:[#allocation10 + $0x40] sm:$0xf]
    %v3714 = vld [vmem:[#allocation10 + $0x44] sm:$0xf]
    %v3715 = vld [vmem:[#allocation10 + $0x48] sm:$0xf]
    %v3716 = vld [vmem:[#allocation10 + $0x4c] sm:$0xf]
    %v3717 = vld [vmem:[#allocation10 + $0x50] sm:$0xf]
    %v3718 = vld [vmem:[#allocation10 + $0x54] sm:$0xf]
    %v3719 = vld [vmem:[#allocation10 + $0x58] sm:$0xf]
    %v3720 = vld [vmem:[#allocation10 + $0x5c] sm:$0xf]
    %v3721 = vld [vmem:[#allocation10 + $0x60] sm:$0xf]
    %v3722 = vld [vmem:[#allocation10 + $0x64] sm:$0xf]
    %v3723 = vld [vmem:[#allocation10 + $0x68] sm:$0xf]
    %v3724 = vld [vmem:[#allocation10 + $0x6c] sm:$0xf]
    %v3725 = vld [vmem:[#allocation10 + $0x70] sm:$0xf]
    %v3726 = vld [vmem:[#allocation10 + $0x74] sm:$0xf]
    %v3727 = vld [vmem:[#allocation10 + $0x78] sm:$0xf]
    %v3728 = vld [vmem:[#allocation10 + $0x7c] sm:$0xf]
    %v3729 = vld [vmem:[#allocation17 + $0xe] sm:$0x1]
    %v3731 = vlaneseq
    %v3732 = vshrl.u32 %v3731, 7
    %v3733 = vsub.s32 0, %v3732
    %v3734 = vrot.slane %v3729, %v3733
    %v3768 = vunpack.c.l.b16 %v3697
    %v3769 = vunpack.c.l.b16 %v3698
    %v3770 = vunpack.c.l.b16 %v3699
    %v3771 = vunpack.c.l.b16 %v3700
    %v3772 = vunpack.c.l.b16 %v3701
    %v3773 = vunpack.c.l.b16 %v3702
    %v3774 = vunpack.c.l.b16 %v3703
    %v3775 = vunpack.c.l.b16 %v3704
    %v3776 = vunpack.c.l.b16 %v3705
    %v3777 = vunpack.c.l.b16 %v3706
    %v3778 = vunpack.c.l.b16 %v3707
    %v3779 = vunpack.c.l.b16 %v3708
    %v3780 = vunpack.c.l.b16 %v3709
    %v3781 = vunpack.c.l.b16 %v3710
    %v3782 = vunpack.c.l.b16 %v3711
    %v3783 = vunpack.c.l.b16 %v3712
    %v3784 = vunpack.c.l.b16 %v3713
    %v3785 = vunpack.c.l.b16 %v3714
    %v3786 = vunpack.c.l.b16 %v3715
    %v3787 = vunpack.c.l.b16 %v3716
    %v3788 = vunpack.c.l.b16 %v3717
    %v3789 = vunpack.c.l.b16 %v3718
    %v3790 = vunpack.c.l.b16 %v3719
    %v3791 = vunpack.c.l.b16 %v3720
    %v3792 = vunpack.c.l.b16 %v3721
    %v3793 = vunpack.c.l.b16 %v3722
    %v3794 = vunpack.c.l.b16 %v3723
    %v3795 = vunpack.c.l.b16 %v3724
    %v3796 = vunpack.c.l.b16 %v3725
    %v3797 = vunpack.c.l.b16 %v3726
    %v3798 = vunpack.c.l.b16 %v3727
    %v3799 = vunpack.c.l.b16 %v3728
    %v3800 = vpack.c.b16 %v3769, %v3768
    %v3801 = vpack.c.b16 %v3771, %v3770
    %v3802 = vpack.c.b16 %v3773, %v3772
    %v3803 = vpack.c.b16 %v3775, %v3774
    %v3804 = vpack.c.b16 %v3777, %v3776
    %v3805 = vpack.c.b16 %v3779, %v3778
    %v3806 = vpack.c.b16 %v3781, %v3780
    %v3807 = vpack.c.b16 %v3783, %v3782
    %v3808 = vpack.c.b16 %v3785, %v3784
    %v3809 = vpack.c.b16 %v3787, %v3786
    %v3810 = vpack.c.b16 %v3789, %v3788
    %v3811 = vpack.c.b16 %v3791, %v3790
    %v3812 = vpack.c.b16 %v3793, %v3792
    %v3813 = vpack.c.b16 %v3795, %v3794
    %v3814 = vpack.c.b16 %v3797, %v3796
    %v3815 = vpack.c.b16 %v3799, %v3798
    %3832 = vmatprep.subr.bf16.mxu0 0
    %3833 = vmatpush1.bf16.msra.mxu0 %v3807
    %3834 = vmatprep.subr.bf16.mxu0 0
    %3835 = vmatpush1.bf16.msra.mxu0 %v3806
    %3836 = vmatprep.subr.bf16.mxu0 0
    %3837 = vmatpush1.bf16.msra.mxu0 %v3805
    %3838 = vmatprep.subr.bf16.mxu0 0
    %3839 = vmatpush1.bf16.msra.mxu0 %v3804
    %3840 = vmatprep.subr.bf16.mxu0 0
    %3841 = vmatpush1.bf16.msra.mxu0 %v3803
    %3842 = vmatprep.subr.bf16.mxu0 0
    %3843 = vmatpush1.bf16.msra.mxu0 %v3802
    %3844 = vmatprep.subr.bf16.mxu0 0
    %3845 = vmatpush1.bf16.msra.mxu0 %v3801
    %3846 = vmatprep.subr.bf16.mxu0 0
    %3847 = vmatpush1.bf16.msra.mxu0 %v3800
    %3848 = vmatprep.subr.bf16.mxu0 0
    %3849 = vmatpush2.bf16.msra.mxu0 %v3815
    %3850 = vmatprep.subr.bf16.mxu0 0
    %3851 = vmatpush2.bf16.msra.mxu0 %v3814
    %3852 = vmatprep.subr.bf16.mxu0 0
    %3853 = vmatpush2.bf16.msra.mxu0 %v3813
    %3854 = vmatprep.subr.bf16.mxu0 0
    %3855 = vmatpush2.bf16.msra.mxu0 %v3812
    %3856 = vmatprep.subr.bf16.mxu0 0
    %3857 = vmatpush2.bf16.msra.mxu0 %v3811
    %3858 = vmatprep.subr.bf16.mxu0 0
    %3859 = vmatpush2.bf16.msra.mxu0 %v3810
    %3860 = vmatprep.subr.bf16.mxu0 0
    %3861 = vmatpush2.bf16.msra.mxu0 %v3809
    %3862 = vmatprep.subr.bf16.mxu0 0
    %3863 = vmatpush2.bf16.msra.mxu0 %v3808
    %3864 = vmatprep.mubr.bf16.mxu0 %v3696
    %3865 = vmatmul.mubr.bf16.gmra.mxu0 %v3695
    %v3866 = vpop.f32.mrf.mxu0
    %v3867 = vadd.f32 %v3734, %v3866
    %v3868 = vpop.f32.mrf.mxu0
    %v3869 = vpop.f32.mrf.mxu0
    %v3870 = vadd.f32 %v3734, %v3869
    %v3871 = vpop.f32.mrf.mxu0
    %3872 = vdwg.mxu0
    %v3873 = vpack.c.bf16 %v3870, %v3867
    %v3874 = vld [vmem:[#allocation11] sm:$0xff]
    %v3875 = vld [vmem:[#allocation11 + $0x8] sm:$0xff]
    %v3876 = vld [vmem:[#allocation11 + $0x10] sm:$0xff]
    %v3877 = vld [vmem:[#allocation11 + $0x18] sm:$0xff]
    %v3878 = vld [vmem:[#allocation11 + $0x20] sm:$0xff]
    %v3879 = vld [vmem:[#allocation11 + $0x28] sm:$0xff]
    %v3880 = vld [vmem:[#allocation11 + $0x30] sm:$0xff]
    %v3881 = vld [vmem:[#allocation11 + $0x38] sm:$0xff]
    %v3882 = vld [vmem:[#allocation11 + $0x40] sm:$0xff]
    %v3883 = vld [vmem:[#allocation11 + $0x48] sm:$0xff]
    %v3884 = vld [vmem:[#allocation11 + $0x50] sm:$0xff]
    %v3885 = vld [vmem:[#allocation11 + $0x58] sm:$0xff]
    %v3886 = vld [vmem:[#allocation11 + $0x60] sm:$0xff]
    %v3887 = vld [vmem:[#allocation11 + $0x68] sm:$0xff]
    %v3888 = vld [vmem:[#allocation11 + $0x70] sm:$0xff]
    %v3889 = vld [vmem:[#allocation11 + $0x78] sm:$0xff]
    %v3906 = vunpack.c.l.b16 %v3874
    %v3907 = vunpack.c.h.b16 %v3874
    %v3908 = vunpack.c.l.b16 %v3875
    %v3909 = vunpack.c.h.b16 %v3875
    %v3910 = vunpack.c.l.b16 %v3876
    %v3911 = vunpack.c.h.b16 %v3876
    %v3912 = vunpack.c.l.b16 %v3877
    %v3913 = vunpack.c.h.b16 %v3877
    %v3914 = vunpack.c.l.b16 %v3878
    %v3915 = vunpack.c.h.b16 %v3878
    %v3916 = vunpack.c.l.b16 %v3879
    %v3917 = vunpack.c.h.b16 %v3879
    %v3918 = vunpack.c.l.b16 %v3880
    %v3919 = vunpack.c.h.b16 %v3880
    %v3920 = vunpack.c.l.b16 %v3881
    %v3921 = vunpack.c.h.b16 %v3881
    %v3922 = vunpack.c.l.b16 %v3882
    %v3923 = vunpack.c.h.b16 %v3882
    %v3924 = vunpack.c.l.b16 %v3883
    %v3925 = vunpack.c.h.b16 %v3883
    %v3926 = vunpack.c.l.b16 %v3884
    %v3927 = vunpack.c.h.b16 %v3884
    %v3928 = vunpack.c.l.b16 %v3885
    %v3929 = vunpack.c.h.b16 %v3885
    %v3930 = vunpack.c.l.b16 %v3886
    %v3931 = vunpack.c.h.b16 %v3886
    %v3932 = vunpack.c.l.b16 %v3887
    %v3933 = vunpack.c.h.b16 %v3887
    %v3934 = vunpack.c.l.b16 %v3888
    %v3935 = vunpack.c.h.b16 %v3888
    %v3936 = vunpack.c.l.b16 %v3889
    %v3937 = vunpack.c.h.b16 %v3889
    %v3938 = vpack.c.b16 %v3908, %v3906
    %v3939 = vpack.c.b16 %v3909, %v3907
    %v3940 = vpack.c.b16 %v3912, %v3910
    %v3941 = vpack.c.b16 %v3913, %v3911
    %v3942 = vpack.c.b16 %v3916, %v3914
    %v3943 = vpack.c.b16 %v3917, %v3915
    %v3944 = vpack.c.b16 %v3920, %v3918
    %v3945 = vpack.c.b16 %v3921, %v3919
    %v3946 = vpack.c.b16 %v3924, %v3922
    %v3947 = vpack.c.b16 %v3925, %v3923
    %v3948 = vpack.c.b16 %v3928, %v3926
    %v3949 = vpack.c.b16 %v3929, %v3927
    %v3950 = vpack.c.b16 %v3932, %v3930
    %v3951 = vpack.c.b16 %v3933, %v3931
    %v3952 = vpack.c.b16 %v3936, %v3934
    %v3953 = vpack.c.b16 %v3937, %v3935
    %3970 = vmatprep.subr.bf16.mxu0 %v3953
    %3971 = vmatpush1.bf16.msra.mxu0 %v3952
    %3972 = vmatprep.subr.bf16.mxu0 %v3951
    %3973 = vmatpush1.bf16.msra.mxu0 %v3950
    %3974 = vmatprep.subr.bf16.mxu0 %v3949
    %3975 = vmatpush1.bf16.msra.mxu0 %v3948
    %3976 = vmatprep.subr.bf16.mxu0 %v3947
    %3977 = vmatpush1.bf16.msra.mxu0 %v3946
    %3978 = vmatprep.subr.bf16.mxu0 %v3945
    %3979 = vmatpush1.bf16.msra.mxu0 %v3944
    %3980 = vmatprep.subr.bf16.mxu0 %v3943
    %3981 = vmatpush1.bf16.msra.mxu0 %v3942
    %3982 = vmatprep.subr.bf16.mxu0 %v3941
    %3983 = vmatpush1.bf16.msra.mxu0 %v3940
    %3984 = vmatprep.subr.bf16.mxu0 %v3939
    %3985 = vmatpush1.bf16.msra.mxu0 %v3938
    %3986 = vmatprep.subr.bf16.mxu0 0
    %3987 = vmatpush2.bf16.msra.mxu0 0
    %3988 = vmatprep.subr.bf16.mxu0 0
    %3989 = vmatpush2.bf16.msra.mxu0 0
    %3990 = vmatprep.subr.bf16.mxu0 0
    %3991 = vmatpush2.bf16.msra.mxu0 0
    %3992 = vmatprep.subr.bf16.mxu0 0
    %3993 = vmatpush2.bf16.msra.mxu0 0
    %3994 = vmatprep.subr.bf16.mxu0 0
    %3995 = vmatpush2.bf16.msra.mxu0 0
    %3996 = vmatprep.subr.bf16.mxu0 0
    %3997 = vmatpush2.bf16.msra.mxu0 0
    %3998 = vmatprep.subr.bf16.mxu0 0
    %3999 = vmatpush2.bf16.msra.mxu0 0
    %4000 = vmatprep.subr.bf16.mxu0 0
    %4001 = vmatpush2.bf16.msra.mxu0 0
    %4002 = vmatprep.mubr.bf16.mxu0 0
    %4003 = vmatmul.mubr.bf16.gmra.mxu0 %v3873
    %v4004 = vpop.f32.mrf.mxu0
    %v4005 = vadd.f32 0.0, %v4004
    %v4006 = vpop.f32.mrf.mxu0
    %v4007 = vadd.f32 0.0, %v4006
    %v4008 = vpop.f32.mrf.mxu0
    %v4009 = vadd.f32 0.0, %v4008
    %v4010 = vpop.f32.mrf.mxu0
    %v4011 = vadd.f32 0.0, %v4010
    %4012 = vdwg.mxu0
    %v4013 = vld [vmem:[#allocation17 + $0xf] sm:$0x3]
    %v4014 = vpack.c.bf16 %v4009, %v4005
    %v4015 = vpack.c.bf16 %v4011, %v4007
    %v4017 = vlaneseq
    %v4018 = vshrl.u32 %v4017, 7
    %v4019 = vsub.s32 0, %v4018
    %v4020 = vrot.slane %v4013, %v4019
    %v4021 = vlaneseq
    %v4022 = vshrl.u32 %v4021, 7
    %v4023 = vsub.s32 1, %v4022
    %v4024 = vrot.slane %v4013, %v4023
    %v4027 = vpack.c.bf16 %v4020, %v4020
    %v4028 = vpack.c.bf16 %v4024, %v4024
    %v4030 = vpack.i.b16 %v4027, %v4027
    %v4032 = vlaneseq
    %v4033 = vshrl.u32 %v4032, 7
    %v4034 = vsub.s32 0, %v4033
    %v4035 = vrot.slane %v4030, %v4034
    %v4037 = vpack.i.b16 %v4028, %v4028
    %v4039 = vlaneseq
    %v4040 = vshrl.u32 %v4039, 7
    %v4041 = vsub.s32 0, %v4040
    %v4042 = vrot.slane %v4037, %v4041
    %v4043 = vadd.bf16 %v4014, %v4035
    %v4044 = vadd.bf16 %v4015, %v4042
    %v4045 = vmax.bf16 %v4043, 0
    %v4046 = vmax.bf16 %v4044, 0
    %v4047 = vld [vmem:[#allocation13] sm:$0xff]
    %v4048 = vld [vmem:[#allocation13 + $0x8] sm:$0xff]
    %v4049 = vld [vmem:[#allocation13 + $0x10] sm:$0xff]
    %v4050 = vld [vmem:[#allocation13 + $0x18] sm:$0xff]
    %v4051 = vld [vmem:[#allocation13 + $0x20] sm:$0xff]
    %v4052 = vld [vmem:[#allocation13 + $0x28] sm:$0xff]
    %v4053 = vld [vmem:[#allocation13 + $0x30] sm:$0xff]
    %v4054 = vld [vmem:[#allocation13 + $0x38] sm:$0xff]
    %v4055 = vld [vmem:[#allocation13 + $0x40] sm:$0xff]
    %v4056 = vld [vmem:[#allocation13 + $0x48] sm:$0xff]
    %v4057 = vld [vmem:[#allocation13 + $0x50] sm:$0xff]
    %v4058 = vld [vmem:[#allocation13 + $0x58] sm:$0xff]
    %v4059 = vld [vmem:[#allocation13 + $0x60] sm:$0xff]
    %v4060 = vld [vmem:[#allocation13 + $0x68] sm:$0xff]
    %v4061 = vld [vmem:[#allocation13 + $0x70] sm:$0xff]
    %v4062 = vld [vmem:[#allocation13 + $0x78] sm:$0xff]
    %v4063 = vld [vmem:[#allocation13 + $0x80] sm:$0xff]
    %v4064 = vld [vmem:[#allocation13 + $0x88] sm:$0xff]
    %v4065 = vld [vmem:[#allocation13 + $0x90] sm:$0xff]
    %v4066 = vld [vmem:[#allocation13 + $0x98] sm:$0xff]
    %v4067 = vld [vmem:[#allocation13 + $0xa0] sm:$0xff]
    %v4068 = vld [vmem:[#allocation13 + $0xa8] sm:$0xff]
    %v4069 = vld [vmem:[#allocation13 + $0xb0] sm:$0xff]
    %v4070 = vld [vmem:[#allocation13 + $0xb8] sm:$0xff]
    %v4071 = vld [vmem:[#allocation13 + $0xc0] sm:$0xff]
    %v4072 = vld [vmem:[#allocation13 + $0xc8] sm:$0xff]
    %v4073 = vld [vmem:[#allocation13 + $0xd0] sm:$0xff]
    %v4074 = vld [vmem:[#allocation13 + $0xd8] sm:$0xff]
    %v4075 = vld [vmem:[#allocation13 + $0xe0] sm:$0xff]
    %v4076 = vld [vmem:[#allocation13 + $0xe8] sm:$0xff]
    %v4077 = vld [vmem:[#allocation13 + $0xf0] sm:$0xff]
    %v4078 = vld [vmem:[#allocation13 + $0xf8] sm:$0xff]
    %v4079 = vld [vmem:[#allocation13 + $0x100] sm:$0xff]
    %v4080 = vld [vmem:[#allocation13 + $0x108] sm:$0xff]
    %v4081 = vld [vmem:[#allocation13 + $0x110] sm:$0xff]
    %v4082 = vld [vmem:[#allocation13 + $0x118] sm:$0xff]
    %v4083 = vld [vmem:[#allocation13 + $0x120] sm:$0xff]
    %v4084 = vld [vmem:[#allocation13 + $0x128] sm:$0xff]
    %v4085 = vld [vmem:[#allocation13 + $0x130] sm:$0xff]
    %v4086 = vld [vmem:[#allocation13 + $0x138] sm:$0xff]
    %v4087 = vld [vmem:[#allocation13 + $0x140] sm:$0xff]
    %v4088 = vld [vmem:[#allocation13 + $0x148] sm:$0xff]
    %v4089 = vld [vmem:[#allocation13 + $0x150] sm:$0xff]
    %v4090 = vld [vmem:[#allocation13 + $0x158] sm:$0xff]
    %v4091 = vld [vmem:[#allocation13 + $0x160] sm:$0xff]
    %v4092 = vld [vmem:[#allocation13 + $0x168] sm:$0xff]
    %v4093 = vld [vmem:[#allocation13 + $0x170] sm:$0xff]
    %v4094 = vld [vmem:[#allocation13 + $0x178] sm:$0xff]
    %v4095 = vld [vmem:[#allocation13 + $0x180] sm:$0xff]
    %v4096 = vld [vmem:[#allocation13 + $0x188] sm:$0xff]
    %v4097 = vld [vmem:[#allocation13 + $0x190] sm:$0xff]
    %v4098 = vld [vmem:[#allocation13 + $0x198] sm:$0xff]
    %v4099 = vld [vmem:[#allocation13 + $0x1a0] sm:$0xff]
    %v4100 = vld [vmem:[#allocation13 + $0x1a8] sm:$0xff]
    %v4101 = vld [vmem:[#allocation13 + $0x1b0] sm:$0xff]
    %v4102 = vld [vmem:[#allocation13 + $0x1b8] sm:$0xff]
    %v4103 = vld [vmem:[#allocation13 + $0x1c0] sm:$0xff]
    %v4104 = vld [vmem:[#allocation13 + $0x1c8] sm:$0xff]
    %v4105 = vld [vmem:[#allocation13 + $0x1d0] sm:$0xff]
    %v4106 = vld [vmem:[#allocation13 + $0x1d8] sm:$0xff]
    %v4107 = vld [vmem:[#allocation13 + $0x1e0] sm:$0xff]
    %v4108 = vld [vmem:[#allocation13 + $0x1e8] sm:$0xff]
    %v4109 = vld [vmem:[#allocation13 + $0x1f0] sm:$0xff]
    %v4110 = vld [vmem:[#allocation13 + $0x1f8] sm:$0xff]
    %v4175 = vunpack.c.l.b16 %v4047
    %v4176 = vunpack.c.h.b16 %v4047
    %v4177 = vunpack.c.l.b16 %v4048
    %v4178 = vunpack.c.h.b16 %v4048
    %v4179 = vunpack.c.l.b16 %v4049
    %v4180 = vunpack.c.h.b16 %v4049
    %v4181 = vunpack.c.l.b16 %v4050
    %v4182 = vunpack.c.h.b16 %v4050
    %v4183 = vunpack.c.l.b16 %v4051
    %v4184 = vunpack.c.h.b16 %v4051
    %v4185 = vunpack.c.l.b16 %v4052
    %v4186 = vunpack.c.h.b16 %v4052
    %v4187 = vunpack.c.l.b16 %v4053
    %v4188 = vunpack.c.h.b16 %v4053
    %v4189 = vunpack.c.l.b16 %v4054
    %v4190 = vunpack.c.h.b16 %v4054
    %v4191 = vunpack.c.l.b16 %v4055
    %v4192 = vunpack.c.h.b16 %v4055
    %v4193 = vunpack.c.l.b16 %v4056
    %v4194 = vunpack.c.h.b16 %v4056
    %v4195 = vunpack.c.l.b16 %v4057
    %v4196 = vunpack.c.h.b16 %v4057
    %v4197 = vunpack.c.l.b16 %v4058
    %v4198 = vunpack.c.h.b16 %v4058
    %v4199 = vunpack.c.l.b16 %v4059
    %v4200 = vunpack.c.h.b16 %v4059
    %v4201 = vunpack.c.l.b16 %v4060
    %v4202 = vunpack.c.h.b16 %v4060
    %v4203 = vunpack.c.l.b16 %v4061
    %v4204 = vunpack.c.h.b16 %v4061
    %v4205 = vunpack.c.l.b16 %v4062
    %v4206 = vunpack.c.h.b16 %v4062
    %v4207 = vunpack.c.l.b16 %v4063
    %v4208 = vunpack.c.h.b16 %v4063
    %v4209 = vunpack.c.l.b16 %v4064
    %v4210 = vunpack.c.h.b16 %v4064
    %v4211 = vunpack.c.l.b16 %v4065
    %v4212 = vunpack.c.h.b16 %v4065
    %v4213 = vunpack.c.l.b16 %v4066
    %v4214 = vunpack.c.h.b16 %v4066
    %v4215 = vunpack.c.l.b16 %v4067
    %v4216 = vunpack.c.h.b16 %v4067
    %v4217 = vunpack.c.l.b16 %v4068
    %v4218 = vunpack.c.h.b16 %v4068
    %v4219 = vunpack.c.l.b16 %v4069
    %v4220 = vunpack.c.h.b16 %v4069
    %v4221 = vunpack.c.l.b16 %v4070
    %v4222 = vunpack.c.h.b16 %v4070
    %v4223 = vunpack.c.l.b16 %v4071
    %v4224 = vunpack.c.h.b16 %v4071
    %v4225 = vunpack.c.l.b16 %v4072
    %v4226 = vunpack.c.h.b16 %v4072
    %v4227 = vunpack.c.l.b16 %v4073
    %v4228 = vunpack.c.h.b16 %v4073
    %v4229 = vunpack.c.l.b16 %v4074
    %v4230 = vunpack.c.h.b16 %v4074
    %v4231 = vunpack.c.l.b16 %v4075
    %v4232 = vunpack.c.h.b16 %v4075
    %v4233 = vunpack.c.l.b16 %v4076
    %v4234 = vunpack.c.h.b16 %v4076
    %v4235 = vunpack.c.l.b16 %v4077
    %v4236 = vunpack.c.h.b16 %v4077
    %v4237 = vunpack.c.l.b16 %v4078
    %v4238 = vunpack.c.h.b16 %v4078
    %v4239 = vunpack.c.l.b16 %v4079
    %v4240 = vunpack.c.h.b16 %v4079
    %v4241 = vunpack.c.l.b16 %v4080
    %v4242 = vunpack.c.h.b16 %v4080
    %v4243 = vunpack.c.l.b16 %v4081
    %v4244 = vunpack.c.h.b16 %v4081
    %v4245 = vunpack.c.l.b16 %v4082
    %v4246 = vunpack.c.h.b16 %v4082
    %v4247 = vunpack.c.l.b16 %v4083
    %v4248 = vunpack.c.h.b16 %v4083
    %v4249 = vunpack.c.l.b16 %v4084
    %v4250 = vunpack.c.h.b16 %v4084
    %v4251 = vunpack.c.l.b16 %v4085
    %v4252 = vunpack.c.h.b16 %v4085
    %v4253 = vunpack.c.l.b16 %v4086
    %v4254 = vunpack.c.h.b16 %v4086
    %v4255 = vunpack.c.l.b16 %v4087
    %v4256 = vunpack.c.h.b16 %v4087
    %v4257 = vunpack.c.l.b16 %v4088
    %v4258 = vunpack.c.h.b16 %v4088
    %v4259 = vunpack.c.l.b16 %v4089
    %v4260 = vunpack.c.h.b16 %v4089
    %v4261 = vunpack.c.l.b16 %v4090
    %v4262 = vunpack.c.h.b16 %v4090
    %v4263 = vunpack.c.l.b16 %v4091
    %v4264 = vunpack.c.h.b16 %v4091
    %v4265 = vunpack.c.l.b16 %v4092
    %v4266 = vunpack.c.h.b16 %v4092
    %v4267 = vunpack.c.l.b16 %v4093
    %v4268 = vunpack.c.h.b16 %v4093
    %v4269 = vunpack.c.l.b16 %v4094
    %v4270 = vunpack.c.h.b16 %v4094
    %v4271 = vunpack.c.l.b16 %v4095
    %v4272 = vunpack.c.h.b16 %v4095
    %v4273 = vunpack.c.l.b16 %v4096
    %v4274 = vunpack.c.h.b16 %v4096
    %v4275 = vunpack.c.l.b16 %v4097
    %v4276 = vunpack.c.h.b16 %v4097
    %v4277 = vunpack.c.l.b16 %v4098
    %v4278 = vunpack.c.h.b16 %v4098
    %v4279 = vunpack.c.l.b16 %v4099
    %v4280 = vunpack.c.h.b16 %v4099
    %v4281 = vunpack.c.l.b16 %v4100
    %v4282 = vunpack.c.h.b16 %v4100
    %v4283 = vunpack.c.l.b16 %v4101
    %v4284 = vunpack.c.h.b16 %v4101
    %v4285 = vunpack.c.l.b16 %v4102
    %v4286 = vunpack.c.h.b16 %v4102
    %v4287 = vunpack.c.l.b16 %v4103
    %v4288 = vunpack.c.h.b16 %v4103
    %v4289 = vunpack.c.l.b16 %v4104
    %v4290 = vunpack.c.h.b16 %v4104
    %v4291 = vunpack.c.l.b16 %v4105
    %v4292 = vunpack.c.h.b16 %v4105
    %v4293 = vunpack.c.l.b16 %v4106
    %v4294 = vunpack.c.h.b16 %v4106
    %v4295 = vunpack.c.l.b16 %v4107
    %v4296 = vunpack.c.h.b16 %v4107
    %v4297 = vunpack.c.l.b16 %v4108
    %v4298 = vunpack.c.h.b16 %v4108
    %v4299 = vunpack.c.l.b16 %v4109
    %v4300 = vunpack.c.h.b16 %v4109
    %v4301 = vunpack.c.l.b16 %v4110
    %v4302 = vunpack.c.h.b16 %v4110
    %v4303 = vpack.c.b16 %v4179, %v4175
    %v4304 = vpack.c.b16 %v4180, %v4176
    %v4305 = vpack.c.b16 %v4181, %v4177
    %v4306 = vpack.c.b16 %v4182, %v4178
    %v4307 = vpack.c.b16 %v4187, %v4183
    %v4308 = vpack.c.b16 %v4188, %v4184
    %v4309 = vpack.c.b16 %v4189, %v4185
    %v4310 = vpack.c.b16 %v4190, %v4186
    %v4311 = vpack.c.b16 %v4195, %v4191
    %v4312 = vpack.c.b16 %v4196, %v4192
    %v4313 = vpack.c.b16 %v4197, %v4193
    %v4314 = vpack.c.b16 %v4198, %v4194
    %v4315 = vpack.c.b16 %v4203, %v4199
    %v4316 = vpack.c.b16 %v4204, %v4200
    %v4317 = vpack.c.b16 %v4205, %v4201
    %v4318 = vpack.c.b16 %v4206, %v4202
    %v4319 = vpack.c.b16 %v4211, %v4207
    %v4320 = vpack.c.b16 %v4212, %v4208
    %v4321 = vpack.c.b16 %v4213, %v4209
    %v4322 = vpack.c.b16 %v4214, %v4210
    %v4323 = vpack.c.b16 %v4219, %v4215
    %v4324 = vpack.c.b16 %v4220, %v4216
    %v4325 = vpack.c.b16 %v4221, %v4217
    %v4326 = vpack.c.b16 %v4222, %v4218
    %v4327 = vpack.c.b16 %v4227, %v4223
    %v4328 = vpack.c.b16 %v4228, %v4224
    %v4329 = vpack.c.b16 %v4229, %v4225
    %v4330 = vpack.c.b16 %v4230, %v4226
    %v4331 = vpack.c.b16 %v4235, %v4231
    %v4332 = vpack.c.b16 %v4236, %v4232
    %v4333 = vpack.c.b16 %v4237, %v4233
    %v4334 = vpack.c.b16 %v4238, %v4234
    %v4335 = vpack.c.b16 %v4243, %v4239
    %v4336 = vpack.c.b16 %v4244, %v4240
    %v4337 = vpack.c.b16 %v4245, %v4241
    %v4338 = vpack.c.b16 %v4246, %v4242
    %v4339 = vpack.c.b16 %v4251, %v4247
    %v4340 = vpack.c.b16 %v4252, %v4248
    %v4341 = vpack.c.b16 %v4253, %v4249
    %v4342 = vpack.c.b16 %v4254, %v4250
    %v4343 = vpack.c.b16 %v4259, %v4255
    %v4344 = vpack.c.b16 %v4260, %v4256
    %v4345 = vpack.c.b16 %v4261, %v4257
    %v4346 = vpack.c.b16 %v4262, %v4258
    %v4347 = vpack.c.b16 %v4267, %v4263
    %v4348 = vpack.c.b16 %v4268, %v4264
    %v4349 = vpack.c.b16 %v4269, %v4265
    %v4350 = vpack.c.b16 %v4270, %v4266
    %v4351 = vpack.c.b16 %v4275, %v4271
    %v4352 = vpack.c.b16 %v4276, %v4272
    %v4353 = vpack.c.b16 %v4277, %v4273
    %v4354 = vpack.c.b16 %v4278, %v4274
    %v4355 = vpack.c.b16 %v4283, %v4279
    %v4356 = vpack.c.b16 %v4284, %v4280
    %v4357 = vpack.c.b16 %v4285, %v4281
    %v4358 = vpack.c.b16 %v4286, %v4282
    %v4359 = vpack.c.b16 %v4291, %v4287
    %v4360 = vpack.c.b16 %v4292, %v4288
    %v4361 = vpack.c.b16 %v4293, %v4289
    %v4362 = vpack.c.b16 %v4294, %v4290
    %v4363 = vpack.c.b16 %v4299, %v4295
    %v4364 = vpack.c.b16 %v4300, %v4296
    %v4365 = vpack.c.b16 %v4301, %v4297
    %v4366 = vpack.c.b16 %v4302, %v4298
    %4431 = vmatprep.subr.bf16.mxu0 %v4332
    %4432 = vmatpush1.bf16.msra.mxu0 %v4331
    %4433 = vmatprep.subr.bf16.mxu0 %v4328
    %4434 = vmatpush1.bf16.msra.mxu0 %v4327
    %4435 = vmatprep.subr.bf16.mxu0 %v4324
    %4436 = vmatpush1.bf16.msra.mxu0 %v4323
    %4437 = vmatprep.subr.bf16.mxu0 %v4320
    %4438 = vmatpush1.bf16.msra.mxu0 %v4319
    %4439 = vmatprep.subr.bf16.mxu0 %v4316
    %4440 = vmatpush1.bf16.msra.mxu0 %v4315
    %4441 = vmatprep.subr.bf16.mxu0 %v4312
    %4442 = vmatpush1.bf16.msra.mxu0 %v4311
    %4443 = vmatprep.subr.bf16.mxu0 %v4308
    %4444 = vmatpush1.bf16.msra.mxu0 %v4307
    %4445 = vmatprep.subr.bf16.mxu0 %v4304
    %4446 = vmatpush1.bf16.msra.mxu0 %v4303
    %4447 = vmatprep.subr.bf16.mxu0 %v4364
    %4448 = vmatpush2.bf16.msra.mxu0 %v4363
    %4449 = vmatprep.subr.bf16.mxu0 %v4360
    %4450 = vmatpush2.bf16.msra.mxu0 %v4359
    %4451 = vmatprep.subr.bf16.mxu0 %v4356
    %4452 = vmatpush2.bf16.msra.mxu0 %v4355
    %4453 = vmatprep.subr.bf16.mxu0 %v4352
    %4454 = vmatpush2.bf16.msra.mxu0 %v4351
    %4455 = vmatprep.subr.bf16.mxu0 %v4348
    %4456 = vmatpush2.bf16.msra.mxu0 %v4347
    %4457 = vmatprep.subr.bf16.mxu0 %v4344
    %4458 = vmatpush2.bf16.msra.mxu0 %v4343
    %4459 = vmatprep.subr.bf16.mxu0 %v4340
    %4460 = vmatpush2.bf16.msra.mxu0 %v4339
    %4461 = vmatprep.subr.bf16.mxu0 %v4336
    %4462 = vmatpush2.bf16.msra.mxu0 %v4335
    %4463 = vmatprep.mubr.bf16.mxu0 %v4046
    %4464 = vmatmul.mubr.bf16.gmra.mxu0 %v4045
    %v4465 = vpop.f32.mrf.mxu0
    %v4466 = vadd.f32 0.0, %v4465
    %v4467 = vpop.f32.mrf.mxu0
    %v4468 = vadd.f32 0.0, %v4467
    %v4469 = vpop.f32.mrf.mxu0
    %v4470 = vadd.f32 0.0, %v4469
    %v4471 = vpop.f32.mrf.mxu0
    %v4472 = vadd.f32 0.0, %v4471
    %4473 = vdwg.mxu0
    %4474 = vmatprep.subr.bf16.mxu0 %v4334
    %4475 = vmatpush1.bf16.msra.mxu0 %v4333
    %4476 = vmatprep.subr.bf16.mxu0 %v4330
    %4477 = vmatpush1.bf16.msra.mxu0 %v4329
    %4478 = vmatprep.subr.bf16.mxu0 %v4326
    %4479 = vmatpush1.bf16.msra.mxu0 %v4325
    %4480 = vmatprep.subr.bf16.mxu0 %v4322
    %4481 = vmatpush1.bf16.msra.mxu0 %v4321
    %4482 = vmatprep.subr.bf16.mxu0 %v4318
    %4483 = vmatpush1.bf16.msra.mxu0 %v4317
    %4484 = vmatprep.subr.bf16.mxu0 %v4314
    %4485 = vmatpush1.bf16.msra.mxu0 %v4313
    %4486 = vmatprep.subr.bf16.mxu0 %v4310
    %4487 = vmatpush1.bf16.msra.mxu0 %v4309
    %4488 = vmatprep.subr.bf16.mxu0 %v4306
    %4489 = vmatpush1.bf16.msra.mxu0 %v4305
    %4490 = vmatprep.subr.bf16.mxu0 %v4366
    %4491 = vmatpush2.bf16.msra.mxu0 %v4365
    %4492 = vmatprep.subr.bf16.mxu0 %v4362
    %4493 = vmatpush2.bf16.msra.mxu0 %v4361
    %4494 = vmatprep.subr.bf16.mxu0 %v4358
    %4495 = vmatpush2.bf16.msra.mxu0 %v4357
    %4496 = vmatprep.subr.bf16.mxu0 %v4354
    %4497 = vmatpush2.bf16.msra.mxu0 %v4353
    %4498 = vmatprep.subr.bf16.mxu0 %v4350
    %4499 = vmatpush2.bf16.msra.mxu0 %v4349
    %4500 = vmatprep.subr.bf16.mxu0 %v4346
    %4501 = vmatpush2.bf16.msra.mxu0 %v4345
    %4502 = vmatprep.subr.bf16.mxu0 %v4342
    %4503 = vmatpush2.bf16.msra.mxu0 %v4341
    %4504 = vmatprep.subr.bf16.mxu0 %v4338
    %4505 = vmatpush2.bf16.msra.mxu0 %v4337
    %4506 = vmatprep.mubr.bf16.mxu0 %v4046
    %4507 = vmatmul.mubr.bf16.gmra.mxu0 %v4045
    %v4508 = vpop.f32.mrf.mxu0
    %v4509 = vadd.f32 0.0, %v4508
    %v4510 = vpop.f32.mrf.mxu0
    %v4511 = vadd.f32 0.0, %v4510
    %v4512 = vpop.f32.mrf.mxu0
    %v4513 = vadd.f32 0.0, %v4512
    %v4514 = vpop.f32.mrf.mxu0
    %v4515 = vadd.f32 0.0, %v4514
    %4516 = vdwg.mxu0
    %v4517 = vld [vmem:[#allocation17 + $0x11] sm:$0xf]
    %v4518 = vpack.c.bf16 %v4470, %v4466
    %v4519 = vpack.c.bf16 %v4472, %v4468
    %v4520 = vpack.c.bf16 %v4513, %v4509
    %v4521 = vpack.c.bf16 %v4515, %v4511
    %v4523 = vlaneseq
    %v4524 = vshrl.u32 %v4523, 7
    %v4525 = vsub.s32 0, %v4524
    %v4526 = vrot.slane %v4517, %v4525
    %v4527 = vlaneseq
    %v4528 = vshrl.u32 %v4527, 7
    %v4529 = vsub.s32 1, %v4528
    %v4530 = vrot.slane %v4517, %v4529
    %v4531 = vlaneseq
    %v4532 = vshrl.u32 %v4531, 7
    %v4533 = vsub.s32 2, %v4532
    %v4534 = vrot.slane %v4517, %v4533
    %v4535 = vlaneseq
    %v4536 = vshrl.u32 %v4535, 7
    %v4537 = vsub.s32 3, %v4536
    %v4538 = vrot.slane %v4517, %v4537
    %v4543 = vpack.c.bf16 %v4526, %v4526
    %v4544 = vpack.c.bf16 %v4530, %v4530
    %v4545 = vpack.c.bf16 %v4534, %v4534
    %v4546 = vpack.c.bf16 %v4538, %v4538
    %v4548 = vpack.i.b16 %v4543, %v4543
    %v4550 = vlaneseq
    %v4551 = vshrl.u32 %v4550, 7
    %v4552 = vsub.s32 0, %v4551
    %v4553 = vrot.slane %v4548, %v4552
    %v4555 = vpack.i.b16 %v4544, %v4544
    %v4557 = vlaneseq
    %v4558 = vshrl.u32 %v4557, 7
    %v4559 = vsub.s32 0, %v4558
    %v4560 = vrot.slane %v4555, %v4559
    %v4562 = vpack.i.b16 %v4545, %v4545
    %v4564 = vlaneseq
    %v4565 = vshrl.u32 %v4564, 7
    %v4566 = vsub.s32 0, %v4565
    %v4567 = vrot.slane %v4562, %v4566
    %v4569 = vpack.i.b16 %v4546, %v4546
    %v4571 = vlaneseq
    %v4572 = vshrl.u32 %v4571, 7
    %v4573 = vsub.s32 0, %v4572
    %v4574 = vrot.slane %v4569, %v4573
    %v4575 = vadd.bf16 %v4518, %v4553
    %v4576 = vadd.bf16 %v4519, %v4560
    %v4577 = vadd.bf16 %v4520, %v4567
    %v4578 = vadd.bf16 %v4521, %v4574
    %v4579 = vmax.bf16 %v4575, 0
    %v4580 = vmax.bf16 %v4576, 0
    %v4581 = vmax.bf16 %v4577, 0
    %v4582 = vmax.bf16 %v4578, 0
    %v4583 = vld [vmem:[#allocation14] sm:$0xff]
    %v4584 = vld [vmem:[#allocation14 + $0x8] sm:$0xff]
    %v4585 = vld [vmem:[#allocation14 + $0x10] sm:$0xff]
    %v4586 = vld [vmem:[#allocation14 + $0x18] sm:$0xff]
    %v4587 = vld [vmem:[#allocation14 + $0x20] sm:$0xff]
    %v4588 = vld [vmem:[#allocation14 + $0x28] sm:$0xff]
    %v4589 = vld [vmem:[#allocation14 + $0x30] sm:$0xff]
    %v4590 = vld [vmem:[#allocation14 + $0x38] sm:$0xff]
    %v4591 = vld [vmem:[#allocation14 + $0x40] sm:$0xff]
    %v4592 = vld [vmem:[#allocation14 + $0x48] sm:$0xff]
    %v4593 = vld [vmem:[#allocation14 + $0x50] sm:$0xff]
    %v4594 = vld [vmem:[#allocation14 + $0x58] sm:$0xff]
    %v4595 = vld [vmem:[#allocation14 + $0x60] sm:$0xff]
    %v4596 = vld [vmem:[#allocation14 + $0x68] sm:$0xff]
    %v4597 = vld [vmem:[#allocation14 + $0x70] sm:$0xff]
    %v4598 = vld [vmem:[#allocation14 + $0x78] sm:$0xff]
    %v4599 = vld [vmem:[#allocation14 + $0x80] sm:$0xff]
    %v4600 = vld [vmem:[#allocation14 + $0x88] sm:$0xff]
    %v4601 = vld [vmem:[#allocation14 + $0x90] sm:$0xff]
    %v4602 = vld [vmem:[#allocation14 + $0x98] sm:$0xff]
    %v4603 = vld [vmem:[#allocation14 + $0xa0] sm:$0xff]
    %v4604 = vld [vmem:[#allocation14 + $0xa8] sm:$0xff]
    %v4605 = vld [vmem:[#allocation14 + $0xb0] sm:$0xff]
    %v4606 = vld [vmem:[#allocation14 + $0xb8] sm:$0xff]
    %v4607 = vld [vmem:[#allocation14 + $0xc0] sm:$0xff]
    %v4608 = vld [vmem:[#allocation14 + $0xc8] sm:$0xff]
    %v4609 = vld [vmem:[#allocation14 + $0xd0] sm:$0xff]
    %v4610 = vld [vmem:[#allocation14 + $0xd8] sm:$0xff]
    %v4611 = vld [vmem:[#allocation14 + $0xe0] sm:$0xff]
    %v4612 = vld [vmem:[#allocation14 + $0xe8] sm:$0xff]
    %v4613 = vld [vmem:[#allocation14 + $0xf0] sm:$0xff]
    %v4614 = vld [vmem:[#allocation14 + $0xf8] sm:$0xff]
    %v4615 = vld [vmem:[#allocation14 + $0x100] sm:$0xff]
    %v4616 = vld [vmem:[#allocation14 + $0x108] sm:$0xff]
    %v4617 = vld [vmem:[#allocation14 + $0x110] sm:$0xff]
    %v4618 = vld [vmem:[#allocation14 + $0x118] sm:$0xff]
    %v4619 = vld [vmem:[#allocation14 + $0x120] sm:$0xff]
    %v4620 = vld [vmem:[#allocation14 + $0x128] sm:$0xff]
    %v4621 = vld [vmem:[#allocation14 + $0x130] sm:$0xff]
    %v4622 = vld [vmem:[#allocation14 + $0x138] sm:$0xff]
    %v4623 = vld [vmem:[#allocation14 + $0x140] sm:$0xff]
    %v4624 = vld [vmem:[#allocation14 + $0x148] sm:$0xff]
    %v4625 = vld [vmem:[#allocation14 + $0x150] sm:$0xff]
    %v4626 = vld [vmem:[#allocation14 + $0x158] sm:$0xff]
    %v4627 = vld [vmem:[#allocation14 + $0x160] sm:$0xff]
    %v4628 = vld [vmem:[#allocation14 + $0x168] sm:$0xff]
    %v4629 = vld [vmem:[#allocation14 + $0x170] sm:$0xff]
    %v4630 = vld [vmem:[#allocation14 + $0x178] sm:$0xff]
    %v4631 = vld [vmem:[#allocation14 + $0x180] sm:$0xff]
    %v4632 = vld [vmem:[#allocation14 + $0x188] sm:$0xff]
    %v4633 = vld [vmem:[#allocation14 + $0x190] sm:$0xff]
    %v4634 = vld [vmem:[#allocation14 + $0x198] sm:$0xff]
    %v4635 = vld [vmem:[#allocation14 + $0x1a0] sm:$0xff]
    %v4636 = vld [vmem:[#allocation14 + $0x1a8] sm:$0xff]
    %v4637 = vld [vmem:[#allocation14 + $0x1b0] sm:$0xff]
    %v4638 = vld [vmem:[#allocation14 + $0x1b8] sm:$0xff]
    %v4639 = vld [vmem:[#allocation14 + $0x1c0] sm:$0xff]
    %v4640 = vld [vmem:[#allocation14 + $0x1c8] sm:$0xff]
    %v4641 = vld [vmem:[#allocation14 + $0x1d0] sm:$0xff]
    %v4642 = vld [vmem:[#allocation14 + $0x1d8] sm:$0xff]
    %v4643 = vld [vmem:[#allocation14 + $0x1e0] sm:$0xff]
    %v4644 = vld [vmem:[#allocation14 + $0x1e8] sm:$0xff]
    %v4645 = vld [vmem:[#allocation14 + $0x1f0] sm:$0xff]
    %v4646 = vld [vmem:[#allocation14 + $0x1f8] sm:$0xff]
    %v4647 = vld [vmem:[#allocation14 + $0x200] sm:$0xff]
    %v4648 = vld [vmem:[#allocation14 + $0x208] sm:$0xff]
    %v4649 = vld [vmem:[#allocation14 + $0x210] sm:$0xff]
    %v4650 = vld [vmem:[#allocation14 + $0x218] sm:$0xff]
    %v4651 = vld [vmem:[#allocation14 + $0x220] sm:$0xff]
    %v4652 = vld [vmem:[#allocation14 + $0x228] sm:$0xff]
    %v4653 = vld [vmem:[#allocation14 + $0x230] sm:$0xff]
    %v4654 = vld [vmem:[#allocation14 + $0x238] sm:$0xff]
    %v4655 = vld [vmem:[#allocation14 + $0x240] sm:$0xff]
    %v4656 = vld [vmem:[#allocation14 + $0x248] sm:$0xff]
    %v4657 = vld [vmem:[#allocation14 + $0x250] sm:$0xff]
    %v4658 = vld [vmem:[#allocation14 + $0x258] sm:$0xff]
    %v4659 = vld [vmem:[#allocation14 + $0x260] sm:$0xff]
    %v4660 = vld [vmem:[#allocation14 + $0x268] sm:$0xff]
    %v4661 = vld [vmem:[#allocation14 + $0x270] sm:$0xff]
    %v4662 = vld [vmem:[#allocation14 + $0x278] sm:$0xff]
    %v4663 = vld [vmem:[#allocation14 + $0x280] sm:$0xff]
    %v4664 = vld [vmem:[#allocation14 + $0x288] sm:$0xff]
    %v4665 = vld [vmem:[#allocation14 + $0x290] sm:$0xff]
    %v4666 = vld [vmem:[#allocation14 + $0x298] sm:$0xff]
    %v4667 = vld [vmem:[#allocation14 + $0x2a0] sm:$0xff]
    %v4668 = vld [vmem:[#allocation14 + $0x2a8] sm:$0xff]
    %v4669 = vld [vmem:[#allocation14 + $0x2b0] sm:$0xff]
    %v4670 = vld [vmem:[#allocation14 + $0x2b8] sm:$0xff]
    %v4671 = vld [vmem:[#allocation14 + $0x2c0] sm:$0xff]
    %v4672 = vld [vmem:[#allocation14 + $0x2c8] sm:$0xff]
    %v4673 = vld [vmem:[#allocation14 + $0x2d0] sm:$0xff]
    %v4674 = vld [vmem:[#allocation14 + $0x2d8] sm:$0xff]
    %v4675 = vld [vmem:[#allocation14 + $0x2e0] sm:$0xff]
    %v4676 = vld [vmem:[#allocation14 + $0x2e8] sm:$0xff]
    %v4677 = vld [vmem:[#allocation14 + $0x2f0] sm:$0xff]
    %v4678 = vld [vmem:[#allocation14 + $0x2f8] sm:$0xff]
    %v4679 = vld [vmem:[#allocation14 + $0x300] sm:$0xff]
    %v4680 = vld [vmem:[#allocation14 + $0x308] sm:$0xff]
    %v4681 = vld [vmem:[#allocation14 + $0x310] sm:$0xff]
    %v4682 = vld [vmem:[#allocation14 + $0x318] sm:$0xff]
    %v4683 = vld [vmem:[#allocation14 + $0x320] sm:$0xff]
    %v4684 = vld [vmem:[#allocation14 + $0x328] sm:$0xff]
    %v4685 = vld [vmem:[#allocation14 + $0x330] sm:$0xff]
    %v4686 = vld [vmem:[#allocation14 + $0x338] sm:$0xff]
    %v4687 = vld [vmem:[#allocation14 + $0x340] sm:$0xff]
    %v4688 = vld [vmem:[#allocation14 + $0x348] sm:$0xff]
    %v4689 = vld [vmem:[#allocation14 + $0x350] sm:$0xff]
    %v4690 = vld [vmem:[#allocation14 + $0x358] sm:$0xff]
    %v4691 = vld [vmem:[#allocation14 + $0x360] sm:$0xff]
    %v4692 = vld [vmem:[#allocation14 + $0x368] sm:$0xff]
    %v4693 = vld [vmem:[#allocation14 + $0x370] sm:$0xff]
    %v4694 = vld [vmem:[#allocation14 + $0x378] sm:$0xff]
    %v4695 = vld [vmem:[#allocation14 + $0x380] sm:$0xff]
    %v4696 = vld [vmem:[#allocation14 + $0x388] sm:$0xff]
    %v4697 = vld [vmem:[#allocation14 + $0x390] sm:$0xff]
    %v4698 = vld [vmem:[#allocation14 + $0x398] sm:$0xff]
    %v4699 = vld [vmem:[#allocation14 + $0x3a0] sm:$0xff]
    %v4700 = vld [vmem:[#allocation14 + $0x3a8] sm:$0xff]
    %v4701 = vld [vmem:[#allocation14 + $0x3b0] sm:$0xff]
    %v4702 = vld [vmem:[#allocation14 + $0x3b8] sm:$0xff]
    %v4703 = vld [vmem:[#allocation14 + $0x3c0] sm:$0xff]
    %v4704 = vld [vmem:[#allocation14 + $0x3c8] sm:$0xff]
    %v4705 = vld [vmem:[#allocation14 + $0x3d0] sm:$0xff]
    %v4706 = vld [vmem:[#allocation14 + $0x3d8] sm:$0xff]
    %v4707 = vld [vmem:[#allocation14 + $0x3e0] sm:$0xff]
    %v4708 = vld [vmem:[#allocation14 + $0x3e8] sm:$0xff]
    %v4709 = vld [vmem:[#allocation14 + $0x3f0] sm:$0xff]
    %v4710 = vld [vmem:[#allocation14 + $0x3f8] sm:$0xff]
    %v4711 = vld [vmem:[#allocation14 + $0x400] sm:$0xff]
    %v4712 = vld [vmem:[#allocation14 + $0x408] sm:$0xff]
    %v4713 = vld [vmem:[#allocation14 + $0x410] sm:$0xff]
    %v4714 = vld [vmem:[#allocation14 + $0x418] sm:$0xff]
    %v4715 = vld [vmem:[#allocation14 + $0x420] sm:$0xff]
    %v4716 = vld [vmem:[#allocation14 + $0x428] sm:$0xff]
    %v4717 = vld [vmem:[#allocation14 + $0x430] sm:$0xff]
    %v4718 = vld [vmem:[#allocation14 + $0x438] sm:$0xff]
    %v4719 = vld [vmem:[#allocation14 + $0x440] sm:$0xff]
    %v4720 = vld [vmem:[#allocation14 + $0x448] sm:$0xff]
    %v4721 = vld [vmem:[#allocation14 + $0x450] sm:$0xff]
    %v4722 = vld [vmem:[#allocation14 + $0x458] sm:$0xff]
    %v4723 = vld [vmem:[#allocation14 + $0x460] sm:$0xff]
    %v4724 = vld [vmem:[#allocation14 + $0x468] sm:$0xff]
    %v4725 = vld [vmem:[#allocation14 + $0x470] sm:$0xff]
    %v4726 = vld [vmem:[#allocation14 + $0x478] sm:$0xff]
    %v4727 = vld [vmem:[#allocation14 + $0x480] sm:$0xff]
    %v4728 = vld [vmem:[#allocation14 + $0x488] sm:$0xff]
    %v4729 = vld [vmem:[#allocation14 + $0x490] sm:$0xff]
    %v4730 = vld [vmem:[#allocation14 + $0x498] sm:$0xff]
    %v4731 = vld [vmem:[#allocation14 + $0x4a0] sm:$0xff]
    %v4732 = vld [vmem:[#allocation14 + $0x4a8] sm:$0xff]
    %v4733 = vld [vmem:[#allocation14 + $0x4b0] sm:$0xff]
    %v4734 = vld [vmem:[#allocation14 + $0x4b8] sm:$0xff]
    %v4735 = vld [vmem:[#allocation14 + $0x4c0] sm:$0xff]
    %v4736 = vld [vmem:[#allocation14 + $0x4c8] sm:$0xff]
    %v4737 = vld [vmem:[#allocation14 + $0x4d0] sm:$0xff]
    %v4738 = vld [vmem:[#allocation14 + $0x4d8] sm:$0xff]
    %v4739 = vld [vmem:[#allocation14 + $0x4e0] sm:$0xff]
    %v4740 = vld [vmem:[#allocation14 + $0x4e8] sm:$0xff]
    %v4741 = vld [vmem:[#allocation14 + $0x4f0] sm:$0xff]
    %v4742 = vld [vmem:[#allocation14 + $0x4f8] sm:$0xff]
    %v4743 = vld [vmem:[#allocation14 + $0x500] sm:$0xff]
    %v4744 = vld [vmem:[#allocation14 + $0x508] sm:$0xff]
    %v4745 = vld [vmem:[#allocation14 + $0x510] sm:$0xff]
    %v4746 = vld [vmem:[#allocation14 + $0x518] sm:$0xff]
    %v4747 = vld [vmem:[#allocation14 + $0x520] sm:$0xff]
    %v4748 = vld [vmem:[#allocation14 + $0x528] sm:$0xff]
    %v4749 = vld [vmem:[#allocation14 + $0x530] sm:$0xff]
    %v4750 = vld [vmem:[#allocation14 + $0x538] sm:$0xff]
    %v4751 = vld [vmem:[#allocation14 + $0x540] sm:$0xff]
    %v4752 = vld [vmem:[#allocation14 + $0x548] sm:$0xff]
    %v4753 = vld [vmem:[#allocation14 + $0x550] sm:$0xff]
    %v4754 = vld [vmem:[#allocation14 + $0x558] sm:$0xff]
    %v4755 = vld [vmem:[#allocation14 + $0x560] sm:$0xff]
    %v4756 = vld [vmem:[#allocation14 + $0x568] sm:$0xff]
    %v4757 = vld [vmem:[#allocation14 + $0x570] sm:$0xff]
    %v4758 = vld [vmem:[#allocation14 + $0x578] sm:$0xff]
    %v4759 = vld [vmem:[#allocation14 + $0x580] sm:$0xff]
    %v4760 = vld [vmem:[#allocation14 + $0x588] sm:$0xff]
    %v4761 = vld [vmem:[#allocation14 + $0x590] sm:$0xff]
    %v4762 = vld [vmem:[#allocation14 + $0x598] sm:$0xff]
    %v4763 = vld [vmem:[#allocation14 + $0x5a0] sm:$0xff]
    %v4764 = vld [vmem:[#allocation14 + $0x5a8] sm:$0xff]
    %v4765 = vld [vmem:[#allocation14 + $0x5b0] sm:$0xff]
    %v4766 = vld [vmem:[#allocation14 + $0x5b8] sm:$0xff]
    %v4767 = vld [vmem:[#allocation14 + $0x5c0] sm:$0xff]
    %v4768 = vld [vmem:[#allocation14 + $0x5c8] sm:$0xff]
    %v4769 = vld [vmem:[#allocation14 + $0x5d0] sm:$0xff]
    %v4770 = vld [vmem:[#allocation14 + $0x5d8] sm:$0xff]
    %v4771 = vld [vmem:[#allocation14 + $0x5e0] sm:$0xff]
    %v4772 = vld [vmem:[#allocation14 + $0x5e8] sm:$0xff]
    %v4773 = vld [vmem:[#allocation14 + $0x5f0] sm:$0xff]
    %v4774 = vld [vmem:[#allocation14 + $0x5f8] sm:$0xff]
    %v4775 = vld [vmem:[#allocation14 + $0x600] sm:$0xff]
    %v4776 = vld [vmem:[#allocation14 + $0x608] sm:$0xff]
    %v4777 = vld [vmem:[#allocation14 + $0x610] sm:$0xff]
    %v4778 = vld [vmem:[#allocation14 + $0x618] sm:$0xff]
    %v4779 = vld [vmem:[#allocation14 + $0x620] sm:$0xff]
    %v4780 = vld [vmem:[#allocation14 + $0x628] sm:$0xff]
    %v4781 = vld [vmem:[#allocation14 + $0x630] sm:$0xff]
    %v4782 = vld [vmem:[#allocation14 + $0x638] sm:$0xff]
    %v4783 = vld [vmem:[#allocation14 + $0x640] sm:$0xff]
    %v4784 = vld [vmem:[#allocation14 + $0x648] sm:$0xff]
    %v4785 = vld [vmem:[#allocation14 + $0x650] sm:$0xff]
    %v4786 = vld [vmem:[#allocation14 + $0x658] sm:$0xff]
    %v4787 = vld [vmem:[#allocation14 + $0x660] sm:$0xff]
    %v4788 = vld [vmem:[#allocation14 + $0x668] sm:$0xff]
    %v4789 = vld [vmem:[#allocation14 + $0x670] sm:$0xff]
    %v4790 = vld [vmem:[#allocation14 + $0x678] sm:$0xff]
    %v4791 = vld [vmem:[#allocation14 + $0x680] sm:$0xff]
    %v4792 = vld [vmem:[#allocation14 + $0x688] sm:$0xff]
    %v4793 = vld [vmem:[#allocation14 + $0x690] sm:$0xff]
    %v4794 = vld [vmem:[#allocation14 + $0x698] sm:$0xff]
    %v4795 = vld [vmem:[#allocation14 + $0x6a0] sm:$0xff]
    %v4796 = vld [vmem:[#allocation14 + $0x6a8] sm:$0xff]
    %v4797 = vld [vmem:[#allocation14 + $0x6b0] sm:$0xff]
    %v4798 = vld [vmem:[#allocation14 + $0x6b8] sm:$0xff]
    %v4799 = vld [vmem:[#allocation14 + $0x6c0] sm:$0xff]
    %v4800 = vld [vmem:[#allocation14 + $0x6c8] sm:$0xff]
    %v4801 = vld [vmem:[#allocation14 + $0x6d0] sm:$0xff]
    %v4802 = vld [vmem:[#allocation14 + $0x6d8] sm:$0xff]
    %v4803 = vld [vmem:[#allocation14 + $0x6e0] sm:$0xff]
    %v4804 = vld [vmem:[#allocation14 + $0x6e8] sm:$0xff]
    %v4805 = vld [vmem:[#allocation14 + $0x6f0] sm:$0xff]
    %v4806 = vld [vmem:[#allocation14 + $0x6f8] sm:$0xff]
    %v4807 = vld [vmem:[#allocation14 + $0x700] sm:$0xff]
    %v4808 = vld [vmem:[#allocation14 + $0x708] sm:$0xff]
    %v4809 = vld [vmem:[#allocation14 + $0x710] sm:$0xff]
    %v4810 = vld [vmem:[#allocation14 + $0x718] sm:$0xff]
    %v4811 = vld [vmem:[#allocation14 + $0x720] sm:$0xff]
    %v4812 = vld [vmem:[#allocation14 + $0x728] sm:$0xff]
    %v4813 = vld [vmem:[#allocation14 + $0x730] sm:$0xff]
    %v4814 = vld [vmem:[#allocation14 + $0x738] sm:$0xff]
    %v4815 = vld [vmem:[#allocation14 + $0x740] sm:$0xff]
    %v4816 = vld [vmem:[#allocation14 + $0x748] sm:$0xff]
    %v4817 = vld [vmem:[#allocation14 + $0x750] sm:$0xff]
    %v4818 = vld [vmem:[#allocation14 + $0x758] sm:$0xff]
    %v4819 = vld [vmem:[#allocation14 + $0x760] sm:$0xff]
    %v4820 = vld [vmem:[#allocation14 + $0x768] sm:$0xff]
    %v4821 = vld [vmem:[#allocation14 + $0x770] sm:$0xff]
    %v4822 = vld [vmem:[#allocation14 + $0x778] sm:$0xff]
    %v4823 = vld [vmem:[#allocation14 + $0x780] sm:$0xff]
    %v4824 = vld [vmem:[#allocation14 + $0x788] sm:$0xff]
    %v4825 = vld [vmem:[#allocation14 + $0x790] sm:$0xff]
    %v4826 = vld [vmem:[#allocation14 + $0x798] sm:$0xff]
    %v4827 = vld [vmem:[#allocation14 + $0x7a0] sm:$0xff]
    %v4828 = vld [vmem:[#allocation14 + $0x7a8] sm:$0xff]
    %v4829 = vld [vmem:[#allocation14 + $0x7b0] sm:$0xff]
    %v4830 = vld [vmem:[#allocation14 + $0x7b8] sm:$0xff]
    %v4831 = vld [vmem:[#allocation14 + $0x7c0] sm:$0xff]
    %v4832 = vld [vmem:[#allocation14 + $0x7c8] sm:$0xff]
    %v4833 = vld [vmem:[#allocation14 + $0x7d0] sm:$0xff]
    %v4834 = vld [vmem:[#allocation14 + $0x7d8] sm:$0xff]
    %v4835 = vld [vmem:[#allocation14 + $0x7e0] sm:$0xff]
    %v4836 = vld [vmem:[#allocation14 + $0x7e8] sm:$0xff]
    %v4837 = vld [vmem:[#allocation14 + $0x7f0] sm:$0xff]
    %v4838 = vld [vmem:[#allocation14 + $0x7f8] sm:$0xff]
    %v5095 = vunpack.c.l.b16 %v4583
    %v5096 = vunpack.c.h.b16 %v4583
    %v5097 = vunpack.c.l.b16 %v4584
    %v5098 = vunpack.c.h.b16 %v4584
    %v5099 = vunpack.c.l.b16 %v4585
    %v5100 = vunpack.c.h.b16 %v4585
    %v5101 = vunpack.c.l.b16 %v4586
    %v5102 = vunpack.c.h.b16 %v4586
    %v5103 = vunpack.c.l.b16 %v4587
    %v5104 = vunpack.c.h.b16 %v4587
    %v5105 = vunpack.c.l.b16 %v4588
    %v5106 = vunpack.c.h.b16 %v4588
    %v5107 = vunpack.c.l.b16 %v4589
    %v5108 = vunpack.c.h.b16 %v4589
    %v5109 = vunpack.c.l.b16 %v4590
    %v5110 = vunpack.c.h.b16 %v4590
    %v5111 = vunpack.c.l.b16 %v4591
    %v5112 = vunpack.c.h.b16 %v4591
    %v5113 = vunpack.c.l.b16 %v4592
    %v5114 = vunpack.c.h.b16 %v4592
    %v5115 = vunpack.c.l.b16 %v4593
    %v5116 = vunpack.c.h.b16 %v4593
    %v5117 = vunpack.c.l.b16 %v4594
    %v5118 = vunpack.c.h.b16 %v4594
    %v5119 = vunpack.c.l.b16 %v4595
    %v5120 = vunpack.c.h.b16 %v4595
    %v5121 = vunpack.c.l.b16 %v4596
    %v5122 = vunpack.c.h.b16 %v4596
    %v5123 = vunpack.c.l.b16 %v4597
    %v5124 = vunpack.c.h.b16 %v4597
    %v5125 = vunpack.c.l.b16 %v4598
    %v5126 = vunpack.c.h.b16 %v4598
    %v5127 = vunpack.c.l.b16 %v4599
    %v5128 = vunpack.c.h.b16 %v4599
    %v5129 = vunpack.c.l.b16 %v4600
    %v5130 = vunpack.c.h.b16 %v4600
    %v5131 = vunpack.c.l.b16 %v4601
    %v5132 = vunpack.c.h.b16 %v4601
    %v5133 = vunpack.c.l.b16 %v4602
    %v5134 = vunpack.c.h.b16 %v4602
    %v5135 = vunpack.c.l.b16 %v4603
    %v5136 = vunpack.c.h.b16 %v4603
    %v5137 = vunpack.c.l.b16 %v4604
    %v5138 = vunpack.c.h.b16 %v4604
    %v5139 = vunpack.c.l.b16 %v4605
    %v5140 = vunpack.c.h.b16 %v4605
    %v5141 = vunpack.c.l.b16 %v4606
    %v5142 = vunpack.c.h.b16 %v4606
    %v5143 = vunpack.c.l.b16 %v4607
    %v5144 = vunpack.c.h.b16 %v4607
    %v5145 = vunpack.c.l.b16 %v4608
    %v5146 = vunpack.c.h.b16 %v4608
    %v5147 = vunpack.c.l.b16 %v4609
    %v5148 = vunpack.c.h.b16 %v4609
    %v5149 = vunpack.c.l.b16 %v4610
    %v5150 = vunpack.c.h.b16 %v4610
    %v5151 = vunpack.c.l.b16 %v4611
    %v5152 = vunpack.c.h.b16 %v4611
    %v5153 = vunpack.c.l.b16 %v4612
    %v5154 = vunpack.c.h.b16 %v4612
    %v5155 = vunpack.c.l.b16 %v4613
    %v5156 = vunpack.c.h.b16 %v4613
    %v5157 = vunpack.c.l.b16 %v4614
    %v5158 = vunpack.c.h.b16 %v4614
    %v5159 = vunpack.c.l.b16 %v4615
    %v5160 = vunpack.c.h.b16 %v4615
    %v5161 = vunpack.c.l.b16 %v4616
    %v5162 = vunpack.c.h.b16 %v4616
    %v5163 = vunpack.c.l.b16 %v4617
    %v5164 = vunpack.c.h.b16 %v4617
    %v5165 = vunpack.c.l.b16 %v4618
    %v5166 = vunpack.c.h.b16 %v4618
    %v5167 = vunpack.c.l.b16 %v4619
    %v5168 = vunpack.c.h.b16 %v4619
    %v5169 = vunpack.c.l.b16 %v4620
    %v5170 = vunpack.c.h.b16 %v4620
    %v5171 = vunpack.c.l.b16 %v4621
    %v5172 = vunpack.c.h.b16 %v4621
    %v5173 = vunpack.c.l.b16 %v4622
    %v5174 = vunpack.c.h.b16 %v4622
    %v5175 = vunpack.c.l.b16 %v4623
    %v5176 = vunpack.c.h.b16 %v4623
    %v5177 = vunpack.c.l.b16 %v4624
    %v5178 = vunpack.c.h.b16 %v4624
    %v5179 = vunpack.c.l.b16 %v4625
    %v5180 = vunpack.c.h.b16 %v4625
    %v5181 = vunpack.c.l.b16 %v4626
    %v5182 = vunpack.c.h.b16 %v4626
    %v5183 = vunpack.c.l.b16 %v4627
    %v5184 = vunpack.c.h.b16 %v4627
    %v5185 = vunpack.c.l.b16 %v4628
    %v5186 = vunpack.c.h.b16 %v4628
    %v5187 = vunpack.c.l.b16 %v4629
    %v5188 = vunpack.c.h.b16 %v4629
    %v5189 = vunpack.c.l.b16 %v4630
    %v5190 = vunpack.c.h.b16 %v4630
    %v5191 = vunpack.c.l.b16 %v4631
    %v5192 = vunpack.c.h.b16 %v4631
    %v5193 = vunpack.c.l.b16 %v4632
    %v5194 = vunpack.c.h.b16 %v4632
    %v5195 = vunpack.c.l.b16 %v4633
    %v5196 = vunpack.c.h.b16 %v4633
    %v5197 = vunpack.c.l.b16 %v4634
    %v5198 = vunpack.c.h.b16 %v4634
    %v5199 = vunpack.c.l.b16 %v4635
    %v5200 = vunpack.c.h.b16 %v4635
    %v5201 = vunpack.c.l.b16 %v4636
    %v5202 = vunpack.c.h.b16 %v4636
    %v5203 = vunpack.c.l.b16 %v4637
    %v5204 = vunpack.c.h.b16 %v4637
    %v5205 = vunpack.c.l.b16 %v4638
    %v5206 = vunpack.c.h.b16 %v4638
    %v5207 = vunpack.c.l.b16 %v4639
    %v5208 = vunpack.c.h.b16 %v4639
    %v5209 = vunpack.c.l.b16 %v4640
    %v5210 = vunpack.c.h.b16 %v4640
    %v5211 = vunpack.c.l.b16 %v4641
    %v5212 = vunpack.c.h.b16 %v4641
    %v5213 = vunpack.c.l.b16 %v4642
    %v5214 = vunpack.c.h.b16 %v4642
    %v5215 = vunpack.c.l.b16 %v4643
    %v5216 = vunpack.c.h.b16 %v4643
    %v5217 = vunpack.c.l.b16 %v4644
    %v5218 = vunpack.c.h.b16 %v4644
    %v5219 = vunpack.c.l.b16 %v4645
    %v5220 = vunpack.c.h.b16 %v4645
    %v5221 = vunpack.c.l.b16 %v4646
    %v5222 = vunpack.c.h.b16 %v4646
    %v5223 = vunpack.c.l.b16 %v4647
    %v5224 = vunpack.c.h.b16 %v4647
    %v5225 = vunpack.c.l.b16 %v4648
    %v5226 = vunpack.c.h.b16 %v4648
    %v5227 = vunpack.c.l.b16 %v4649
    %v5228 = vunpack.c.h.b16 %v4649
    %v5229 = vunpack.c.l.b16 %v4650
    %v5230 = vunpack.c.h.b16 %v4650
    %v5231 = vunpack.c.l.b16 %v4651
    %v5232 = vunpack.c.h.b16 %v4651
    %v5233 = vunpack.c.l.b16 %v4652
    %v5234 = vunpack.c.h.b16 %v4652
    %v5235 = vunpack.c.l.b16 %v4653
    %v5236 = vunpack.c.h.b16 %v4653
    %v5237 = vunpack.c.l.b16 %v4654
    %v5238 = vunpack.c.h.b16 %v4654
    %v5239 = vunpack.c.l.b16 %v4655
    %v5240 = vunpack.c.h.b16 %v4655
    %v5241 = vunpack.c.l.b16 %v4656
    %v5242 = vunpack.c.h.b16 %v4656
    %v5243 = vunpack.c.l.b16 %v4657
    %v5244 = vunpack.c.h.b16 %v4657
    %v5245 = vunpack.c.l.b16 %v4658
    %v5246 = vunpack.c.h.b16 %v4658
    %v5247 = vunpack.c.l.b16 %v4659
    %v5248 = vunpack.c.h.b16 %v4659
    %v5249 = vunpack.c.l.b16 %v4660
    %v5250 = vunpack.c.h.b16 %v4660
    %v5251 = vunpack.c.l.b16 %v4661
    %v5252 = vunpack.c.h.b16 %v4661
    %v5253 = vunpack.c.l.b16 %v4662
    %v5254 = vunpack.c.h.b16 %v4662
    %v5255 = vunpack.c.l.b16 %v4663
    %v5256 = vunpack.c.h.b16 %v4663
    %v5257 = vunpack.c.l.b16 %v4664
    %v5258 = vunpack.c.h.b16 %v4664
    %v5259 = vunpack.c.l.b16 %v4665
    %v5260 = vunpack.c.h.b16 %v4665
    %v5261 = vunpack.c.l.b16 %v4666
    %v5262 = vunpack.c.h.b16 %v4666
    %v5263 = vunpack.c.l.b16 %v4667
    %v5264 = vunpack.c.h.b16 %v4667
    %v5265 = vunpack.c.l.b16 %v4668
    %v5266 = vunpack.c.h.b16 %v4668
    %v5267 = vunpack.c.l.b16 %v4669
    %v5268 = vunpack.c.h.b16 %v4669
    %v5269 = vunpack.c.l.b16 %v4670
    %v5270 = vunpack.c.h.b16 %v4670
    %v5271 = vunpack.c.l.b16 %v4671
    %v5272 = vunpack.c.h.b16 %v4671
    %v5273 = vunpack.c.l.b16 %v4672
    %v5274 = vunpack.c.h.b16 %v4672
    %v5275 = vunpack.c.l.b16 %v4673
    %v5276 = vunpack.c.h.b16 %v4673
    %v5277 = vunpack.c.l.b16 %v4674
    %v5278 = vunpack.c.h.b16 %v4674
    %v5279 = vunpack.c.l.b16 %v4675
    %v5280 = vunpack.c.h.b16 %v4675
    %v5281 = vunpack.c.l.b16 %v4676
    %v5282 = vunpack.c.h.b16 %v4676
    %v5283 = vunpack.c.l.b16 %v4677
    %v5284 = vunpack.c.h.b16 %v4677
    %v5285 = vunpack.c.l.b16 %v4678
    %v5286 = vunpack.c.h.b16 %v4678
    %v5287 = vunpack.c.l.b16 %v4679
    %v5288 = vunpack.c.h.b16 %v4679
    %v5289 = vunpack.c.l.b16 %v4680
    %v5290 = vunpack.c.h.b16 %v4680
    %v5291 = vunpack.c.l.b16 %v4681
    %v5292 = vunpack.c.h.b16 %v4681
    %v5293 = vunpack.c.l.b16 %v4682
    %v5294 = vunpack.c.h.b16 %v4682
    %v5295 = vunpack.c.l.b16 %v4683
    %v5296 = vunpack.c.h.b16 %v4683
    %v5297 = vunpack.c.l.b16 %v4684
    %v5298 = vunpack.c.h.b16 %v4684
    %v5299 = vunpack.c.l.b16 %v4685
    %v5300 = vunpack.c.h.b16 %v4685
    %v5301 = vunpack.c.l.b16 %v4686
    %v5302 = vunpack.c.h.b16 %v4686
    %v5303 = vunpack.c.l.b16 %v4687
    %v5304 = vunpack.c.h.b16 %v4687
    %v5305 = vunpack.c.l.b16 %v4688
    %v5306 = vunpack.c.h.b16 %v4688
    %v5307 = vunpack.c.l.b16 %v4689
    %v5308 = vunpack.c.h.b16 %v4689
    %v5309 = vunpack.c.l.b16 %v4690
    %v5310 = vunpack.c.h.b16 %v4690
    %v5311 = vunpack.c.l.b16 %v4691
    %v5312 = vunpack.c.h.b16 %v4691
    %v5313 = vunpack.c.l.b16 %v4692
    %v5314 = vunpack.c.h.b16 %v4692
    %v5315 = vunpack.c.l.b16 %v4693
    %v5316 = vunpack.c.h.b16 %v4693
    %v5317 = vunpack.c.l.b16 %v4694
    %v5318 = vunpack.c.h.b16 %v4694
    %v5319 = vunpack.c.l.b16 %v4695
    %v5320 = vunpack.c.h.b16 %v4695
    %v5321 = vunpack.c.l.b16 %v4696
    %v5322 = vunpack.c.h.b16 %v4696
    %v5323 = vunpack.c.l.b16 %v4697
    %v5324 = vunpack.c.h.b16 %v4697
    %v5325 = vunpack.c.l.b16 %v4698
    %v5326 = vunpack.c.h.b16 %v4698
    %v5327 = vunpack.c.l.b16 %v4699
    %v5328 = vunpack.c.h.b16 %v4699
    %v5329 = vunpack.c.l.b16 %v4700
    %v5330 = vunpack.c.h.b16 %v4700
    %v5331 = vunpack.c.l.b16 %v4701
    %v5332 = vunpack.c.h.b16 %v4701
    %v5333 = vunpack.c.l.b16 %v4702
    %v5334 = vunpack.c.h.b16 %v4702
    %v5335 = vunpack.c.l.b16 %v4703
    %v5336 = vunpack.c.h.b16 %v4703
    %v5337 = vunpack.c.l.b16 %v4704
    %v5338 = vunpack.c.h.b16 %v4704
    %v5339 = vunpack.c.l.b16 %v4705
    %v5340 = vunpack.c.h.b16 %v4705
    %v5341 = vunpack.c.l.b16 %v4706
    %v5342 = vunpack.c.h.b16 %v4706
    %v5343 = vunpack.c.l.b16 %v4707
    %v5344 = vunpack.c.h.b16 %v4707
    %v5345 = vunpack.c.l.b16 %v4708
    %v5346 = vunpack.c.h.b16 %v4708
    %v5347 = vunpack.c.l.b16 %v4709
    %v5348 = vunpack.c.h.b16 %v4709
    %v5349 = vunpack.c.l.b16 %v4710
    %v5350 = vunpack.c.h.b16 %v4710
    %v5351 = vunpack.c.l.b16 %v4711
    %v5352 = vunpack.c.h.b16 %v4711
    %v5353 = vunpack.c.l.b16 %v4712
    %v5354 = vunpack.c.h.b16 %v4712
    %v5355 = vunpack.c.l.b16 %v4713
    %v5356 = vunpack.c.h.b16 %v4713
    %v5357 = vunpack.c.l.b16 %v4714
    %v5358 = vunpack.c.h.b16 %v4714
    %v5359 = vunpack.c.l.b16 %v4715
    %v5360 = vunpack.c.h.b16 %v4715
    %v5361 = vunpack.c.l.b16 %v4716
    %v5362 = vunpack.c.h.b16 %v4716
    %v5363 = vunpack.c.l.b16 %v4717
    %v5364 = vunpack.c.h.b16 %v4717
    %v5365 = vunpack.c.l.b16 %v4718
    %v5366 = vunpack.c.h.b16 %v4718
    %v5367 = vunpack.c.l.b16 %v4719
    %v5368 = vunpack.c.h.b16 %v4719
    %v5369 = vunpack.c.l.b16 %v4720
    %v5370 = vunpack.c.h.b16 %v4720
    %v5371 = vunpack.c.l.b16 %v4721
    %v5372 = vunpack.c.h.b16 %v4721
    %v5373 = vunpack.c.l.b16 %v4722
    %v5374 = vunpack.c.h.b16 %v4722
    %v5375 = vunpack.c.l.b16 %v4723
    %v5376 = vunpack.c.h.b16 %v4723
    %v5377 = vunpack.c.l.b16 %v4724
    %v5378 = vunpack.c.h.b16 %v4724
    %v5379 = vunpack.c.l.b16 %v4725
    %v5380 = vunpack.c.h.b16 %v4725
    %v5381 = vunpack.c.l.b16 %v4726
    %v5382 = vunpack.c.h.b16 %v4726
    %v5383 = vunpack.c.l.b16 %v4727
    %v5384 = vunpack.c.h.b16 %v4727
    %v5385 = vunpack.c.l.b16 %v4728
    %v5386 = vunpack.c.h.b16 %v4728
    %v5387 = vunpack.c.l.b16 %v4729
    %v5388 = vunpack.c.h.b16 %v4729
    %v5389 = vunpack.c.l.b16 %v4730
    %v5390 = vunpack.c.h.b16 %v4730
    %v5391 = vunpack.c.l.b16 %v4731
    %v5392 = vunpack.c.h.b16 %v4731
    %v5393 = vunpack.c.l.b16 %v4732
    %v5394 = vunpack.c.h.b16 %v4732
    %v5395 = vunpack.c.l.b16 %v4733
    %v5396 = vunpack.c.h.b16 %v4733
    %v5397 = vunpack.c.l.b16 %v4734
    %v5398 = vunpack.c.h.b16 %v4734
    %v5399 = vunpack.c.l.b16 %v4735
    %v5400 = vunpack.c.h.b16 %v4735
    %v5401 = vunpack.c.l.b16 %v4736
    %v5402 = vunpack.c.h.b16 %v4736
    %v5403 = vunpack.c.l.b16 %v4737
    %v5404 = vunpack.c.h.b16 %v4737
    %v5405 = vunpack.c.l.b16 %v4738
    %v5406 = vunpack.c.h.b16 %v4738
    %v5407 = vunpack.c.l.b16 %v4739
    %v5408 = vunpack.c.h.b16 %v4739
    %v5409 = vunpack.c.l.b16 %v4740
    %v5410 = vunpack.c.h.b16 %v4740
    %v5411 = vunpack.c.l.b16 %v4741
    %v5412 = vunpack.c.h.b16 %v4741
    %v5413 = vunpack.c.l.b16 %v4742
    %v5414 = vunpack.c.h.b16 %v4742
    %v5415 = vunpack.c.l.b16 %v4743
    %v5416 = vunpack.c.h.b16 %v4743
    %v5417 = vunpack.c.l.b16 %v4744
    %v5418 = vunpack.c.h.b16 %v4744
    %v5419 = vunpack.c.l.b16 %v4745
    %v5420 = vunpack.c.h.b16 %v4745
    %v5421 = vunpack.c.l.b16 %v4746
    %v5422 = vunpack.c.h.b16 %v4746
    %v5423 = vunpack.c.l.b16 %v4747
    %v5424 = vunpack.c.h.b16 %v4747
    %v5425 = vunpack.c.l.b16 %v4748
    %v5426 = vunpack.c.h.b16 %v4748
    %v5427 = vunpack.c.l.b16 %v4749
    %v5428 = vunpack.c.h.b16 %v4749
    %v5429 = vunpack.c.l.b16 %v4750
    %v5430 = vunpack.c.h.b16 %v4750
    %v5431 = vunpack.c.l.b16 %v4751
    %v5432 = vunpack.c.h.b16 %v4751
    %v5433 = vunpack.c.l.b16 %v4752
    %v5434 = vunpack.c.h.b16 %v4752
    %v5435 = vunpack.c.l.b16 %v4753
    %v5436 = vunpack.c.h.b16 %v4753
    %v5437 = vunpack.c.l.b16 %v4754
    %v5438 = vunpack.c.h.b16 %v4754
    %v5439 = vunpack.c.l.b16 %v4755
    %v5440 = vunpack.c.h.b16 %v4755
    %v5441 = vunpack.c.l.b16 %v4756
    %v5442 = vunpack.c.h.b16 %v4756
    %v5443 = vunpack.c.l.b16 %v4757
    %v5444 = vunpack.c.h.b16 %v4757
    %v5445 = vunpack.c.l.b16 %v4758
    %v5446 = vunpack.c.h.b16 %v4758
    %v5447 = vunpack.c.l.b16 %v4759
    %v5448 = vunpack.c.h.b16 %v4759
    %v5449 = vunpack.c.l.b16 %v4760
    %v5450 = vunpack.c.h.b16 %v4760
    %v5451 = vunpack.c.l.b16 %v4761
    %v5452 = vunpack.c.h.b16 %v4761
    %v5453 = vunpack.c.l.b16 %v4762
    %v5454 = vunpack.c.h.b16 %v4762
    %v5455 = vunpack.c.l.b16 %v4763
    %v5456 = vunpack.c.h.b16 %v4763
    %v5457 = vunpack.c.l.b16 %v4764
    %v5458 = vunpack.c.h.b16 %v4764
    %v5459 = vunpack.c.l.b16 %v4765
    %v5460 = vunpack.c.h.b16 %v4765
    %v5461 = vunpack.c.l.b16 %v4766
    %v5462 = vunpack.c.h.b16 %v4766
    %v5463 = vunpack.c.l.b16 %v4767
    %v5464 = vunpack.c.h.b16 %v4767
    %v5465 = vunpack.c.l.b16 %v4768
    %v5466 = vunpack.c.h.b16 %v4768
    %v5467 = vunpack.c.l.b16 %v4769
    %v5468 = vunpack.c.h.b16 %v4769
    %v5469 = vunpack.c.l.b16 %v4770
    %v5470 = vunpack.c.h.b16 %v4770
    %v5471 = vunpack.c.l.b16 %v4771
    %v5472 = vunpack.c.h.b16 %v4771
    %v5473 = vunpack.c.l.b16 %v4772
    %v5474 = vunpack.c.h.b16 %v4772
    %v5475 = vunpack.c.l.b16 %v4773
    %v5476 = vunpack.c.h.b16 %v4773
    %v5477 = vunpack.c.l.b16 %v4774
    %v5478 = vunpack.c.h.b16 %v4774
    %v5479 = vunpack.c.l.b16 %v4775
    %v5480 = vunpack.c.h.b16 %v4775
    %v5481 = vunpack.c.l.b16 %v4776
    %v5482 = vunpack.c.h.b16 %v4776
    %v5483 = vunpack.c.l.b16 %v4777
    %v5484 = vunpack.c.h.b16 %v4777
    %v5485 = vunpack.c.l.b16 %v4778
    %v5486 = vunpack.c.h.b16 %v4778
    %v5487 = vunpack.c.l.b16 %v4779
    %v5488 = vunpack.c.h.b16 %v4779
    %v5489 = vunpack.c.l.b16 %v4780
    %v5490 = vunpack.c.h.b16 %v4780
    %v5491 = vunpack.c.l.b16 %v4781
    %v5492 = vunpack.c.h.b16 %v4781
    %v5493 = vunpack.c.l.b16 %v4782
    %v5494 = vunpack.c.h.b16 %v4782
    %v5495 = vunpack.c.l.b16 %v4783
    %v5496 = vunpack.c.h.b16 %v4783
    %v5497 = vunpack.c.l.b16 %v4784
    %v5498 = vunpack.c.h.b16 %v4784
    %v5499 = vunpack.c.l.b16 %v4785
    %v5500 = vunpack.c.h.b16 %v4785
    %v5501 = vunpack.c.l.b16 %v4786
    %v5502 = vunpack.c.h.b16 %v4786
    %v5503 = vunpack.c.l.b16 %v4787
    %v5504 = vunpack.c.h.b16 %v4787
    %v5505 = vunpack.c.l.b16 %v4788
    %v5506 = vunpack.c.h.b16 %v4788
    %v5507 = vunpack.c.l.b16 %v4789
    %v5508 = vunpack.c.h.b16 %v4789
    %v5509 = vunpack.c.l.b16 %v4790
    %v5510 = vunpack.c.h.b16 %v4790
    %v5511 = vunpack.c.l.b16 %v4791
    %v5512 = vunpack.c.h.b16 %v4791
    %v5513 = vunpack.c.l.b16 %v4792
    %v5514 = vunpack.c.h.b16 %v4792
    %v5515 = vunpack.c.l.b16 %v4793
    %v5516 = vunpack.c.h.b16 %v4793
    %v5517 = vunpack.c.l.b16 %v4794
    %v5518 = vunpack.c.h.b16 %v4794
    %v5519 = vunpack.c.l.b16 %v4795
    %v5520 = vunpack.c.h.b16 %v4795
    %v5521 = vunpack.c.l.b16 %v4796
    %v5522 = vunpack.c.h.b16 %v4796
    %v5523 = vunpack.c.l.b16 %v4797
    %v5524 = vunpack.c.h.b16 %v4797
    %v5525 = vunpack.c.l.b16 %v4798
    %v5526 = vunpack.c.h.b16 %v4798
    %v5527 = vunpack.c.l.b16 %v4799
    %v5528 = vunpack.c.h.b16 %v4799
    %v5529 = vunpack.c.l.b16 %v4800
    %v5530 = vunpack.c.h.b16 %v4800
    %v5531 = vunpack.c.l.b16 %v4801
    %v5532 = vunpack.c.h.b16 %v4801
    %v5533 = vunpack.c.l.b16 %v4802
    %v5534 = vunpack.c.h.b16 %v4802
    %v5535 = vunpack.c.l.b16 %v4803
    %v5536 = vunpack.c.h.b16 %v4803
    %v5537 = vunpack.c.l.b16 %v4804
    %v5538 = vunpack.c.h.b16 %v4804
    %v5539 = vunpack.c.l.b16 %v4805
    %v5540 = vunpack.c.h.b16 %v4805
    %v5541 = vunpack.c.l.b16 %v4806
    %v5542 = vunpack.c.h.b16 %v4806
    %v5543 = vunpack.c.l.b16 %v4807
    %v5544 = vunpack.c.h.b16 %v4807
    %v5545 = vunpack.c.l.b16 %v4808
    %v5546 = vunpack.c.h.b16 %v4808
    %v5547 = vunpack.c.l.b16 %v4809
    %v5548 = vunpack.c.h.b16 %v4809
    %v5549 = vunpack.c.l.b16 %v4810
    %v5550 = vunpack.c.h.b16 %v4810
    %v5551 = vunpack.c.l.b16 %v4811
    %v5552 = vunpack.c.h.b16 %v4811
    %v5553 = vunpack.c.l.b16 %v4812
    %v5554 = vunpack.c.h.b16 %v4812
    %v5555 = vunpack.c.l.b16 %v4813
    %v5556 = vunpack.c.h.b16 %v4813
    %v5557 = vunpack.c.l.b16 %v4814
    %v5558 = vunpack.c.h.b16 %v4814
    %v5559 = vunpack.c.l.b16 %v4815
    %v5560 = vunpack.c.h.b16 %v4815
    %v5561 = vunpack.c.l.b16 %v4816
    %v5562 = vunpack.c.h.b16 %v4816
    %v5563 = vunpack.c.l.b16 %v4817
    %v5564 = vunpack.c.h.b16 %v4817
    %v5565 = vunpack.c.l.b16 %v4818
    %v5566 = vunpack.c.h.b16 %v4818
    %v5567 = vunpack.c.l.b16 %v4819
    %v5568 = vunpack.c.h.b16 %v4819
    %v5569 = vunpack.c.l.b16 %v4820
    %v5570 = vunpack.c.h.b16 %v4820
    %v5571 = vunpack.c.l.b16 %v4821
    %v5572 = vunpack.c.h.b16 %v4821
    %v5573 = vunpack.c.l.b16 %v4822
    %v5574 = vunpack.c.h.b16 %v4822
    %v5575 = vunpack.c.l.b16 %v4823
    %v5576 = vunpack.c.h.b16 %v4823
    %v5577 = vunpack.c.l.b16 %v4824
    %v5578 = vunpack.c.h.b16 %v4824
    %v5579 = vunpack.c.l.b16 %v4825
    %v5580 = vunpack.c.h.b16 %v4825
    %v5581 = vunpack.c.l.b16 %v4826
    %v5582 = vunpack.c.h.b16 %v4826
    %v5583 = vunpack.c.l.b16 %v4827
    %v5584 = vunpack.c.h.b16 %v4827
    %v5585 = vunpack.c.l.b16 %v4828
    %v5586 = vunpack.c.h.b16 %v4828
    %v5587 = vunpack.c.l.b16 %v4829
    %v5588 = vunpack.c.h.b16 %v4829
    %v5589 = vunpack.c.l.b16 %v4830
    %v5590 = vunpack.c.h.b16 %v4830
    %v5591 = vunpack.c.l.b16 %v4831
    %v5592 = vunpack.c.h.b16 %v4831
    %v5593 = vunpack.c.l.b16 %v4832
    %v5594 = vunpack.c.h.b16 %v4832
    %v5595 = vunpack.c.l.b16 %v4833
    %v5596 = vunpack.c.h.b16 %v4833
    %v5597 = vunpack.c.l.b16 %v4834
    %v5598 = vunpack.c.h.b16 %v4834
    %v5599 = vunpack.c.l.b16 %v4835
    %v5600 = vunpack.c.h.b16 %v4835
    %v5601 = vunpack.c.l.b16 %v4836
    %v5602 = vunpack.c.h.b16 %v4836
    %v5603 = vunpack.c.l.b16 %v4837
    %v5604 = vunpack.c.h.b16 %v4837
    %v5605 = vunpack.c.l.b16 %v4838
    %v5606 = vunpack.c.h.b16 %v4838
    %v5607 = vpack.c.b16 %v5103, %v5095
    %v5608 = vpack.c.b16 %v5104, %v5096
    %v5609 = vpack.c.b16 %v5105, %v5097
    %v5610 = vpack.c.b16 %v5106, %v5098
    %v5611 = vpack.c.b16 %v5107, %v5099
    %v5612 = vpack.c.b16 %v5108, %v5100
    %v5613 = vpack.c.b16 %v5109, %v5101
    %v5614 = vpack.c.b16 %v5110, %v5102
    %v5615 = vpack.c.b16 %v5119, %v5111
    %v5616 = vpack.c.b16 %v5120, %v5112
    %v5617 = vpack.c.b16 %v5121, %v5113
    %v5618 = vpack.c.b16 %v5122, %v5114
    %v5619 = vpack.c.b16 %v5123, %v5115
    %v5620 = vpack.c.b16 %v5124, %v5116
    %v5621 = vpack.c.b16 %v5125, %v5117
    %v5622 = vpack.c.b16 %v5126, %v5118
    %v5623 = vpack.c.b16 %v5135, %v5127
    %v5624 = vpack.c.b16 %v5136, %v5128
    %v5625 = vpack.c.b16 %v5137, %v5129
    %v5626 = vpack.c.b16 %v5138, %v5130
    %v5627 = vpack.c.b16 %v5139, %v5131
    %v5628 = vpack.c.b16 %v5140, %v5132
    %v5629 = vpack.c.b16 %v5141, %v5133
    %v5630 = vpack.c.b16 %v5142, %v5134
    %v5631 = vpack.c.b16 %v5151, %v5143
    %v5632 = vpack.c.b16 %v5152, %v5144
    %v5633 = vpack.c.b16 %v5153, %v5145
    %v5634 = vpack.c.b16 %v5154, %v5146
    %v5635 = vpack.c.b16 %v5155, %v5147
    %v5636 = vpack.c.b16 %v5156, %v5148
    %v5637 = vpack.c.b16 %v5157, %v5149
    %v5638 = vpack.c.b16 %v5158, %v5150
    %v5639 = vpack.c.b16 %v5167, %v5159
    %v5640 = vpack.c.b16 %v5168, %v5160
    %v5641 = vpack.c.b16 %v5169, %v5161
    %v5642 = vpack.c.b16 %v5170, %v5162
    %v5643 = vpack.c.b16 %v5171, %v5163
    %v5644 = vpack.c.b16 %v5172, %v5164
    %v5645 = vpack.c.b16 %v5173, %v5165
    %v5646 = vpack.c.b16 %v5174, %v5166
    %v5647 = vpack.c.b16 %v5183, %v5175
    %v5648 = vpack.c.b16 %v5184, %v5176
    %v5649 = vpack.c.b16 %v5185, %v5177
    %v5650 = vpack.c.b16 %v5186, %v5178
    %v5651 = vpack.c.b16 %v5187, %v5179
    %v5652 = vpack.c.b16 %v5188, %v5180
    %v5653 = vpack.c.b16 %v5189, %v5181
    %v5654 = vpack.c.b16 %v5190, %v5182
    %v5655 = vpack.c.b16 %v5199, %v5191
    %v5656 = vpack.c.b16 %v5200, %v5192
    %v5657 = vpack.c.b16 %v5201, %v5193
    %v5658 = vpack.c.b16 %v5202, %v5194
    %v5659 = vpack.c.b16 %v5203, %v5195
    %v5660 = vpack.c.b16 %v5204, %v5196
    %v5661 = vpack.c.b16 %v5205, %v5197
    %v5662 = vpack.c.b16 %v5206, %v5198
    %v5663 = vpack.c.b16 %v5215, %v5207
    %v5664 = vpack.c.b16 %v5216, %v5208
    %v5665 = vpack.c.b16 %v5217, %v5209
    %v5666 = vpack.c.b16 %v5218, %v5210
    %v5667 = vpack.c.b16 %v5219, %v5211
    %v5668 = vpack.c.b16 %v5220, %v5212
    %v5669 = vpack.c.b16 %v5221, %v5213
    %v5670 = vpack.c.b16 %v5222, %v5214
    %v5671 = vpack.c.b16 %v5231, %v5223
    %v5672 = vpack.c.b16 %v5232, %v5224
    %v5673 = vpack.c.b16 %v5233, %v5225
    %v5674 = vpack.c.b16 %v5234, %v5226
    %v5675 = vpack.c.b16 %v5235, %v5227
    %v5676 = vpack.c.b16 %v5236, %v5228
    %v5677 = vpack.c.b16 %v5237, %v5229
    %v5678 = vpack.c.b16 %v5238, %v5230
    %v5679 = vpack.c.b16 %v5247, %v5239
    %v5680 = vpack.c.b16 %v5248, %v5240
    %v5681 = vpack.c.b16 %v5249, %v5241
    %v5682 = vpack.c.b16 %v5250, %v5242
    %v5683 = vpack.c.b16 %v5251, %v5243
    %v5684 = vpack.c.b16 %v5252, %v5244
    %v5685 = vpack.c.b16 %v5253, %v5245
    %v5686 = vpack.c.b16 %v5254, %v5246
    %v5687 = vpack.c.b16 %v5263, %v5255
    %v5688 = vpack.c.b16 %v5264, %v5256
    %v5689 = vpack.c.b16 %v5265, %v5257
    %v5690 = vpack.c.b16 %v5266, %v5258
    %v5691 = vpack.c.b16 %v5267, %v5259
    %v5692 = vpack.c.b16 %v5268, %v5260
    %v5693 = vpack.c.b16 %v5269, %v5261
    %v5694 = vpack.c.b16 %v5270, %v5262
    %v5695 = vpack.c.b16 %v5279, %v5271
    %v5696 = vpack.c.b16 %v5280, %v5272
    %v5697 = vpack.c.b16 %v5281, %v5273
    %v5698 = vpack.c.b16 %v5282, %v5274
    %v5699 = vpack.c.b16 %v5283, %v5275
    %v5700 = vpack.c.b16 %v5284, %v5276
    %v5701 = vpack.c.b16 %v5285, %v5277
    %v5702 = vpack.c.b16 %v5286, %v5278
    %v5703 = vpack.c.b16 %v5295, %v5287
    %v5704 = vpack.c.b16 %v5296, %v5288
    %v5705 = vpack.c.b16 %v5297, %v5289
    %v5706 = vpack.c.b16 %v5298, %v5290
    %v5707 = vpack.c.b16 %v5299, %v5291
    %v5708 = vpack.c.b16 %v5300, %v5292
    %v5709 = vpack.c.b16 %v5301, %v5293
    %v5710 = vpack.c.b16 %v5302, %v5294
    %v5711 = vpack.c.b16 %v5311, %v5303
    %v5712 = vpack.c.b16 %v5312, %v5304
    %v5713 = vpack.c.b16 %v5313, %v5305
    %v5714 = vpack.c.b16 %v5314, %v5306
    %v5715 = vpack.c.b16 %v5315, %v5307
    %v5716 = vpack.c.b16 %v5316, %v5308
    %v5717 = vpack.c.b16 %v5317, %v5309
    %v5718 = vpack.c.b16 %v5318, %v5310
    %v5719 = vpack.c.b16 %v5327, %v5319
    %v5720 = vpack.c.b16 %v5328, %v5320
    %v5721 = vpack.c.b16 %v5329, %v5321
    %v5722 = vpack.c.b16 %v5330, %v5322
    %v5723 = vpack.c.b16 %v5331, %v5323
    %v5724 = vpack.c.b16 %v5332, %v5324
    %v5725 = vpack.c.b16 %v5333, %v5325
    %v5726 = vpack.c.b16 %v5334, %v5326
    %v5727 = vpack.c.b16 %v5343, %v5335
    %v5728 = vpack.c.b16 %v5344, %v5336
    %v5729 = vpack.c.b16 %v5345, %v5337
    %v5730 = vpack.c.b16 %v5346, %v5338
    %v5731 = vpack.c.b16 %v5347, %v5339
    %v5732 = vpack.c.b16 %v5348, %v5340
    %v5733 = vpack.c.b16 %v5349, %v5341
    %v5734 = vpack.c.b16 %v5350, %v5342
    %v5735 = vpack.c.b16 %v5359, %v5351
    %v5736 = vpack.c.b16 %v5360, %v5352
    %v5737 = vpack.c.b16 %v5361, %v5353
    %v5738 = vpack.c.b16 %v5362, %v5354
    %v5739 = vpack.c.b16 %v5363, %v5355
    %v5740 = vpack.c.b16 %v5364, %v5356
    %v5741 = vpack.c.b16 %v5365, %v5357
    %v5742 = vpack.c.b16 %v5366, %v5358
    %v5743 = vpack.c.b16 %v5375, %v5367
    %v5744 = vpack.c.b16 %v5376, %v5368
    %v5745 = vpack.c.b16 %v5377, %v5369
    %v5746 = vpack.c.b16 %v5378, %v5370
    %v5747 = vpack.c.b16 %v5379, %v5371
    %v5748 = vpack.c.b16 %v5380, %v5372
    %v5749 = vpack.c.b16 %v5381, %v5373
    %v5750 = vpack.c.b16 %v5382, %v5374
    %v5751 = vpack.c.b16 %v5391, %v5383
    %v5752 = vpack.c.b16 %v5392, %v5384
    %v5753 = vpack.c.b16 %v5393, %v5385
    %v5754 = vpack.c.b16 %v5394, %v5386
    %v5755 = vpack.c.b16 %v5395, %v5387
    %v5756 = vpack.c.b16 %v5396, %v5388
    %v5757 = vpack.c.b16 %v5397, %v5389
    %v5758 = vpack.c.b16 %v5398, %v5390
    %v5759 = vpack.c.b16 %v5407, %v5399
    %v5760 = vpack.c.b16 %v5408, %v5400
    %v5761 = vpack.c.b16 %v5409, %v5401
    %v5762 = vpack.c.b16 %v5410, %v5402
    %v5763 = vpack.c.b16 %v5411, %v5403
    %v5764 = vpack.c.b16 %v5412, %v5404
    %v5765 = vpack.c.b16 %v5413, %v5405
    %v5766 = vpack.c.b16 %v5414, %v5406
    %v5767 = vpack.c.b16 %v5423, %v5415
    %v5768 = vpack.c.b16 %v5424, %v5416
    %v5769 = vpack.c.b16 %v5425, %v5417
    %v5770 = vpack.c.b16 %v5426, %v5418
    %v5771 = vpack.c.b16 %v5427, %v5419
    %v5772 = vpack.c.b16 %v5428, %v5420
    %v5773 = vpack.c.b16 %v5429, %v5421
    %v5774 = vpack.c.b16 %v5430, %v5422
    %v5775 = vpack.c.b16 %v5439, %v5431
    %v5776 = vpack.c.b16 %v5440, %v5432
    %v5777 = vpack.c.b16 %v5441, %v5433
    %v5778 = vpack.c.b16 %v5442, %v5434
    %v5779 = vpack.c.b16 %v5443, %v5435
    %v5780 = vpack.c.b16 %v5444, %v5436
    %v5781 = vpack.c.b16 %v5445, %v5437
    %v5782 = vpack.c.b16 %v5446, %v5438
    %v5783 = vpack.c.b16 %v5455, %v5447
    %v5784 = vpack.c.b16 %v5456, %v5448
    %v5785 = vpack.c.b16 %v5457, %v5449
    %v5786 = vpack.c.b16 %v5458, %v5450
    %v5787 = vpack.c.b16 %v5459, %v5451
    %v5788 = vpack.c.b16 %v5460, %v5452
    %v5789 = vpack.c.b16 %v5461, %v5453
    %v5790 = vpack.c.b16 %v5462, %v5454
    %v5791 = vpack.c.b16 %v5471, %v5463
    %v5792 = vpack.c.b16 %v5472, %v5464
    %v5793 = vpack.c.b16 %v5473, %v5465
    %v5794 = vpack.c.b16 %v5474, %v5466
    %v5795 = vpack.c.b16 %v5475, %v5467
    %v5796 = vpack.c.b16 %v5476, %v5468
    %v5797 = vpack.c.b16 %v5477, %v5469
    %v5798 = vpack.c.b16 %v5478, %v5470
    %v5799 = vpack.c.b16 %v5487, %v5479
    %v5800 = vpack.c.b16 %v5488, %v5480
    %v5801 = vpack.c.b16 %v5489, %v5481
    %v5802 = vpack.c.b16 %v5490, %v5482
    %v5803 = vpack.c.b16 %v5491, %v5483
    %v5804 = vpack.c.b16 %v5492, %v5484
    %v5805 = vpack.c.b16 %v5493, %v5485
    %v5806 = vpack.c.b16 %v5494, %v5486
    %v5807 = vpack.c.b16 %v5503, %v5495
    %v5808 = vpack.c.b16 %v5504, %v5496
    %v5809 = vpack.c.b16 %v5505, %v5497
    %v5810 = vpack.c.b16 %v5506, %v5498
    %v5811 = vpack.c.b16 %v5507, %v5499
    %v5812 = vpack.c.b16 %v5508, %v5500
    %v5813 = vpack.c.b16 %v5509, %v5501
    %v5814 = vpack.c.b16 %v5510, %v5502
    %v5815 = vpack.c.b16 %v5519, %v5511
    %v5816 = vpack.c.b16 %v5520, %v5512
    %v5817 = vpack.c.b16 %v5521, %v5513
    %v5818 = vpack.c.b16 %v5522, %v5514
    %v5819 = vpack.c.b16 %v5523, %v5515
    %v5820 = vpack.c.b16 %v5524, %v5516
    %v5821 = vpack.c.b16 %v5525, %v5517
    %v5822 = vpack.c.b16 %v5526, %v5518
    %v5823 = vpack.c.b16 %v5535, %v5527
    %v5824 = vpack.c.b16 %v5536, %v5528
    %v5825 = vpack.c.b16 %v5537, %v5529
    %v5826 = vpack.c.b16 %v5538, %v5530
    %v5827 = vpack.c.b16 %v5539, %v5531
    %v5828 = vpack.c.b16 %v5540, %v5532
    %v5829 = vpack.c.b16 %v5541, %v5533
    %v5830 = vpack.c.b16 %v5542, %v5534
    %v5831 = vpack.c.b16 %v5551, %v5543
    %v5832 = vpack.c.b16 %v5552, %v5544
    %v5833 = vpack.c.b16 %v5553, %v5545
    %v5834 = vpack.c.b16 %v5554, %v5546
    %v5835 = vpack.c.b16 %v5555, %v5547
    %v5836 = vpack.c.b16 %v5556, %v5548
    %v5837 = vpack.c.b16 %v5557, %v5549
    %v5838 = vpack.c.b16 %v5558, %v5550
    %v5839 = vpack.c.b16 %v5567, %v5559
    %v5840 = vpack.c.b16 %v5568, %v5560
    %v5841 = vpack.c.b16 %v5569, %v5561
    %v5842 = vpack.c.b16 %v5570, %v5562
    %v5843 = vpack.c.b16 %v5571, %v5563
    %v5844 = vpack.c.b16 %v5572, %v5564
    %v5845 = vpack.c.b16 %v5573, %v5565
    %v5846 = vpack.c.b16 %v5574, %v5566
    %v5847 = vpack.c.b16 %v5583, %v5575
    %v5848 = vpack.c.b16 %v5584, %v5576
    %v5849 = vpack.c.b16 %v5585, %v5577
    %v5850 = vpack.c.b16 %v5586, %v5578
    %v5851 = vpack.c.b16 %v5587, %v5579
    %v5852 = vpack.c.b16 %v5588, %v5580
    %v5853 = vpack.c.b16 %v5589, %v5581
    %v5854 = vpack.c.b16 %v5590, %v5582
    %v5855 = vpack.c.b16 %v5599, %v5591
    %v5856 = vpack.c.b16 %v5600, %v5592
    %v5857 = vpack.c.b16 %v5601, %v5593
    %v5858 = vpack.c.b16 %v5602, %v5594
    %v5859 = vpack.c.b16 %v5603, %v5595
    %v5860 = vpack.c.b16 %v5604, %v5596
    %v5861 = vpack.c.b16 %v5605, %v5597
    %v5862 = vpack.c.b16 %v5606, %v5598
    %6119 = vmatprep.subr.bf16.mxu0 %v5664
    %6120 = vmatpush1.bf16.msra.mxu0 %v5663
    %6121 = vmatprep.subr.bf16.mxu0 %v5656
    %6122 = vmatpush1.bf16.msra.mxu0 %v5655
    %6123 = vmatprep.subr.bf16.mxu0 %v5648
    %6124 = vmatpush1.bf16.msra.mxu0 %v5647
    %6125 = vmatprep.subr.bf16.mxu0 %v5640
    %6126 = vmatpush1.bf16.msra.mxu0 %v5639
    %6127 = vmatprep.subr.bf16.mxu0 %v5632
    %6128 = vmatpush1.bf16.msra.mxu0 %v5631
    %6129 = vmatprep.subr.bf16.mxu0 %v5624
    %6130 = vmatpush1.bf16.msra.mxu0 %v5623
    %6131 = vmatprep.subr.bf16.mxu0 %v5616
    %6132 = vmatpush1.bf16.msra.mxu0 %v5615
    %6133 = vmatprep.subr.bf16.mxu0 %v5608
    %6134 = vmatpush1.bf16.msra.mxu0 %v5607
    %6135 = vmatprep.subr.bf16.mxu0 %v5728
    %6136 = vmatpush2.bf16.msra.mxu0 %v5727
    %6137 = vmatprep.subr.bf16.mxu0 %v5720
    %6138 = vmatpush2.bf16.msra.mxu0 %v5719
    %6139 = vmatprep.subr.bf16.mxu0 %v5712
    %6140 = vmatpush2.bf16.msra.mxu0 %v5711
    %6141 = vmatprep.subr.bf16.mxu0 %v5704
    %6142 = vmatpush2.bf16.msra.mxu0 %v5703
    %6143 = vmatprep.subr.bf16.mxu0 %v5696
    %6144 = vmatpush2.bf16.msra.mxu0 %v5695
    %6145 = vmatprep.subr.bf16.mxu0 %v5688
    %6146 = vmatpush2.bf16.msra.mxu0 %v5687
    %6147 = vmatprep.subr.bf16.mxu0 %v5680
    %6148 = vmatpush2.bf16.msra.mxu0 %v5679
    %6149 = vmatprep.subr.bf16.mxu0 %v5672
    %6150 = vmatpush2.bf16.msra.mxu0 %v5671
    %6151 = vmatprep.mubr.bf16.mxu0 %v4580
    %6152 = vmatmul.mubr.bf16.gmra.mxu0 %v4579
    %v6153 = vpop.f32.mrf.mxu0
    %v6154 = vadd.f32 0.0, %v6153
    %v6155 = vpop.f32.mrf.mxu0
    %v6156 = vadd.f32 0.0, %v6155
    %v6157 = vpop.f32.mrf.mxu0
    %v6158 = vadd.f32 0.0, %v6157
    %v6159 = vpop.f32.mrf.mxu0
    %v6160 = vadd.f32 0.0, %v6159
    %6161 = vdwg.mxu0
    %6162 = vmatprep.subr.bf16.mxu0 %v5792
    %6163 = vmatpush1.bf16.msra.mxu0 %v5791
    %6164 = vmatprep.subr.bf16.mxu0 %v5784
    %6165 = vmatpush1.bf16.msra.mxu0 %v5783
    %6166 = vmatprep.subr.bf16.mxu0 %v5776
    %6167 = vmatpush1.bf16.msra.mxu0 %v5775
    %6168 = vmatprep.subr.bf16.mxu0 %v5768
    %6169 = vmatpush1.bf16.msra.mxu0 %v5767
    %6170 = vmatprep.subr.bf16.mxu0 %v5760
    %6171 = vmatpush1.bf16.msra.mxu0 %v5759
    %6172 = vmatprep.subr.bf16.mxu0 %v5752
    %6173 = vmatpush1.bf16.msra.mxu0 %v5751
    %6174 = vmatprep.subr.bf16.mxu0 %v5744
    %6175 = vmatpush1.bf16.msra.mxu0 %v5743
    %6176 = vmatprep.subr.bf16.mxu0 %v5736
    %6177 = vmatpush1.bf16.msra.mxu0 %v5735
    %6178 = vmatprep.subr.bf16.mxu0 %v5856
    %6179 = vmatpush2.bf16.msra.mxu0 %v5855
    %6180 = vmatprep.subr.bf16.mxu0 %v5848
    %6181 = vmatpush2.bf16.msra.mxu0 %v5847
    %6182 = vmatprep.subr.bf16.mxu0 %v5840
    %6183 = vmatpush2.bf16.msra.mxu0 %v5839
    %6184 = vmatprep.subr.bf16.mxu0 %v5832
    %6185 = vmatpush2.bf16.msra.mxu0 %v5831
    %6186 = vmatprep.subr.bf16.mxu0 %v5824
    %6187 = vmatpush2.bf16.msra.mxu0 %v5823
    %6188 = vmatprep.subr.bf16.mxu0 %v5816
    %6189 = vmatpush2.bf16.msra.mxu0 %v5815
    %6190 = vmatprep.subr.bf16.mxu0 %v5808
    %6191 = vmatpush2.bf16.msra.mxu0 %v5807
    %6192 = vmatprep.subr.bf16.mxu0 %v5800
    %6193 = vmatpush2.bf16.msra.mxu0 %v5799
    %6194 = vmatprep.mubr.bf16.mxu0 %v4582
    %6195 = vmatmul.mubr.bf16.gmra.mxu0 %v4581
    %v6196 = vpop.f32.mrf.mxu0
    %v6197 = vadd.f32 %v6154, %v6196
    %v6198 = vpop.f32.mrf.mxu0
    %v6199 = vadd.f32 %v6156, %v6198
    %v6200 = vpop.f32.mrf.mxu0
    %v6201 = vadd.f32 %v6158, %v6200
    %v6202 = vpop.f32.mrf.mxu0
    %v6203 = vadd.f32 %v6160, %v6202
    %6204 = vdwg.mxu0
    %6205 = vmatprep.subr.bf16.mxu0 %v5666
    %6206 = vmatpush1.bf16.msra.mxu0 %v5665
    %6207 = vmatprep.subr.bf16.mxu0 %v5658
    %6208 = vmatpush1.bf16.msra.mxu0 %v5657
    %6209 = vmatprep.subr.bf16.mxu0 %v5650
    %6210 = vmatpush1.bf16.msra.mxu0 %v5649
    %6211 = vmatprep.subr.bf16.mxu0 %v5642
    %6212 = vmatpush1.bf16.msra.mxu0 %v5641
    %6213 = vmatprep.subr.bf16.mxu0 %v5634
    %6214 = vmatpush1.bf16.msra.mxu0 %v5633
    %6215 = vmatprep.subr.bf16.mxu0 %v5626
    %6216 = vmatpush1.bf16.msra.mxu0 %v5625
    %6217 = vmatprep.subr.bf16.mxu0 %v5618
    %6218 = vmatpush1.bf16.msra.mxu0 %v5617
    %6219 = vmatprep.subr.bf16.mxu0 %v5610
    %6220 = vmatpush1.bf16.msra.mxu0 %v5609
    %6221 = vmatprep.subr.bf16.mxu0 %v5730
    %6222 = vmatpush2.bf16.msra.mxu0 %v5729
    %6223 = vmatprep.subr.bf16.mxu0 %v5722
    %6224 = vmatpush2.bf16.msra.mxu0 %v5721
    %6225 = vmatprep.subr.bf16.mxu0 %v5714
    %6226 = vmatpush2.bf16.msra.mxu0 %v5713
    %6227 = vmatprep.subr.bf16.mxu0 %v5706
    %6228 = vmatpush2.bf16.msra.mxu0 %v5705
    %6229 = vmatprep.subr.bf16.mxu0 %v5698
    %6230 = vmatpush2.bf16.msra.mxu0 %v5697
    %6231 = vmatprep.subr.bf16.mxu0 %v5690
    %6232 = vmatpush2.bf16.msra.mxu0 %v5689
    %6233 = vmatprep.subr.bf16.mxu0 %v5682
    %6234 = vmatpush2.bf16.msra.mxu0 %v5681
    %6235 = vmatprep.subr.bf16.mxu0 %v5674
    %6236 = vmatpush2.bf16.msra.mxu0 %v5673
    %6237 = vmatprep.mubr.bf16.mxu0 %v4580
    %6238 = vmatmul.mubr.bf16.gmra.mxu0 %v4579
    %v6239 = vpop.f32.mrf.mxu0
    %v6240 = vadd.f32 0.0, %v6239
    %v6241 = vpop.f32.mrf.mxu0
    %v6242 = vadd.f32 0.0, %v6241
    %v6243 = vpop.f32.mrf.mxu0
    %v6244 = vadd.f32 0.0, %v6243
    %v6245 = vpop.f32.mrf.mxu0
    %v6246 = vadd.f32 0.0, %v6245
    %6247 = vdwg.mxu0
    %6248 = vmatprep.subr.bf16.mxu0 %v5794
    %6249 = vmatpush1.bf16.msra.mxu0 %v5793
    %6250 = vmatprep.subr.bf16.mxu0 %v5786
    %6251 = vmatpush1.bf16.msra.mxu0 %v5785
    %6252 = vmatprep.subr.bf16.mxu0 %v5778
    %6253 = vmatpush1.bf16.msra.mxu0 %v5777
    %6254 = vmatprep.subr.bf16.mxu0 %v5770
    %6255 = vmatpush1.bf16.msra.mxu0 %v5769
    %6256 = vmatprep.subr.bf16.mxu0 %v5762
    %6257 = vmatpush1.bf16.msra.mxu0 %v5761
    %6258 = vmatprep.subr.bf16.mxu0 %v5754
    %6259 = vmatpush1.bf16.msra.mxu0 %v5753
    %6260 = vmatprep.subr.bf16.mxu0 %v5746
    %6261 = vmatpush1.bf16.msra.mxu0 %v5745
    %6262 = vmatprep.subr.bf16.mxu0 %v5738
    %6263 = vmatpush1.bf16.msra.mxu0 %v5737
    %6264 = vmatprep.subr.bf16.mxu0 %v5858
    %6265 = vmatpush2.bf16.msra.mxu0 %v5857
    %6266 = vmatprep.subr.bf16.mxu0 %v5850
    %6267 = vmatpush2.bf16.msra.mxu0 %v5849
    %6268 = vmatprep.subr.bf16.mxu0 %v5842
    %6269 = vmatpush2.bf16.msra.mxu0 %v5841
    %6270 = vmatprep.subr.bf16.mxu0 %v5834
    %6271 = vmatpush2.bf16.msra.mxu0 %v5833
    %6272 = vmatprep.subr.bf16.mxu0 %v5826
    %6273 = vmatpush2.bf16.msra.mxu0 %v5825
    %6274 = vmatprep.subr.bf16.mxu0 %v5818
    %6275 = vmatpush2.bf16.msra.mxu0 %v5817
    %6276 = vmatprep.subr.bf16.mxu0 %v5810
    %6277 = vmatpush2.bf16.msra.mxu0 %v5809
    %6278 = vmatprep.subr.bf16.mxu0 %v5802
    %6279 = vmatpush2.bf16.msra.mxu0 %v5801
    %6280 = vmatprep.mubr.bf16.mxu0 %v4582
    %6281 = vmatmul.mubr.bf16.gmra.mxu0 %v4581
    %v6282 = vpop.f32.mrf.mxu0
    %v6283 = vadd.f32 %v6240, %v6282
    %v6284 = vpop.f32.mrf.mxu0
    %v6285 = vadd.f32 %v6242, %v6284
    %v6286 = vpop.f32.mrf.mxu0
    %v6287 = vadd.f32 %v6244, %v6286
    %v6288 = vpop.f32.mrf.mxu0
    %v6289 = vadd.f32 %v6246, %v6288
    %6290 = vdwg.mxu0
    %6291 = vmatprep.subr.bf16.mxu0 %v5668
    %6292 = vmatpush1.bf16.msra.mxu0 %v5667
    %6293 = vmatprep.subr.bf16.mxu0 %v5660
    %6294 = vmatpush1.bf16.msra.mxu0 %v5659
    %6295 = vmatprep.subr.bf16.mxu0 %v5652
    %6296 = vmatpush1.bf16.msra.mxu0 %v5651
    %6297 = vmatprep.subr.bf16.mxu0 %v5644
    %6298 = vmatpush1.bf16.msra.mxu0 %v5643
    %6299 = vmatprep.subr.bf16.mxu0 %v5636
    %6300 = vmatpush1.bf16.msra.mxu0 %v5635
    %6301 = vmatprep.subr.bf16.mxu0 %v5628
    %6302 = vmatpush1.bf16.msra.mxu0 %v5627
    %6303 = vmatprep.subr.bf16.mxu0 %v5620
    %6304 = vmatpush1.bf16.msra.mxu0 %v5619
    %6305 = vmatprep.subr.bf16.mxu0 %v5612
    %6306 = vmatpush1.bf16.msra.mxu0 %v5611
    %6307 = vmatprep.subr.bf16.mxu0 %v5732
    %6308 = vmatpush2.bf16.msra.mxu0 %v5731
    %6309 = vmatprep.subr.bf16.mxu0 %v5724
    %6310 = vmatpush2.bf16.msra.mxu0 %v5723
    %6311 = vmatprep.subr.bf16.mxu0 %v5716
    %6312 = vmatpush2.bf16.msra.mxu0 %v5715
    %6313 = vmatprep.subr.bf16.mxu0 %v5708
    %6314 = vmatpush2.bf16.msra.mxu0 %v5707
    %6315 = vmatprep.subr.bf16.mxu0 %v5700
    %6316 = vmatpush2.bf16.msra.mxu0 %v5699
    %6317 = vmatprep.subr.bf16.mxu0 %v5692
    %6318 = vmatpush2.bf16.msra.mxu0 %v5691
    %6319 = vmatprep.subr.bf16.mxu0 %v5684
    %6320 = vmatpush2.bf16.msra.mxu0 %v5683
    %6321 = vmatprep.subr.bf16.mxu0 %v5676
    %6322 = vmatpush2.bf16.msra.mxu0 %v5675
    %6323 = vmatprep.mubr.bf16.mxu0 %v4580
    %6324 = vmatmul.mubr.bf16.gmra.mxu0 %v4579
    %v6325 = vpop.f32.mrf.mxu0
    %v6326 = vadd.f32 0.0, %v6325
    %v6327 = vpop.f32.mrf.mxu0
    %v6328 = vadd.f32 0.0, %v6327
    %v6329 = vpop.f32.mrf.mxu0
    %v6330 = vadd.f32 0.0, %v6329
    %v6331 = vpop.f32.mrf.mxu0
    %v6332 = vadd.f32 0.0, %v6331
    %6333 = vdwg.mxu0
    %6334 = vmatprep.subr.bf16.mxu0 %v5796
    %6335 = vmatpush1.bf16.msra.mxu0 %v5795
    %6336 = vmatprep.subr.bf16.mxu0 %v5788
    %6337 = vmatpush1.bf16.msra.mxu0 %v5787
    %6338 = vmatprep.subr.bf16.mxu0 %v5780
    %6339 = vmatpush1.bf16.msra.mxu0 %v5779
    %6340 = vmatprep.subr.bf16.mxu0 %v5772
    %6341 = vmatpush1.bf16.msra.mxu0 %v5771
    %6342 = vmatprep.subr.bf16.mxu0 %v5764
    %6343 = vmatpush1.bf16.msra.mxu0 %v5763
    %6344 = vmatprep.subr.bf16.mxu0 %v5756
    %6345 = vmatpush1.bf16.msra.mxu0 %v5755
    %6346 = vmatprep.subr.bf16.mxu0 %v5748
    %6347 = vmatpush1.bf16.msra.mxu0 %v5747
    %6348 = vmatprep.subr.bf16.mxu0 %v5740
    %6349 = vmatpush1.bf16.msra.mxu0 %v5739
    %6350 = vmatprep.subr.bf16.mxu0 %v5860
    %6351 = vmatpush2.bf16.msra.mxu0 %v5859
    %6352 = vmatprep.subr.bf16.mxu0 %v5852
    %6353 = vmatpush2.bf16.msra.mxu0 %v5851
    %6354 = vmatprep.subr.bf16.mxu0 %v5844
    %6355 = vmatpush2.bf16.msra.mxu0 %v5843
    %6356 = vmatprep.subr.bf16.mxu0 %v5836
    %6357 = vmatpush2.bf16.msra.mxu0 %v5835
    %6358 = vmatprep.subr.bf16.mxu0 %v5828
    %6359 = vmatpush2.bf16.msra.mxu0 %v5827
    %6360 = vmatprep.subr.bf16.mxu0 %v5820
    %6361 = vmatpush2.bf16.msra.mxu0 %v5819
    %6362 = vmatprep.subr.bf16.mxu0 %v5812
    %6363 = vmatpush2.bf16.msra.mxu0 %v5811
    %6364 = vmatprep.subr.bf16.mxu0 %v5804
    %6365 = vmatpush2.bf16.msra.mxu0 %v5803
    %6366 = vmatprep.mubr.bf16.mxu0 %v4582
    %6367 = vmatmul.mubr.bf16.gmra.mxu0 %v4581
    %v6368 = vpop.f32.mrf.mxu0
    %v6369 = vadd.f32 %v6326, %v6368
    %v6370 = vpop.f32.mrf.mxu0
    %v6371 = vadd.f32 %v6328, %v6370
    %v6372 = vpop.f32.mrf.mxu0
    %v6373 = vadd.f32 %v6330, %v6372
    %v6374 = vpop.f32.mrf.mxu0
    %v6375 = vadd.f32 %v6332, %v6374
    %6376 = vdwg.mxu0
    %6377 = vmatprep.subr.bf16.mxu0 %v5670
    %6378 = vmatpush1.bf16.msra.mxu0 %v5669
    %6379 = vmatprep.subr.bf16.mxu0 %v5662
    %6380 = vmatpush1.bf16.msra.mxu0 %v5661
    %6381 = vmatprep.subr.bf16.mxu0 %v5654
    %6382 = vmatpush1.bf16.msra.mxu0 %v5653
    %6383 = vmatprep.subr.bf16.mxu0 %v5646
    %6384 = vmatpush1.bf16.msra.mxu0 %v5645
    %6385 = vmatprep.subr.bf16.mxu0 %v5638
    %6386 = vmatpush1.bf16.msra.mxu0 %v5637
    %6387 = vmatprep.subr.bf16.mxu0 %v5630
    %6388 = vmatpush1.bf16.msra.mxu0 %v5629
    %6389 = vmatprep.subr.bf16.mxu0 %v5622
    %6390 = vmatpush1.bf16.msra.mxu0 %v5621
    %6391 = vmatprep.subr.bf16.mxu0 %v5614
    %6392 = vmatpush1.bf16.msra.mxu0 %v5613
    %6393 = vmatprep.subr.bf16.mxu0 %v5734
    %6394 = vmatpush2.bf16.msra.mxu0 %v5733
    %6395 = vmatprep.subr.bf16.mxu0 %v5726
    %6396 = vmatpush2.bf16.msra.mxu0 %v5725
    %6397 = vmatprep.subr.bf16.mxu0 %v5718
    %6398 = vmatpush2.bf16.msra.mxu0 %v5717
    %6399 = vmatprep.subr.bf16.mxu0 %v5710
    %6400 = vmatpush2.bf16.msra.mxu0 %v5709
    %6401 = vmatprep.subr.bf16.mxu0 %v5702
    %6402 = vmatpush2.bf16.msra.mxu0 %v5701
    %6403 = vmatprep.subr.bf16.mxu0 %v5694
    %6404 = vmatpush2.bf16.msra.mxu0 %v5693
    %6405 = vmatprep.subr.bf16.mxu0 %v5686
    %6406 = vmatpush2.bf16.msra.mxu0 %v5685
    %6407 = vmatprep.subr.bf16.mxu0 %v5678
    %6408 = vmatpush2.bf16.msra.mxu0 %v5677
    %6409 = vmatprep.mubr.bf16.mxu0 %v4580
    %6410 = vmatmul.mubr.bf16.gmra.mxu0 %v4579
    %v6411 = vpop.f32.mrf.mxu0
    %v6412 = vadd.f32 0.0, %v6411
    %v6413 = vpop.f32.mrf.mxu0
    %v6414 = vadd.f32 0.0, %v6413
    %v6415 = vpop.f32.mrf.mxu0
    %v6416 = vadd.f32 0.0, %v6415
    %v6417 = vpop.f32.mrf.mxu0
    %v6418 = vadd.f32 0.0, %v6417
    %6419 = vdwg.mxu0
    %6420 = vmatprep.subr.bf16.mxu0 %v5798
    %6421 = vmatpush1.bf16.msra.mxu0 %v5797
    %6422 = vmatprep.subr.bf16.mxu0 %v5790
    %6423 = vmatpush1.bf16.msra.mxu0 %v5789
    %6424 = vmatprep.subr.bf16.mxu0 %v5782
    %6425 = vmatpush1.bf16.msra.mxu0 %v5781
    %6426 = vmatprep.subr.bf16.mxu0 %v5774
    %6427 = vmatpush1.bf16.msra.mxu0 %v5773
    %6428 = vmatprep.subr.bf16.mxu0 %v5766
    %6429 = vmatpush1.bf16.msra.mxu0 %v5765
    %6430 = vmatprep.subr.bf16.mxu0 %v5758
    %6431 = vmatpush1.bf16.msra.mxu0 %v5757
    %6432 = vmatprep.subr.bf16.mxu0 %v5750
    %6433 = vmatpush1.bf16.msra.mxu0 %v5749
    %6434 = vmatprep.subr.bf16.mxu0 %v5742
    %6435 = vmatpush1.bf16.msra.mxu0 %v5741
    %6436 = vmatprep.subr.bf16.mxu0 %v5862
    %6437 = vmatpush2.bf16.msra.mxu0 %v5861
    %6438 = vmatprep.subr.bf16.mxu0 %v5854
    %6439 = vmatpush2.bf16.msra.mxu0 %v5853
    %6440 = vmatprep.subr.bf16.mxu0 %v5846
    %6441 = vmatpush2.bf16.msra.mxu0 %v5845
    %6442 = vmatprep.subr.bf16.mxu0 %v5838
    %6443 = vmatpush2.bf16.msra.mxu0 %v5837
    %6444 = vmatprep.subr.bf16.mxu0 %v5830
    %6445 = vmatpush2.bf16.msra.mxu0 %v5829
    %6446 = vmatprep.subr.bf16.mxu0 %v5822
    %6447 = vmatpush2.bf16.msra.mxu0 %v5821
    %6448 = vmatprep.subr.bf16.mxu0 %v5814
    %6449 = vmatpush2.bf16.msra.mxu0 %v5813
    %6450 = vmatprep.subr.bf16.mxu0 %v5806
    %6451 = vmatpush2.bf16.msra.mxu0 %v5805
    %6452 = vmatprep.mubr.bf16.mxu0 %v4582
    %6453 = vmatmul.mubr.bf16.gmra.mxu0 %v4581
    %v6454 = vpop.f32.mrf.mxu0
    %v6455 = vadd.f32 %v6412, %v6454
    %v6456 = vpop.f32.mrf.mxu0
    %v6457 = vadd.f32 %v6414, %v6456
    %v6458 = vpop.f32.mrf.mxu0
    %v6459 = vadd.f32 %v6416, %v6458
    %v6460 = vpop.f32.mrf.mxu0
    %v6461 = vadd.f32 %v6418, %v6460
    %6462 = vdwg.mxu0
    %v6463 = vld [vmem:[#allocation17 + $0x15] sm:$0xff]
    %v6464 = vpack.c.bf16 %v6201, %v6197
    %v6465 = vpack.c.bf16 %v6203, %v6199
    %v6466 = vpack.c.bf16 %v6287, %v6283
    %v6467 = vpack.c.bf16 %v6289, %v6285
    %v6468 = vpack.c.bf16 %v6373, %v6369
    %v6469 = vpack.c.bf16 %v6375, %v6371
    %v6470 = vpack.c.bf16 %v6459, %v6455
    %v6471 = vpack.c.bf16 %v6461, %v6457
    %v6473 = vlaneseq
    %v6474 = vshrl.u32 %v6473, 7
    %v6475 = vsub.s32 0, %v6474
    %v6476 = vrot.slane %v6463, %v6475
    %v6477 = vlaneseq
    %v6478 = vshrl.u32 %v6477, 7
    %v6479 = vsub.s32 1, %v6478
    %v6480 = vrot.slane %v6463, %v6479
    %v6481 = vlaneseq
    %v6482 = vshrl.u32 %v6481, 7
    %v6483 = vsub.s32 2, %v6482
    %v6484 = vrot.slane %v6463, %v6483
    %v6485 = vlaneseq
    %v6486 = vshrl.u32 %v6485, 7
    %v6487 = vsub.s32 3, %v6486
    %v6488 = vrot.slane %v6463, %v6487
    %v6489 = vlaneseq
    %v6490 = vshrl.u32 %v6489, 7
    %v6491 = vsub.s32 4, %v6490
    %v6492 = vrot.slane %v6463, %v6491
    %v6493 = vlaneseq
    %v6494 = vshrl.u32 %v6493, 7
    %v6495 = vsub.s32 5, %v6494
    %v6496 = vrot.slane %v6463, %v6495
    %v6497 = vlaneseq
    %v6498 = vshrl.u32 %v6497, 7
    %v6499 = vsub.s32 6, %v6498
    %v6500 = vrot.slane %v6463, %v6499
    %v6501 = vlaneseq
    %v6502 = vshrl.u32 %v6501, 7
    %v6503 = vsub.s32 7, %v6502
    %v6504 = vrot.slane %v6463, %v6503
    %v6513 = vpack.c.bf16 %v6476, %v6476
    %v6514 = vpack.c.bf16 %v6480, %v6480
    %v6515 = vpack.c.bf16 %v6484, %v6484
    %v6516 = vpack.c.bf16 %v6488, %v6488
    %v6517 = vpack.c.bf16 %v6492, %v6492
    %v6518 = vpack.c.bf16 %v6496, %v6496
    %v6519 = vpack.c.bf16 %v6500, %v6500
    %v6520 = vpack.c.bf16 %v6504, %v6504
    %v6522 = vpack.i.b16 %v6513, %v6513
    %v6524 = vlaneseq
    %v6525 = vshrl.u32 %v6524, 7
    %v6526 = vsub.s32 0, %v6525
    %v6527 = vrot.slane %v6522, %v6526
    %v6529 = vpack.i.b16 %v6514, %v6514
    %v6531 = vlaneseq
    %v6532 = vshrl.u32 %v6531, 7
    %v6533 = vsub.s32 0, %v6532
    %v6534 = vrot.slane %v6529, %v6533
    %v6536 = vpack.i.b16 %v6515, %v6515
    %v6538 = vlaneseq
    %v6539 = vshrl.u32 %v6538, 7
    %v6540 = vsub.s32 0, %v6539
    %v6541 = vrot.slane %v6536, %v6540
    %v6543 = vpack.i.b16 %v6516, %v6516
    %v6545 = vlaneseq
    %v6546 = vshrl.u32 %v6545, 7
    %v6547 = vsub.s32 0, %v6546
    %v6548 = vrot.slane %v6543, %v6547
    %v6550 = vpack.i.b16 %v6517, %v6517
    %v6552 = vlaneseq
    %v6553 = vshrl.u32 %v6552, 7
    %v6554 = vsub.s32 0, %v6553
    %v6555 = vrot.slane %v6550, %v6554
    %v6557 = vpack.i.b16 %v6518, %v6518
    %v6559 = vlaneseq
    %v6560 = vshrl.u32 %v6559, 7
    %v6561 = vsub.s32 0, %v6560
    %v6562 = vrot.slane %v6557, %v6561
    %v6564 = vpack.i.b16 %v6519, %v6519
    %v6566 = vlaneseq
    %v6567 = vshrl.u32 %v6566, 7
    %v6568 = vsub.s32 0, %v6567
    %v6569 = vrot.slane %v6564, %v6568
    %v6571 = vpack.i.b16 %v6520, %v6520
    %v6573 = vlaneseq
    %v6574 = vshrl.u32 %v6573, 7
    %v6575 = vsub.s32 0, %v6574
    %v6576 = vrot.slane %v6571, %v6575
    %v6577 = vadd.bf16 %v6464, %v6527
    %v6578 = vadd.bf16 %v6465, %v6534
    %v6579 = vadd.bf16 %v6466, %v6541
    %v6580 = vadd.bf16 %v6467, %v6548
    %v6581 = vadd.bf16 %v6468, %v6555
    %v6582 = vadd.bf16 %v6469, %v6562
    %v6583 = vadd.bf16 %v6470, %v6569
    %v6584 = vadd.bf16 %v6471, %v6576
    %v6585 = vmax.bf16 %v6577, 0
    %v6586 = vmax.bf16 %v6578, 0
    %v6587 = vmax.bf16 %v6579, 0
    %v6588 = vmax.bf16 %v6580, 0
    %v6589 = vmax.bf16 %v6581, 0
    %v6590 = vmax.bf16 %v6582, 0
    %v6591 = vmax.bf16 %v6583, 0
    %v6592 = vmax.bf16 %v6584, 0
    %v6593 = vld [vmem:[#allocation16] sm:$0xff]
    %v6594 = vld [vmem:[#allocation16 + $0x8] sm:$0xff]
    %v6595 = vld [vmem:[#allocation16 + $0x10] sm:$0xff]
    %v6596 = vld [vmem:[#allocation16 + $0x18] sm:$0xff]
    %v6597 = vld [vmem:[#allocation16 + $0x20] sm:$0xff]
    %v6598 = vld [vmem:[#allocation16 + $0x28] sm:$0xff]
    %v6599 = vld [vmem:[#allocation16 + $0x30] sm:$0xff]
    %v6600 = vld [vmem:[#allocation16 + $0x38] sm:$0xff]
    %v6601 = vld [vmem:[#allocation16 + $0x40] sm:$0xff]
    %v6602 = vld [vmem:[#allocation16 + $0x48] sm:$0xff]
    %v6603 = vld [vmem:[#allocation16 + $0x50] sm:$0xff]
    %v6604 = vld [vmem:[#allocation16 + $0x58] sm:$0xff]
    %v6605 = vld [vmem:[#allocation16 + $0x60] sm:$0xff]
    %v6606 = vld [vmem:[#allocation16 + $0x68] sm:$0xff]
    %v6607 = vld [vmem:[#allocation16 + $0x70] sm:$0xff]
    %v6608 = vld [vmem:[#allocation16 + $0x78] sm:$0xff]
    %v6609 = vld [vmem:[#allocation16 + $0x80] sm:$0xff]
    %v6610 = vld [vmem:[#allocation16 + $0x88] sm:$0xff]
    %v6611 = vld [vmem:[#allocation16 + $0x90] sm:$0xff]
    %v6612 = vld [vmem:[#allocation16 + $0x98] sm:$0xff]
    %v6613 = vld [vmem:[#allocation16 + $0xa0] sm:$0xff]
    %v6614 = vld [vmem:[#allocation16 + $0xa8] sm:$0xff]
    %v6615 = vld [vmem:[#allocation16 + $0xb0] sm:$0xff]
    %v6616 = vld [vmem:[#allocation16 + $0xb8] sm:$0xff]
    %v6617 = vld [vmem:[#allocation16 + $0xc0] sm:$0xff]
    %v6618 = vld [vmem:[#allocation16 + $0xc8] sm:$0xff]
    %v6619 = vld [vmem:[#allocation16 + $0xd0] sm:$0xff]
    %v6620 = vld [vmem:[#allocation16 + $0xd8] sm:$0xff]
    %v6621 = vld [vmem:[#allocation16 + $0xe0] sm:$0xff]
    %v6622 = vld [vmem:[#allocation16 + $0xe8] sm:$0xff]
    %v6623 = vld [vmem:[#allocation16 + $0xf0] sm:$0xff]
    %v6624 = vld [vmem:[#allocation16 + $0xf8] sm:$0xff]
    %v6625 = vld [vmem:[#allocation16 + $0x100] sm:$0xff]
    %v6626 = vld [vmem:[#allocation16 + $0x108] sm:$0xff]
    %v6627 = vld [vmem:[#allocation16 + $0x110] sm:$0xff]
    %v6628 = vld [vmem:[#allocation16 + $0x118] sm:$0xff]
    %v6629 = vld [vmem:[#allocation16 + $0x120] sm:$0xff]
    %v6630 = vld [vmem:[#allocation16 + $0x128] sm:$0xff]
    %v6631 = vld [vmem:[#allocation16 + $0x130] sm:$0xff]
    %v6632 = vld [vmem:[#allocation16 + $0x138] sm:$0xff]
    %v6633 = vld [vmem:[#allocation16 + $0x140] sm:$0xff]
    %v6634 = vld [vmem:[#allocation16 + $0x148] sm:$0xff]
    %v6635 = vld [vmem:[#allocation16 + $0x150] sm:$0xff]
    %v6636 = vld [vmem:[#allocation16 + $0x158] sm:$0xff]
    %v6637 = vld [vmem:[#allocation16 + $0x160] sm:$0xff]
    %v6638 = vld [vmem:[#allocation16 + $0x168] sm:$0xff]
    %v6639 = vld [vmem:[#allocation16 + $0x170] sm:$0xff]
    %v6640 = vld [vmem:[#allocation16 + $0x178] sm:$0xff]
    %v6641 = vld [vmem:[#allocation16 + $0x180] sm:$0xff]
    %v6642 = vld [vmem:[#allocation16 + $0x188] sm:$0xff]
    %v6643 = vld [vmem:[#allocation16 + $0x190] sm:$0xff]
    %v6644 = vld [vmem:[#allocation16 + $0x198] sm:$0xff]
    %v6645 = vld [vmem:[#allocation16 + $0x1a0] sm:$0xff]
    %v6646 = vld [vmem:[#allocation16 + $0x1a8] sm:$0xff]
    %v6647 = vld [vmem:[#allocation16 + $0x1b0] sm:$0xff]
    %v6648 = vld [vmem:[#allocation16 + $0x1b8] sm:$0xff]
    %v6649 = vld [vmem:[#allocation16 + $0x1c0] sm:$0xff]
    %v6650 = vld [vmem:[#allocation16 + $0x1c8] sm:$0xff]
    %v6651 = vld [vmem:[#allocation16 + $0x1d0] sm:$0xff]
    %v6652 = vld [vmem:[#allocation16 + $0x1d8] sm:$0xff]
    %v6653 = vld [vmem:[#allocation16 + $0x1e0] sm:$0xff]
    %v6654 = vld [vmem:[#allocation16 + $0x1e8] sm:$0xff]
    %v6655 = vld [vmem:[#allocation16 + $0x1f0] sm:$0xff]
    %v6656 = vld [vmem:[#allocation16 + $0x1f8] sm:$0xff]
    %v6657 = vld [vmem:[#allocation16 + $0x200] sm:$0xff]
    %v6658 = vld [vmem:[#allocation16 + $0x208] sm:$0xff]
    %v6659 = vld [vmem:[#allocation16 + $0x210] sm:$0xff]
    %v6660 = vld [vmem:[#allocation16 + $0x218] sm:$0xff]
    %v6661 = vld [vmem:[#allocation16 + $0x220] sm:$0xff]
    %v6662 = vld [vmem:[#allocation16 + $0x228] sm:$0xff]
    %v6663 = vld [vmem:[#allocation16 + $0x230] sm:$0xff]
    %v6664 = vld [vmem:[#allocation16 + $0x238] sm:$0xff]
    %v6665 = vld [vmem:[#allocation16 + $0x240] sm:$0xff]
    %v6666 = vld [vmem:[#allocation16 + $0x248] sm:$0xff]
    %v6667 = vld [vmem:[#allocation16 + $0x250] sm:$0xff]
    %v6668 = vld [vmem:[#allocation16 + $0x258] sm:$0xff]
    %v6669 = vld [vmem:[#allocation16 + $0x260] sm:$0xff]
    %v6670 = vld [vmem:[#allocation16 + $0x268] sm:$0xff]
    %v6671 = vld [vmem:[#allocation16 + $0x270] sm:$0xff]
    %v6672 = vld [vmem:[#allocation16 + $0x278] sm:$0xff]
    %v6673 = vld [vmem:[#allocation16 + $0x280] sm:$0xff]
    %v6674 = vld [vmem:[#allocation16 + $0x288] sm:$0xff]
    %v6675 = vld [vmem:[#allocation16 + $0x290] sm:$0xff]
    %v6676 = vld [vmem:[#allocation16 + $0x298] sm:$0xff]
    %v6677 = vld [vmem:[#allocation16 + $0x2a0] sm:$0xff]
    %v6678 = vld [vmem:[#allocation16 + $0x2a8] sm:$0xff]
    %v6679 = vld [vmem:[#allocation16 + $0x2b0] sm:$0xff]
    %v6680 = vld [vmem:[#allocation16 + $0x2b8] sm:$0xff]
    %v6681 = vld [vmem:[#allocation16 + $0x2c0] sm:$0xff]
    %v6682 = vld [vmem:[#allocation16 + $0x2c8] sm:$0xff]
    %v6683 = vld [vmem:[#allocation16 + $0x2d0] sm:$0xff]
    %v6684 = vld [vmem:[#allocation16 + $0x2d8] sm:$0xff]
    %v6685 = vld [vmem:[#allocation16 + $0x2e0] sm:$0xff]
    %v6686 = vld [vmem:[#allocation16 + $0x2e8] sm:$0xff]
    %v6687 = vld [vmem:[#allocation16 + $0x2f0] sm:$0xff]
    %v6688 = vld [vmem:[#allocation16 + $0x2f8] sm:$0xff]
    %v6689 = vld [vmem:[#allocation16 + $0x300] sm:$0xff]
    %v6690 = vld [vmem:[#allocation16 + $0x308] sm:$0xff]
    %v6691 = vld [vmem:[#allocation16 + $0x310] sm:$0xff]
    %v6692 = vld [vmem:[#allocation16 + $0x318] sm:$0xff]
    %v6693 = vld [vmem:[#allocation16 + $0x320] sm:$0xff]
    %v6694 = vld [vmem:[#allocation16 + $0x328] sm:$0xff]
    %v6695 = vld [vmem:[#allocation16 + $0x330] sm:$0xff]
    %v6696 = vld [vmem:[#allocation16 + $0x338] sm:$0xff]
    %v6697 = vld [vmem:[#allocation16 + $0x340] sm:$0xff]
    %v6698 = vld [vmem:[#allocation16 + $0x348] sm:$0xff]
    %v6699 = vld [vmem:[#allocation16 + $0x350] sm:$0xff]
    %v6700 = vld [vmem:[#allocation16 + $0x358] sm:$0xff]
    %v6701 = vld [vmem:[#allocation16 + $0x360] sm:$0xff]
    %v6702 = vld [vmem:[#allocation16 + $0x368] sm:$0xff]
    %v6703 = vld [vmem:[#allocation16 + $0x370] sm:$0xff]
    %v6704 = vld [vmem:[#allocation16 + $0x378] sm:$0xff]
    %v6705 = vld [vmem:[#allocation16 + $0x380] sm:$0xff]
    %v6706 = vld [vmem:[#allocation16 + $0x388] sm:$0xff]
    %v6707 = vld [vmem:[#allocation16 + $0x390] sm:$0xff]
    %v6708 = vld [vmem:[#allocation16 + $0x398] sm:$0xff]
    %v6709 = vld [vmem:[#allocation16 + $0x3a0] sm:$0xff]
    %v6710 = vld [vmem:[#allocation16 + $0x3a8] sm:$0xff]
    %v6711 = vld [vmem:[#allocation16 + $0x3b0] sm:$0xff]
    %v6712 = vld [vmem:[#allocation16 + $0x3b8] sm:$0xff]
    %v6713 = vld [vmem:[#allocation16 + $0x3c0] sm:$0xff]
    %v6714 = vld [vmem:[#allocation16 + $0x3c8] sm:$0xff]
    %v6715 = vld [vmem:[#allocation16 + $0x3d0] sm:$0xff]
    %v6716 = vld [vmem:[#allocation16 + $0x3d8] sm:$0xff]
    %v6717 = vld [vmem:[#allocation16 + $0x3e0] sm:$0xff]
    %v6718 = vld [vmem:[#allocation16 + $0x3e8] sm:$0xff]
    %v6719 = vld [vmem:[#allocation16 + $0x3f0] sm:$0xff]
    %v6720 = vld [vmem:[#allocation16 + $0x3f8] sm:$0xff]
    %v6721 = vld [vmem:[#allocation17 + $0x1d] sm:$0x3]
    %v6723 = vlaneseq
    %v6724 = vshrl.u32 %v6723, 7
    %v6725 = vsub.s32 0, %v6724
    %v6726 = vrot.slane %v6721, %v6725
    %v6727 = vlaneseq
    %v6728 = vshrl.u32 %v6727, 7
    %v6729 = vsub.s32 1, %v6728
    %v6730 = vrot.slane %v6721, %v6729
    %v6861 = vunpack.c.l.b16 %v6593
    %v6862 = vunpack.c.h.b16 %v6593
    %v6863 = vunpack.c.l.b16 %v6594
    %v6864 = vunpack.c.h.b16 %v6594
    %v6865 = vunpack.c.l.b16 %v6595
    %v6866 = vunpack.c.h.b16 %v6595
    %v6867 = vunpack.c.l.b16 %v6596
    %v6868 = vunpack.c.h.b16 %v6596
    %v6869 = vunpack.c.l.b16 %v6597
    %v6870 = vunpack.c.h.b16 %v6597
    %v6871 = vunpack.c.l.b16 %v6598
    %v6872 = vunpack.c.h.b16 %v6598
    %v6873 = vunpack.c.l.b16 %v6599
    %v6874 = vunpack.c.h.b16 %v6599
    %v6875 = vunpack.c.l.b16 %v6600
    %v6876 = vunpack.c.h.b16 %v6600
    %v6877 = vunpack.c.l.b16 %v6601
    %v6878 = vunpack.c.h.b16 %v6601
    %v6879 = vunpack.c.l.b16 %v6602
    %v6880 = vunpack.c.h.b16 %v6602
    %v6881 = vunpack.c.l.b16 %v6603
    %v6882 = vunpack.c.h.b16 %v6603
    %v6883 = vunpack.c.l.b16 %v6604
    %v6884 = vunpack.c.h.b16 %v6604
    %v6885 = vunpack.c.l.b16 %v6605
    %v6886 = vunpack.c.h.b16 %v6605
    %v6887 = vunpack.c.l.b16 %v6606
    %v6888 = vunpack.c.h.b16 %v6606
    %v6889 = vunpack.c.l.b16 %v6607
    %v6890 = vunpack.c.h.b16 %v6607
    %v6891 = vunpack.c.l.b16 %v6608
    %v6892 = vunpack.c.h.b16 %v6608
    %v6893 = vunpack.c.l.b16 %v6609
    %v6894 = vunpack.c.h.b16 %v6609
    %v6895 = vunpack.c.l.b16 %v6610
    %v6896 = vunpack.c.h.b16 %v6610
    %v6897 = vunpack.c.l.b16 %v6611
    %v6898 = vunpack.c.h.b16 %v6611
    %v6899 = vunpack.c.l.b16 %v6612
    %v6900 = vunpack.c.h.b16 %v6612
    %v6901 = vunpack.c.l.b16 %v6613
    %v6902 = vunpack.c.h.b16 %v6613
    %v6903 = vunpack.c.l.b16 %v6614
    %v6904 = vunpack.c.h.b16 %v6614
    %v6905 = vunpack.c.l.b16 %v6615
    %v6906 = vunpack.c.h.b16 %v6615
    %v6907 = vunpack.c.l.b16 %v6616
    %v6908 = vunpack.c.h.b16 %v6616
    %v6909 = vunpack.c.l.b16 %v6617
    %v6910 = vunpack.c.h.b16 %v6617
    %v6911 = vunpack.c.l.b16 %v6618
    %v6912 = vunpack.c.h.b16 %v6618
    %v6913 = vunpack.c.l.b16 %v6619
    %v6914 = vunpack.c.h.b16 %v6619
    %v6915 = vunpack.c.l.b16 %v6620
    %v6916 = vunpack.c.h.b16 %v6620
    %v6917 = vunpack.c.l.b16 %v6621
    %v6918 = vunpack.c.h.b16 %v6621
    %v6919 = vunpack.c.l.b16 %v6622
    %v6920 = vunpack.c.h.b16 %v6622
    %v6921 = vunpack.c.l.b16 %v6623
    %v6922 = vunpack.c.h.b16 %v6623
    %v6923 = vunpack.c.l.b16 %v6624
    %v6924 = vunpack.c.h.b16 %v6624
    %v6925 = vunpack.c.l.b16 %v6625
    %v6926 = vunpack.c.h.b16 %v6625
    %v6927 = vunpack.c.l.b16 %v6626
    %v6928 = vunpack.c.h.b16 %v6626
    %v6929 = vunpack.c.l.b16 %v6627
    %v6930 = vunpack.c.h.b16 %v6627
    %v6931 = vunpack.c.l.b16 %v6628
    %v6932 = vunpack.c.h.b16 %v6628
    %v6933 = vunpack.c.l.b16 %v6629
    %v6934 = vunpack.c.h.b16 %v6629
    %v6935 = vunpack.c.l.b16 %v6630
    %v6936 = vunpack.c.h.b16 %v6630
    %v6937 = vunpack.c.l.b16 %v6631
    %v6938 = vunpack.c.h.b16 %v6631
    %v6939 = vunpack.c.l.b16 %v6632
    %v6940 = vunpack.c.h.b16 %v6632
    %v6941 = vunpack.c.l.b16 %v6633
    %v6942 = vunpack.c.h.b16 %v6633
    %v6943 = vunpack.c.l.b16 %v6634
    %v6944 = vunpack.c.h.b16 %v6634
    %v6945 = vunpack.c.l.b16 %v6635
    %v6946 = vunpack.c.h.b16 %v6635
    %v6947 = vunpack.c.l.b16 %v6636
    %v6948 = vunpack.c.h.b16 %v6636
    %v6949 = vunpack.c.l.b16 %v6637
    %v6950 = vunpack.c.h.b16 %v6637
    %v6951 = vunpack.c.l.b16 %v6638
    %v6952 = vunpack.c.h.b16 %v6638
    %v6953 = vunpack.c.l.b16 %v6639
    %v6954 = vunpack.c.h.b16 %v6639
    %v6955 = vunpack.c.l.b16 %v6640
    %v6956 = vunpack.c.h.b16 %v6640
    %v6957 = vunpack.c.l.b16 %v6641
    %v6958 = vunpack.c.h.b16 %v6641
    %v6959 = vunpack.c.l.b16 %v6642
    %v6960 = vunpack.c.h.b16 %v6642
    %v6961 = vunpack.c.l.b16 %v6643
    %v6962 = vunpack.c.h.b16 %v6643
    %v6963 = vunpack.c.l.b16 %v6644
    %v6964 = vunpack.c.h.b16 %v6644
    %v6965 = vunpack.c.l.b16 %v6645
    %v6966 = vunpack.c.h.b16 %v6645
    %v6967 = vunpack.c.l.b16 %v6646
    %v6968 = vunpack.c.h.b16 %v6646
    %v6969 = vunpack.c.l.b16 %v6647
    %v6970 = vunpack.c.h.b16 %v6647
    %v6971 = vunpack.c.l.b16 %v6648
    %v6972 = vunpack.c.h.b16 %v6648
    %v6973 = vunpack.c.l.b16 %v6649
    %v6974 = vunpack.c.h.b16 %v6649
    %v6975 = vunpack.c.l.b16 %v6650
    %v6976 = vunpack.c.h.b16 %v6650
    %v6977 = vunpack.c.l.b16 %v6651
    %v6978 = vunpack.c.h.b16 %v6651
    %v6979 = vunpack.c.l.b16 %v6652
    %v6980 = vunpack.c.h.b16 %v6652
    %v6981 = vunpack.c.l.b16 %v6653
    %v6982 = vunpack.c.h.b16 %v6653
    %v6983 = vunpack.c.l.b16 %v6654
    %v6984 = vunpack.c.h.b16 %v6654
    %v6985 = vunpack.c.l.b16 %v6655
    %v6986 = vunpack.c.h.b16 %v6655
    %v6987 = vunpack.c.l.b16 %v6656
    %v6988 = vunpack.c.h.b16 %v6656
    %v6989 = vunpack.c.l.b16 %v6657
    %v6990 = vunpack.c.h.b16 %v6657
    %v6991 = vunpack.c.l.b16 %v6658
    %v6992 = vunpack.c.h.b16 %v6658
    %v6993 = vunpack.c.l.b16 %v6659
    %v6994 = vunpack.c.h.b16 %v6659
    %v6995 = vunpack.c.l.b16 %v6660
    %v6996 = vunpack.c.h.b16 %v6660
    %v6997 = vunpack.c.l.b16 %v6661
    %v6998 = vunpack.c.h.b16 %v6661
    %v6999 = vunpack.c.l.b16 %v6662
    %v7000 = vunpack.c.h.b16 %v6662
    %v7001 = vunpack.c.l.b16 %v6663
    %v7002 = vunpack.c.h.b16 %v6663
    %v7003 = vunpack.c.l.b16 %v6664
    %v7004 = vunpack.c.h.b16 %v6664
    %v7005 = vunpack.c.l.b16 %v6665
    %v7006 = vunpack.c.h.b16 %v6665
    %v7007 = vunpack.c.l.b16 %v6666
    %v7008 = vunpack.c.h.b16 %v6666
    %v7009 = vunpack.c.l.b16 %v6667
    %v7010 = vunpack.c.h.b16 %v6667
    %v7011 = vunpack.c.l.b16 %v6668
    %v7012 = vunpack.c.h.b16 %v6668
    %v7013 = vunpack.c.l.b16 %v6669
    %v7014 = vunpack.c.h.b16 %v6669
    %v7015 = vunpack.c.l.b16 %v6670
    %v7016 = vunpack.c.h.b16 %v6670
    %v7017 = vunpack.c.l.b16 %v6671
    %v7018 = vunpack.c.h.b16 %v6671
    %v7019 = vunpack.c.l.b16 %v6672
    %v7020 = vunpack.c.h.b16 %v6672
    %v7021 = vunpack.c.l.b16 %v6673
    %v7022 = vunpack.c.h.b16 %v6673
    %v7023 = vunpack.c.l.b16 %v6674
    %v7024 = vunpack.c.h.b16 %v6674
    %v7025 = vunpack.c.l.b16 %v6675
    %v7026 = vunpack.c.h.b16 %v6675
    %v7027 = vunpack.c.l.b16 %v6676
    %v7028 = vunpack.c.h.b16 %v6676
    %v7029 = vunpack.c.l.b16 %v6677
    %v7030 = vunpack.c.h.b16 %v6677
    %v7031 = vunpack.c.l.b16 %v6678
    %v7032 = vunpack.c.h.b16 %v6678
    %v7033 = vunpack.c.l.b16 %v6679
    %v7034 = vunpack.c.h.b16 %v6679
    %v7035 = vunpack.c.l.b16 %v6680
    %v7036 = vunpack.c.h.b16 %v6680
    %v7037 = vunpack.c.l.b16 %v6681
    %v7038 = vunpack.c.h.b16 %v6681
    %v7039 = vunpack.c.l.b16 %v6682
    %v7040 = vunpack.c.h.b16 %v6682
    %v7041 = vunpack.c.l.b16 %v6683
    %v7042 = vunpack.c.h.b16 %v6683
    %v7043 = vunpack.c.l.b16 %v6684
    %v7044 = vunpack.c.h.b16 %v6684
    %v7045 = vunpack.c.l.b16 %v6685
    %v7046 = vunpack.c.h.b16 %v6685
    %v7047 = vunpack.c.l.b16 %v6686
    %v7048 = vunpack.c.h.b16 %v6686
    %v7049 = vunpack.c.l.b16 %v6687
    %v7050 = vunpack.c.h.b16 %v6687
    %v7051 = vunpack.c.l.b16 %v6688
    %v7052 = vunpack.c.h.b16 %v6688
    %v7053 = vunpack.c.l.b16 %v6689
    %v7054 = vunpack.c.h.b16 %v6689
    %v7055 = vunpack.c.l.b16 %v6690
    %v7056 = vunpack.c.h.b16 %v6690
    %v7057 = vunpack.c.l.b16 %v6691
    %v7058 = vunpack.c.h.b16 %v6691
    %v7059 = vunpack.c.l.b16 %v6692
    %v7060 = vunpack.c.h.b16 %v6692
    %v7061 = vunpack.c.l.b16 %v6693
    %v7062 = vunpack.c.h.b16 %v6693
    %v7063 = vunpack.c.l.b16 %v6694
    %v7064 = vunpack.c.h.b16 %v6694
    %v7065 = vunpack.c.l.b16 %v6695
    %v7066 = vunpack.c.h.b16 %v6695
    %v7067 = vunpack.c.l.b16 %v6696
    %v7068 = vunpack.c.h.b16 %v6696
    %v7069 = vunpack.c.l.b16 %v6697
    %v7070 = vunpack.c.h.b16 %v6697
    %v7071 = vunpack.c.l.b16 %v6698
    %v7072 = vunpack.c.h.b16 %v6698
    %v7073 = vunpack.c.l.b16 %v6699
    %v7074 = vunpack.c.h.b16 %v6699
    %v7075 = vunpack.c.l.b16 %v6700
    %v7076 = vunpack.c.h.b16 %v6700
    %v7077 = vunpack.c.l.b16 %v6701
    %v7078 = vunpack.c.h.b16 %v6701
    %v7079 = vunpack.c.l.b16 %v6702
    %v7080 = vunpack.c.h.b16 %v6702
    %v7081 = vunpack.c.l.b16 %v6703
    %v7082 = vunpack.c.h.b16 %v6703
    %v7083 = vunpack.c.l.b16 %v6704
    %v7084 = vunpack.c.h.b16 %v6704
    %v7085 = vunpack.c.l.b16 %v6705
    %v7086 = vunpack.c.h.b16 %v6705
    %v7087 = vunpack.c.l.b16 %v6706
    %v7088 = vunpack.c.h.b16 %v6706
    %v7089 = vunpack.c.l.b16 %v6707
    %v7090 = vunpack.c.h.b16 %v6707
    %v7091 = vunpack.c.l.b16 %v6708
    %v7092 = vunpack.c.h.b16 %v6708
    %v7093 = vunpack.c.l.b16 %v6709
    %v7094 = vunpack.c.h.b16 %v6709
    %v7095 = vunpack.c.l.b16 %v6710
    %v7096 = vunpack.c.h.b16 %v6710
    %v7097 = vunpack.c.l.b16 %v6711
    %v7098 = vunpack.c.h.b16 %v6711
    %v7099 = vunpack.c.l.b16 %v6712
    %v7100 = vunpack.c.h.b16 %v6712
    %v7101 = vunpack.c.l.b16 %v6713
    %v7102 = vunpack.c.h.b16 %v6713
    %v7103 = vunpack.c.l.b16 %v6714
    %v7104 = vunpack.c.h.b16 %v6714
    %v7105 = vunpack.c.l.b16 %v6715
    %v7106 = vunpack.c.h.b16 %v6715
    %v7107 = vunpack.c.l.b16 %v6716
    %v7108 = vunpack.c.h.b16 %v6716
    %v7109 = vunpack.c.l.b16 %v6717
    %v7110 = vunpack.c.h.b16 %v6717
    %v7111 = vunpack.c.l.b16 %v6718
    %v7112 = vunpack.c.h.b16 %v6718
    %v7113 = vunpack.c.l.b16 %v6719
    %v7114 = vunpack.c.h.b16 %v6719
    %v7115 = vunpack.c.l.b16 %v6720
    %v7116 = vunpack.c.h.b16 %v6720
    %v7117 = vpack.c.b16 %v6863, %v6861
    %v7118 = vpack.c.b16 %v6864, %v6862
    %v7119 = vpack.c.b16 %v6867, %v6865
    %v7120 = vpack.c.b16 %v6868, %v6866
    %v7121 = vpack.c.b16 %v6871, %v6869
    %v7122 = vpack.c.b16 %v6872, %v6870
    %v7123 = vpack.c.b16 %v6875, %v6873
    %v7124 = vpack.c.b16 %v6876, %v6874
    %v7125 = vpack.c.b16 %v6879, %v6877
    %v7126 = vpack.c.b16 %v6880, %v6878
    %v7127 = vpack.c.b16 %v6883, %v6881
    %v7128 = vpack.c.b16 %v6884, %v6882
    %v7129 = vpack.c.b16 %v6887, %v6885
    %v7130 = vpack.c.b16 %v6888, %v6886
    %v7131 = vpack.c.b16 %v6891, %v6889
    %v7132 = vpack.c.b16 %v6892, %v6890
    %v7133 = vpack.c.b16 %v6895, %v6893
    %v7134 = vpack.c.b16 %v6896, %v6894
    %v7135 = vpack.c.b16 %v6899, %v6897
    %v7136 = vpack.c.b16 %v6900, %v6898
    %v7137 = vpack.c.b16 %v6903, %v6901
    %v7138 = vpack.c.b16 %v6904, %v6902
    %v7139 = vpack.c.b16 %v6907, %v6905
    %v7140 = vpack.c.b16 %v6908, %v6906
    %v7141 = vpack.c.b16 %v6911, %v6909
    %v7142 = vpack.c.b16 %v6912, %v6910
    %v7143 = vpack.c.b16 %v6915, %v6913
    %v7144 = vpack.c.b16 %v6916, %v6914
    %v7145 = vpack.c.b16 %v6919, %v6917
    %v7146 = vpack.c.b16 %v6920, %v6918
    %v7147 = vpack.c.b16 %v6923, %v6921
    %v7148 = vpack.c.b16 %v6924, %v6922
    %v7149 = vpack.c.b16 %v6927, %v6925
    %v7150 = vpack.c.b16 %v6928, %v6926
    %v7151 = vpack.c.b16 %v6931, %v6929
    %v7152 = vpack.c.b16 %v6932, %v6930
    %v7153 = vpack.c.b16 %v6935, %v6933
    %v7154 = vpack.c.b16 %v6936, %v6934
    %v7155 = vpack.c.b16 %v6939, %v6937
    %v7156 = vpack.c.b16 %v6940, %v6938
    %v7157 = vpack.c.b16 %v6943, %v6941
    %v7158 = vpack.c.b16 %v6944, %v6942
    %v7159 = vpack.c.b16 %v6947, %v6945
    %v7160 = vpack.c.b16 %v6948, %v6946
    %v7161 = vpack.c.b16 %v6951, %v6949
    %v7162 = vpack.c.b16 %v6952, %v6950
    %v7163 = vpack.c.b16 %v6955, %v6953
    %v7164 = vpack.c.b16 %v6956, %v6954
    %v7165 = vpack.c.b16 %v6959, %v6957
    %v7166 = vpack.c.b16 %v6960, %v6958
    %v7167 = vpack.c.b16 %v6963, %v6961
    %v7168 = vpack.c.b16 %v6964, %v6962
    %v7169 = vpack.c.b16 %v6967, %v6965
    %v7170 = vpack.c.b16 %v6968, %v6966
    %v7171 = vpack.c.b16 %v6971, %v6969
    %v7172 = vpack.c.b16 %v6972, %v6970
    %v7173 = vpack.c.b16 %v6975, %v6973
    %v7174 = vpack.c.b16 %v6976, %v6974
    %v7175 = vpack.c.b16 %v6979, %v6977
    %v7176 = vpack.c.b16 %v6980, %v6978
    %v7177 = vpack.c.b16 %v6983, %v6981
    %v7178 = vpack.c.b16 %v6984, %v6982
    %v7179 = vpack.c.b16 %v6987, %v6985
    %v7180 = vpack.c.b16 %v6988, %v6986
    %v7181 = vpack.c.b16 %v6991, %v6989
    %v7182 = vpack.c.b16 %v6992, %v6990
    %v7183 = vpack.c.b16 %v6995, %v6993
    %v7184 = vpack.c.b16 %v6996, %v6994
    %v7185 = vpack.c.b16 %v6999, %v6997
    %v7186 = vpack.c.b16 %v7000, %v6998
    %v7187 = vpack.c.b16 %v7003, %v7001
    %v7188 = vpack.c.b16 %v7004, %v7002
    %v7189 = vpack.c.b16 %v7007, %v7005
    %v7190 = vpack.c.b16 %v7008, %v7006
    %v7191 = vpack.c.b16 %v7011, %v7009
    %v7192 = vpack.c.b16 %v7012, %v7010
    %v7193 = vpack.c.b16 %v7015, %v7013
    %v7194 = vpack.c.b16 %v7016, %v7014
    %v7195 = vpack.c.b16 %v7019, %v7017
    %v7196 = vpack.c.b16 %v7020, %v7018
    %v7197 = vpack.c.b16 %v7023, %v7021
    %v7198 = vpack.c.b16 %v7024, %v7022
    %v7199 = vpack.c.b16 %v7027, %v7025
    %v7200 = vpack.c.b16 %v7028, %v7026
    %v7201 = vpack.c.b16 %v7031, %v7029
    %v7202 = vpack.c.b16 %v7032, %v7030
    %v7203 = vpack.c.b16 %v7035, %v7033
    %v7204 = vpack.c.b16 %v7036, %v7034
    %v7205 = vpack.c.b16 %v7039, %v7037
    %v7206 = vpack.c.b16 %v7040, %v7038
    %v7207 = vpack.c.b16 %v7043, %v7041
    %v7208 = vpack.c.b16 %v7044, %v7042
    %v7209 = vpack.c.b16 %v7047, %v7045
    %v7210 = vpack.c.b16 %v7048, %v7046
    %v7211 = vpack.c.b16 %v7051, %v7049
    %v7212 = vpack.c.b16 %v7052, %v7050
    %v7213 = vpack.c.b16 %v7055, %v7053
    %v7214 = vpack.c.b16 %v7056, %v7054
    %v7215 = vpack.c.b16 %v7059, %v7057
    %v7216 = vpack.c.b16 %v7060, %v7058
    %v7217 = vpack.c.b16 %v7063, %v7061
    %v7218 = vpack.c.b16 %v7064, %v7062
    %v7219 = vpack.c.b16 %v7067, %v7065
    %v7220 = vpack.c.b16 %v7068, %v7066
    %v7221 = vpack.c.b16 %v7071, %v7069
    %v7222 = vpack.c.b16 %v7072, %v7070
    %v7223 = vpack.c.b16 %v7075, %v7073
    %v7224 = vpack.c.b16 %v7076, %v7074
    %v7225 = vpack.c.b16 %v7079, %v7077
    %v7226 = vpack.c.b16 %v7080, %v7078
    %v7227 = vpack.c.b16 %v7083, %v7081
    %v7228 = vpack.c.b16 %v7084, %v7082
    %v7229 = vpack.c.b16 %v7087, %v7085
    %v7230 = vpack.c.b16 %v7088, %v7086
    %v7231 = vpack.c.b16 %v7091, %v7089
    %v7232 = vpack.c.b16 %v7092, %v7090
    %v7233 = vpack.c.b16 %v7095, %v7093
    %v7234 = vpack.c.b16 %v7096, %v7094
    %v7235 = vpack.c.b16 %v7099, %v7097
    %v7236 = vpack.c.b16 %v7100, %v7098
    %v7237 = vpack.c.b16 %v7103, %v7101
    %v7238 = vpack.c.b16 %v7104, %v7102
    %v7239 = vpack.c.b16 %v7107, %v7105
    %v7240 = vpack.c.b16 %v7108, %v7106
    %v7241 = vpack.c.b16 %v7111, %v7109
    %v7242 = vpack.c.b16 %v7112, %v7110
    %v7243 = vpack.c.b16 %v7115, %v7113
    %v7244 = vpack.c.b16 %v7116, %v7114
    %7373 = vmatprep.subr.bf16.mxu0 %v7132
    %7374 = vmatpush1.bf16.msra.mxu0 %v7131
    %7375 = vmatprep.subr.bf16.mxu0 %v7130
    %7376 = vmatpush1.bf16.msra.mxu0 %v7129
    %7377 = vmatprep.subr.bf16.mxu0 %v7128
    %7378 = vmatpush1.bf16.msra.mxu0 %v7127
    %7379 = vmatprep.subr.bf16.mxu0 %v7126
    %7380 = vmatpush1.bf16.msra.mxu0 %v7125
    %7381 = vmatprep.subr.bf16.mxu0 %v7124
    %7382 = vmatpush1.bf16.msra.mxu0 %v7123
    %7383 = vmatprep.subr.bf16.mxu0 %v7122
    %7384 = vmatpush1.bf16.msra.mxu0 %v7121
    %7385 = vmatprep.subr.bf16.mxu0 %v7120
    %7386 = vmatpush1.bf16.msra.mxu0 %v7119
    %7387 = vmatprep.subr.bf16.mxu0 %v7118
    %7388 = vmatpush1.bf16.msra.mxu0 %v7117
    %7389 = vmatprep.subr.bf16.mxu0 %v7148
    %7390 = vmatpush2.bf16.msra.mxu0 %v7147
    %7391 = vmatprep.subr.bf16.mxu0 %v7146
    %7392 = vmatpush2.bf16.msra.mxu0 %v7145
    %7393 = vmatprep.subr.bf16.mxu0 %v7144
    %7394 = vmatpush2.bf16.msra.mxu0 %v7143
    %7395 = vmatprep.subr.bf16.mxu0 %v7142
    %7396 = vmatpush2.bf16.msra.mxu0 %v7141
    %7397 = vmatprep.subr.bf16.mxu0 %v7140
    %7398 = vmatpush2.bf16.msra.mxu0 %v7139
    %7399 = vmatprep.subr.bf16.mxu0 %v7138
    %7400 = vmatpush2.bf16.msra.mxu0 %v7137
    %7401 = vmatprep.subr.bf16.mxu0 %v7136
    %7402 = vmatpush2.bf16.msra.mxu0 %v7135
    %7403 = vmatprep.subr.bf16.mxu0 %v7134
    %7404 = vmatpush2.bf16.msra.mxu0 %v7133
    %7405 = vmatprep.mubr.bf16.mxu0 %v6586
    %7406 = vmatmul.mubr.bf16.gmra.mxu0 %v6585
    %v7407 = vpop.f32.mrf.mxu0
    %v7408 = vadd.f32 %v6726, %v7407
    %v7409 = vpop.f32.mrf.mxu0
    %v7410 = vadd.f32 %v6730, %v7409
    %v7411 = vpop.f32.mrf.mxu0
    %v7412 = vadd.f32 %v6726, %v7411
    %v7413 = vpop.f32.mrf.mxu0
    %v7414 = vadd.f32 %v6730, %v7413
    %7415 = vdwg.mxu0
    %7416 = vmatprep.subr.bf16.mxu0 %v7164
    %7417 = vmatpush1.bf16.msra.mxu0 %v7163
    %7418 = vmatprep.subr.bf16.mxu0 %v7162
    %7419 = vmatpush1.bf16.msra.mxu0 %v7161
    %7420 = vmatprep.subr.bf16.mxu0 %v7160
    %7421 = vmatpush1.bf16.msra.mxu0 %v7159
    %7422 = vmatprep.subr.bf16.mxu0 %v7158
    %7423 = vmatpush1.bf16.msra.mxu0 %v7157
    %7424 = vmatprep.subr.bf16.mxu0 %v7156
    %7425 = vmatpush1.bf16.msra.mxu0 %v7155
    %7426 = vmatprep.subr.bf16.mxu0 %v7154
    %7427 = vmatpush1.bf16.msra.mxu0 %v7153
    %7428 = vmatprep.subr.bf16.mxu0 %v7152
    %7429 = vmatpush1.bf16.msra.mxu0 %v7151
    %7430 = vmatprep.subr.bf16.mxu0 %v7150
    %7431 = vmatpush1.bf16.msra.mxu0 %v7149
    %7432 = vmatprep.subr.bf16.mxu0 %v7180
    %7433 = vmatpush2.bf16.msra.mxu0 %v7179
    %7434 = vmatprep.subr.bf16.mxu0 %v7178
    %7435 = vmatpush2.bf16.msra.mxu0 %v7177
    %7436 = vmatprep.subr.bf16.mxu0 %v7176
    %7437 = vmatpush2.bf16.msra.mxu0 %v7175
    %7438 = vmatprep.subr.bf16.mxu0 %v7174
    %7439 = vmatpush2.bf16.msra.mxu0 %v7173
    %7440 = vmatprep.subr.bf16.mxu0 %v7172
    %7441 = vmatpush2.bf16.msra.mxu0 %v7171
    %7442 = vmatprep.subr.bf16.mxu0 %v7170
    %7443 = vmatpush2.bf16.msra.mxu0 %v7169
    %7444 = vmatprep.subr.bf16.mxu0 %v7168
    %7445 = vmatpush2.bf16.msra.mxu0 %v7167
    %7446 = vmatprep.subr.bf16.mxu0 %v7166
    %7447 = vmatpush2.bf16.msra.mxu0 %v7165
    %7448 = vmatprep.mubr.bf16.mxu0 %v6588
    %7449 = vmatmul.mubr.bf16.gmra.mxu0 %v6587
    %v7450 = vpop.f32.mrf.mxu0
    %v7451 = vadd.f32 %v7408, %v7450
    %v7452 = vpop.f32.mrf.mxu0
    %v7453 = vadd.f32 %v7410, %v7452
    %v7454 = vpop.f32.mrf.mxu0
    %v7455 = vadd.f32 %v7412, %v7454
    %v7456 = vpop.f32.mrf.mxu0
    %v7457 = vadd.f32 %v7414, %v7456
    %7458 = vdwg.mxu0
    %7459 = vmatprep.subr.bf16.mxu0 %v7196
    %7460 = vmatpush1.bf16.msra.mxu0 %v7195
    %7461 = vmatprep.subr.bf16.mxu0 %v7194
    %7462 = vmatpush1.bf16.msra.mxu0 %v7193
    %7463 = vmatprep.subr.bf16.mxu0 %v7192
    %7464 = vmatpush1.bf16.msra.mxu0 %v7191
    %7465 = vmatprep.subr.bf16.mxu0 %v7190
    %7466 = vmatpush1.bf16.msra.mxu0 %v7189
    %7467 = vmatprep.subr.bf16.mxu0 %v7188
    %7468 = vmatpush1.bf16.msra.mxu0 %v7187
    %7469 = vmatprep.subr.bf16.mxu0 %v7186
    %7470 = vmatpush1.bf16.msra.mxu0 %v7185
    %7471 = vmatprep.subr.bf16.mxu0 %v7184
    %7472 = vmatpush1.bf16.msra.mxu0 %v7183
    %7473 = vmatprep.subr.bf16.mxu0 %v7182
    %7474 = vmatpush1.bf16.msra.mxu0 %v7181
    %7475 = vmatprep.subr.bf16.mxu0 %v7212
    %7476 = vmatpush2.bf16.msra.mxu0 %v7211
    %7477 = vmatprep.subr.bf16.mxu0 %v7210
    %7478 = vmatpush2.bf16.msra.mxu0 %v7209
    %7479 = vmatprep.subr.bf16.mxu0 %v7208
    %7480 = vmatpush2.bf16.msra.mxu0 %v7207
    %7481 = vmatprep.subr.bf16.mxu0 %v7206
    %7482 = vmatpush2.bf16.msra.mxu0 %v7205
    %7483 = vmatprep.subr.bf16.mxu0 %v7204
    %7484 = vmatpush2.bf16.msra.mxu0 %v7203
    %7485 = vmatprep.subr.bf16.mxu0 %v7202
    %7486 = vmatpush2.bf16.msra.mxu0 %v7201
    %7487 = vmatprep.subr.bf16.mxu0 %v7200
    %7488 = vmatpush2.bf16.msra.mxu0 %v7199
    %7489 = vmatprep.subr.bf16.mxu0 %v7198
    %7490 = vmatpush2.bf16.msra.mxu0 %v7197
    %7491 = vmatprep.mubr.bf16.mxu0 %v6590
    %7492 = vmatmul.mubr.bf16.gmra.mxu0 %v6589
    %v7493 = vpop.f32.mrf.mxu0
    %v7494 = vadd.f32 %v7451, %v7493
    %v7495 = vpop.f32.mrf.mxu0
    %v7496 = vadd.f32 %v7453, %v7495
    %v7497 = vpop.f32.mrf.mxu0
    %v7498 = vadd.f32 %v7455, %v7497
    %v7499 = vpop.f32.mrf.mxu0
    %v7500 = vadd.f32 %v7457, %v7499
    %7501 = vdwg.mxu0
    %7502 = vmatprep.subr.bf16.mxu0 %v7228
    %7503 = vmatpush1.bf16.msra.mxu0 %v7227
    %7504 = vmatprep.subr.bf16.mxu0 %v7226
    %7505 = vmatpush1.bf16.msra.mxu0 %v7225
    %7506 = vmatprep.subr.bf16.mxu0 %v7224
    %7507 = vmatpush1.bf16.msra.mxu0 %v7223
    %7508 = vmatprep.subr.bf16.mxu0 %v7222
    %7509 = vmatpush1.bf16.msra.mxu0 %v7221
    %7510 = vmatprep.subr.bf16.mxu0 %v7220
    %7511 = vmatpush1.bf16.msra.mxu0 %v7219
    %7512 = vmatprep.subr.bf16.mxu0 %v7218
    %7513 = vmatpush1.bf16.msra.mxu0 %v7217
    %7514 = vmatprep.subr.bf16.mxu0 %v7216
    %7515 = vmatpush1.bf16.msra.mxu0 %v7215
    %7516 = vmatprep.subr.bf16.mxu0 %v7214
    %7517 = vmatpush1.bf16.msra.mxu0 %v7213
    %7518 = vmatprep.subr.bf16.mxu0 %v7244
    %7519 = vmatpush2.bf16.msra.mxu0 %v7243
    %7520 = vmatprep.subr.bf16.mxu0 %v7242
    %7521 = vmatpush2.bf16.msra.mxu0 %v7241
    %7522 = vmatprep.subr.bf16.mxu0 %v7240
    %7523 = vmatpush2.bf16.msra.mxu0 %v7239
    %7524 = vmatprep.subr.bf16.mxu0 %v7238
    %7525 = vmatpush2.bf16.msra.mxu0 %v7237
    %7526 = vmatprep.subr.bf16.mxu0 %v7236
    %7527 = vmatpush2.bf16.msra.mxu0 %v7235
    %7528 = vmatprep.subr.bf16.mxu0 %v7234
    %7529 = vmatpush2.bf16.msra.mxu0 %v7233
    %7530 = vmatprep.subr.bf16.mxu0 %v7232
    %7531 = vmatpush2.bf16.msra.mxu0 %v7231
    %7532 = vmatprep.subr.bf16.mxu0 %v7230
    %7533 = vmatpush2.bf16.msra.mxu0 %v7229
    %7534 = vmatprep.mubr.bf16.mxu0 %v6592
    %7535 = vmatmul.mubr.bf16.gmra.mxu0 %v6591
    %v7536 = vpop.f32.mrf.mxu0
    %v7537 = vadd.f32 %v7494, %v7536
    %v7538 = vpop.f32.mrf.mxu0
    %v7539 = vadd.f32 %v7496, %v7538
    %v7540 = vpop.f32.mrf.mxu0
    %v7541 = vadd.f32 %v7498, %v7540
    %v7542 = vpop.f32.mrf.mxu0
    %v7543 = vadd.f32 %v7500, %v7542
    %7544 = vdwg.mxu0
    %7545 = vst [vmem:[#allocation19] sm:$0xff] %v7537
    %7546 = vst [vmem:[#allocation19 + $0x8] sm:$0xff] %v7539
    %7547 = vst [vmem:[#allocation19 + $0x10] sm:$0xff] %v7541
    %7548 = vst [vmem:[#allocation19 + $0x18] sm:$0xff] %v7543
    // Predicated region
    $region82: #{tpu_custom_call.1} parent=1 // pred_check
      _
    $region83: #{tpu_custom_call.1} parent=1 // pred_check_branch
      %7550 = sbr.rel (0) target = $region85
    $region84: #{tpu_custom_call.1} parent=1 // pred_region
      %s7552 = ssub.s32 512, 512
      %7553 = vsyncadd [#allocation4], %s7552
      %s7554 = sshll.u32 [#allocation19], 4
      %s7555 = int_to_ptr.vmem [resolvable:$true] %s7554
      %7560 = dma.vmem_to_hbm [thread:$0]  %s7555, 512, %s10, [#allocation4], 256, 256, 16
    $region85: #{tpu_custom_call.1} parent=1 // pred_fallthru
      _
    // Predicated region
    $region86: #{tpu_custom_call.1} parent=1 // pred_check
      _
    $region87: #{tpu_custom_call.1} parent=1 // pred_check_branch
      %7562 = sbr.rel (0) target = $region89
    $region88: #{tpu_custom_call.1} parent=1 // pred_region
      %7563 = dma.done [#allocation4], 512
    $region89: #{tpu_custom_call.1} parent=1 // pred_fallthru
      _
    %7564 = vsyncpa [#allocation3], 1
    %7565 = vsyncpa [#allocation6], 1
    %7566 = vsyncpa [#allocation9], 1
    %7567 = vsyncpa [#allocation12], 1
    %7568 = vsyncpa [#allocation15], 1
    %7569 = vsyncpa [#allocation18], 1
    %7570 = vsyncpa [#allocation4], 1

</llo_original>
